<compile_context>
chip_gen: v5e
topology: v5e:2x2
jax: 0.10.0
libtpu: 0.0.40
codegen_flags: <defaults>
</compile_context>

<pallas_src>
import functools

import jax
import jax.numpy as jnp
import numpy as np
from jax import lax
from jax.experimental import pallas as pl
from jax.experimental.pallas import tpu as pltpu

EPS = 1e-5  # nn.InstanceNorm2d default (affine=False, biased variance)


def _round_up(x, m):
    return (x + m - 1) // m * m


# ---------------------------------------------------------------------------
# Fused Pallas kernel: one batch element per grid step.
#   x_ref    : (1, H, W, C)        raw input block (f32)
#   w1_ref   : (3, 3*Cp, Cp)       conv1 weights, [kw, kh*Cp + cin, cout]
#   w2_ref   : (3, 3*Cp, Cp)       conv2 weights
#   out_ref  : (1, H, W, C)        x + res(x)
#   xpad_ref : (H+2, Wp2, Cp)      VMEM scratch, reflection+channel padded x
#   y1pad_ref: (H+2, Wp2, Cp)      VMEM scratch, reflection padded y1
# ---------------------------------------------------------------------------
def _resblock_kernel(x_ref, w1_ref, w2_ref, out_ref, xpad_ref, y1pad_ref):
    _, h, w, c = x_ref.shape
    _, wp2, cp = xpad_ref.shape            # wp2 = round_up(w+2, 8)
    cdt = xpad_ref.dtype                   # MXU operand dtype (bf16 by default)

    def reflect_pad_into(dst_ref, img):
        """ReflectionPad2d(1) of img (h, w, cp) into dst_ref (h+2, wp2, cp)."""
        dst_ref[1:h + 1, 1:w + 1, :] = img
        dst_ref[0:1, 1:w + 1, :] = img[1:2]                   # top    = row 1
        dst_ref[h + 1:h + 2, 1:w + 1, :] = img[h - 2:h - 1]   # bottom = row h-2
        dst_ref[:, 0:1, :] = dst_ref[:, 2:3, :]               # left  + corners
        dst_ref[:, w + 1:w + 2, :] = dst_ref[:, w - 1:w, :]   # right + corners
        if wp2 > w + 2:                                       # alignment cols
            dst_ref[:, w + 2:, :] = jnp.zeros((h + 2, wp2 - (w + 2), cp), cdt)

    def conv3x3(src_ref, w_ref):
        """3x3 conv as 3 MXU matmuls with K = 3*cp (kh taps fused along K)."""
        # kh-shifted slabs: leading-dim slices + layout-preserving reshapes
        # (wp2 % 8 == 0), then one lane concat -> (h*wp2, 3*cp) operand.
        slabs = [src_ref[kh:kh + h].reshape(h * wp2, cp) for kh in range(3)]
        xk = jnp.concatenate(slabs, axis=-1)
        parts = [
            jnp.dot(xk, w_ref[kw], preferred_element_type=jnp.float32)
            .reshape(h, wp2, cp)
            for kw in range(3)
        ]
        # align the kw shifts once on the f32 partials; drop pad columns
        return (parts[0][:, 0:w, :] + parts[1][:, 1:w + 1, :]
                + parts[2][:, 2:w + 2, :])                    # (h, w, cp) f32

    def instnorm(a):
        """Per-channel InstanceNorm (affine=False), two-pass f32 statistics."""
        inv_hw = 1.0 / (h * w)
        mean = jnp.sum(jnp.sum(a, axis=0, keepdims=True),
                       axis=1, keepdims=True) * inv_hw
        d = a - mean
        var = jnp.sum(jnp.sum(d * d, axis=0, keepdims=True),
                      axis=1, keepdims=True) * inv_hw
        return d * lax.rsqrt(var + EPS)

    # ---- build the reflection-padded, channel-padded input slab in VMEM ----
    xq = x_ref[0].astype(cdt)                                 # (h, w, c)
    if cp > c:
        xq = jnp.concatenate(
            [xq, jnp.zeros((h, w, cp - c), cdt)], axis=-1)    # lane zero-pad
    reflect_pad_into(xpad_ref, xq)

    # ---- stage 1: conv1 -> instance norm -> ReLU (bias cancels under IN) ----
    y1 = jnp.maximum(instnorm(conv3x3(xpad_ref, w1_ref)), 0.0)

    # ---- in-VMEM ReflectionPad2d(1) of y1 (never round-trips through HBM) ----
    reflect_pad_into(y1pad_ref, y1.astype(cdt))

    # ---- stage 2: conv2 -> instance norm -> residual add ----
    y2 = instnorm(conv3x3(y1pad_ref, w2_ref))
    out_ref[0] = (x_ref[0].astype(jnp.float32)
                  + y2[:, :, :c]).astype(out_ref.dtype)


# ---------------------------------------------------------------------------
# Wrapper
# ---------------------------------------------------------------------------
def _pick_vmem_limit():
    """Generation-aware scoped-VMEM limit (headroom below physical VMEM)."""
    try:
        cap = int(pltpu.get_tpu_info().vmem_capacity_bytes)
    except Exception:
        cap = 64 * 1024 * 1024                # conservative (v7x per-core)
    return min(cap * 3 // 4, 100 * 1024 * 1024)


def residual_block(x_nchw, w1, b1, w2, b2, *,
                   compute_dtype=jnp.bfloat16, out_dtype=jnp.float32):
    """x_nchw: (N, C, H, W); w1, w2: (3, 3, Cin, Cout) HWIO; b1, b2 unused
    (a per-channel bias before InstanceNorm2d(affine=False) cancels exactly)."""
    del b1, b2

    x = jnp.transpose(x_nchw, (0, 2, 3, 1)).astype(jnp.float32)  # NHWC
    N, H, W, C = x.shape
    assert H >= 2 and W >= 2, "ReflectionPad2d(1) requires H, W >= 2"

    Cp = _round_up(C, 128)        # lane width -- used only inside VMEM
    Wp2 = _round_up(W + 2, 8)     # sublane-aligned padded width

    def prep_w(wt):
        wf = jnp.asarray(wt, jnp.float32)                         # (3,3,C,C)
        wf = jnp.pad(wf, ((0, 0), (0, 0), (0, Cp - C), (0, Cp - C)))
        wf = jnp.transpose(wf, (1, 0, 2, 3)).reshape(3, 3 * Cp, Cp)
        return wf.astype(compute_dtype)                           # [kw, kh*Cp+ci, co]

    w1p, w2p = prep_w(w1), prep_w(w2)

    out = pl.pallas_call(
        _resblock_kernel,
        out_shape=jax.ShapeDtypeStruct((N, H, W, C), out_dtype),
        grid=(N,),
        in_specs=[
            pl.BlockSpec((1, H, W, C), lambda n: (n, 0, 0, 0)),
            pl.BlockSpec((3, 3 * Cp, Cp), lambda n: (0, 0, 0)),
            pl.BlockSpec((3, 3 * Cp, Cp), lambda n: (0, 0, 0)),
        ],
        out_specs=pl.BlockSpec((1, H, W, C), lambda n: (n, 0, 0, 0)),
        scratch_shapes=[
            pltpu.VMEM((H + 2, Wp2, Cp), compute_dtype),   # padded x slab
            pltpu.VMEM((H + 2, Wp2, Cp), compute_dtype),   # padded y1 slab
        ],
        compiler_params=pltpu.CompilerParams(
            dimension_semantics=("parallel",),
            vmem_limit_bytes=_pick_vmem_limit(),
        ),
    )(x, w1p, w2p)

    # back to NCHW to match the PyTorch module (skip if downstream is NHWC)
    return jnp.transpose(out, (0, 3, 1, 2))


# ---------------------------------------------------------------------------
# Pure-JAX reference (independent path via lax.conv_general_dilated,
# including the conv biases -- which the kernel provably drops)
# ---------------------------------------------------------------------------
def _ref_block(x_nchw, w1, b1, w2, b2):
    x = jnp.transpose(x_nchw, (0, 2, 3, 1)).astype(jnp.float32)
    dn = lax.conv_dimension_numbers(x.shape, w1.shape, ("NHWC", "HWIO", "NHWC"))

    def conv_in(h, w, b, relu):
        hp = jnp.pad(h, ((0, 0), (1, 1), (1, 1), (0, 0)), mode="reflect")
        y = lax.conv_general_dilated(hp, w, (1, 1), "VALID", dimension_numbers=dn)
        y = y + b.reshape(1, 1, 1, -1)
        mean = jnp.mean(y, axis=(1, 2), keepdims=True)
        var = jnp.mean((y - mean) ** 2, axis=(1, 2), keepdims=True)
        y = (y - mean) / jnp.sqrt(var + EPS)
        return jnp.maximum(y, 0.0) if relu else y

    y = conv_in(conv_in(x, w1, b1, True), w2, b2, False)
    return jnp.transpose(x + y, (0, 3, 1, 2))


# ---------------------------------------------------------------------------
if __name__ == "__main__":
    N, C, H, W = 2, 4, 16, 16
    key = jax.random.PRNGKey(0)
    kx, k1, k2, k3, k4 = jax.random.split(key, 5)

    x = jax.random.normal(kx, (N, C, H, W), jnp.float32)

    # deterministic Conv2d(in=C, out=C, k=3) params (PyTorch-style uniform init)
    bound = 1.0 / np.sqrt(C * 3 * 3)
    w1 = jax.random.uniform(k1, (3, 3, C, C), jnp.float32, -bound, bound)
    b1 = jax.random.uniform(k2, (C,), jnp.float32, -bound, bound)
    w2 = jax.random.uniform(k3, (3, 3, C, C), jnp.float32, -bound, bound)
    b2 = jax.random.uniform(k4, (C,), jnp.float32, -bound, bound)

    ref = jax.block_until_ready(_ref_block(x, w1, b1, w2, b2))

    # f32 MXU-operand path: strict check against the XLA conv reference
    out_f32 = jax.block_until_ready(
        jax.jit(functools.partial(residual_block, compute_dtype=jnp.float32))(
            x, w1, b1, w2, b2))
    assert out_f32.shape == (N, C, H, W)
    np.testing.assert_allclose(np.asarray(out_f32), np.asarray(ref),
                               rtol=5e-4, atol=5e-4)

    # default bf16 MXU-operand path (v5e/v6e/v7x fast path): loose smoke check
    out_bf16 = jax.block_until_ready(jax.jit(residual_block)(x, w1, b1, w2, b2))
    assert out_bf16.shape == (N, C, H, W)
    np.testing.assert_allclose(np.asarray(out_bf16), np.asarray(ref),
                               rtol=5e-2, atol=5e-2)

    print("KERNEL_OK")
</pallas_src>

<mosaic_0001>
module attributes {stable_mosaic.version = 11 : i64} {
  func.func @_resblock_kernel(%arg0: i32, %arg1: memref<1x16x16x4xf32, #tpu.memory_space<vmem>>, %arg2: memref<3x384x128xf32, #tpu.memory_space<vmem>>, %arg3: memref<3x384x128xf32, #tpu.memory_space<vmem>>, %arg4: memref<1x16x16x4xf32, #tpu.memory_space<vmem>>, %arg5: memref<18x24x128xf32, #tpu.memory_space<vmem>>, %arg6: memref<18x24x128xf32, #tpu.memory_space<vmem>>) attributes {dimension_semantics = [#tpu.dimension_semantics<parallel>], iteration_bounds = array<i64: 2>, scalar_prefetch = 0 : i64, scratch_operands = 2 : i64, tpu.core_type = #tpu.core_type<tc>, window_params = [{transform_indices = @transform_0, window_bounds = array<i64: 1, 16, 16, 4>}, {pipeline_mode = #tpu.pipeline_mode<synchronous>, transform_indices = @transform_1, window_bounds = array<i64: 3, 384, 128>}, {pipeline_mode = #tpu.pipeline_mode<synchronous>, transform_indices = @transform_2, window_bounds = array<i64: 3, 384, 128>}, {transform_indices = @transform_3, window_bounds = array<i64: 1, 16, 16, 4>}]} {
    %c0 = arith.constant 0 : index
    %c0_0 = arith.constant 0 : index
    %c0_1 = arith.constant 0 : index
    %c0_2 = arith.constant 0 : index
    %0 = vector.load %arg1[%c0, %c0_0, %c0_1, %c0_2] : memref<1x16x16x4xf32, #tpu.memory_space<vmem>>, vector<1x16x16x4xf32>
    %1 = vector.shape_cast %0 : vector<1x16x16x4xf32> to vector<16x16x4xf32>
    %cst = arith.constant 0.000000e+00 : f32
    %2 = vector.broadcast %cst : f32 to vector<16x16x124xf32>
    %3 = tpu.concatenate %1, %2 in 2 : vector<16x16x4xf32>, vector<16x16x124xf32> -> vector<16x16x128xf32>
    %c1 = arith.constant 1 : index
    %c1_3 = arith.constant 1 : index
    %c0_4 = arith.constant 0 : index
    %4 = vector.load %arg5[%c1, %c1_3, %c0_4] : memref<18x24x128xf32, #tpu.memory_space<vmem>>, vector<16x16x128xf32>
    tpu.vector_store %arg5[%c1, %c1_3, %c0_4], %3 {strides = array<i32>} : memref<18x24x128xf32, #tpu.memory_space<vmem>>, vector<16x16x128xf32>,
    %5 = vector.extract_strided_slice %3 {offsets = [1, 0, 0], sizes = [1, 16, 128], strides = [1, 1, 1]} : vector<16x16x128xf32> to vector<1x16x128xf32>
    %c0_5 = arith.constant 0 : index
    %c1_6 = arith.constant 1 : index
    %c0_7 = arith.constant 0 : index
    %6 = vector.load %arg5[%c0_5, %c1_6, %c0_7] : memref<18x24x128xf32, #tpu.memory_space<vmem>>, vector<1x16x128xf32>
    tpu.vector_store %arg5[%c0_5, %c1_6, %c0_7], %5 {strides = array<i32>} : memref<18x24x128xf32, #tpu.memory_space<vmem>>, vector<1x16x128xf32>,
    %7 = vector.extract_strided_slice %3 {offsets = [14, 0, 0], sizes = [1, 16, 128], strides = [1, 1, 1]} : vector<16x16x128xf32> to vector<1x16x128xf32>
    %c17 = arith.constant 17 : index
    %c1_8 = arith.constant 1 : index
    %c0_9 = arith.constant 0 : index
    %8 = vector.load %arg5[%c17, %c1_8, %c0_9] : memref<18x24x128xf32, #tpu.memory_space<vmem>>, vector<1x16x128xf32>
    tpu.vector_store %arg5[%c17, %c1_8, %c0_9], %7 {strides = array<i32>} : memref<18x24x128xf32, #tpu.memory_space<vmem>>, vector<1x16x128xf32>,
    %c0_10 = arith.constant 0 : index
    %c2 = arith.constant 2 : index
    %c0_11 = arith.constant 0 : index
    %9 = vector.load %arg5[%c0_10, %c2, %c0_11] : memref<18x24x128xf32, #tpu.memory_space<vmem>>, vector<18x1x128xf32>
    %c0_12 = arith.constant 0 : index
    %c0_13 = arith.constant 0 : index
    %c0_14 = arith.constant 0 : index
    %10 = vector.load %arg5[%c0_12, %c0_13, %c0_14] : memref<18x24x128xf32, #tpu.memory_space<vmem>>, vector<18x1x128xf32>
    tpu.vector_store %arg5[%c0_12, %c0_13, %c0_14], %9 {strides = array<i32>} : memref<18x24x128xf32, #tpu.memory_space<vmem>>, vector<18x1x128xf32>,
    %c0_15 = arith.constant 0 : index
    %c15 = arith.constant 15 : index
    %c0_16 = arith.constant 0 : index
    %11 = vector.load %arg5[%c0_15, %c15, %c0_16] : memref<18x24x128xf32, #tpu.memory_space<vmem>>, vector<18x1x128xf32>
    %c0_17 = arith.constant 0 : index
    %c17_18 = arith.constant 17 : index
    %c0_19 = arith.constant 0 : index
    %12 = vector.load %arg5[%c0_17, %c17_18, %c0_19] : memref<18x24x128xf32, #tpu.memory_space<vmem>>, vector<18x1x128xf32>
    tpu.vector_store %arg5[%c0_17, %c17_18, %c0_19], %11 {strides = array<i32>} : memref<18x24x128xf32, #tpu.memory_space<vmem>>, vector<18x1x128xf32>,
    %cst_20 = arith.constant 0.000000e+00 : f32
    %13 = vector.broadcast %cst_20 : f32 to vector<18x6x128xf32>
    %c0_21 = arith.constant 0 : index
    %c18 = arith.constant 18 : index
    %c0_22 = arith.constant 0 : index
    %14 = vector.load %arg5[%c0_21, %c18, %c0_22] : memref<18x24x128xf32, #tpu.memory_space<vmem>>, vector<18x6x128xf32>
    tpu.vector_store %arg5[%c0_21, %c18, %c0_22], %13 {strides = array<i32>} : memref<18x24x128xf32, #tpu.memory_space<vmem>>, vector<18x6x128xf32>,
    %c0_23 = arith.constant 0 : index
    %c0_24 = arith.constant 0 : index
    %c0_25 = arith.constant 0 : index
    %15 = vector.load %arg5[%c0_23, %c0_24, %c0_25] : memref<18x24x128xf32, #tpu.memory_space<vmem>>, vector<16x24x128xf32>
    %16 = vector.shape_cast %15 : vector<16x24x128xf32> to vector<384x128xf32>
    %c1_26 = arith.constant 1 : index
    %c0_27 = arith.constant 0 : index
    %c0_28 = arith.constant 0 : index
    %17 = vector.load %arg5[%c1_26, %c0_27, %c0_28] : memref<18x24x128xf32, #tpu.memory_space<vmem>>, vector<16x24x128xf32>
    %18 = vector.shape_cast %17 : vector<16x24x128xf32> to vector<384x128xf32>
    %c2_29 = arith.constant 2 : index
    %c0_30 = arith.constant 0 : index
    %c0_31 = arith.constant 0 : index
    %19 = vector.load %arg5[%c2_29, %c0_30, %c0_31] : memref<18x24x128xf32, #tpu.memory_space<vmem>>, vector<16x24x128xf32>
    %20 = vector.shape_cast %19 : vector<16x24x128xf32> to vector<384x128xf32>
    %21 = tpu.concatenate %16, %18, %20 in 1 : vector<384x128xf32>, vector<384x128xf32>, vector<384x128xf32> -> vector<384x384xf32>
    %c0_32 = arith.constant 0 : index
    %c0_33 = arith.constant 0 : index
    %c0_34 = arith.constant 0 : index
    %22 = vector.load %arg2[%c0_32, %c0_33, %c0_34] : memref<3x384x128xf32, #tpu.memory_space<vmem>>, vector<1x384x128xf32>
    %23 = vector.shape_cast %22 : vector<1x384x128xf32> to vector<384x128xf32>
    %cst_35 = arith.constant dense<0.000000e+00> : vector<384x128xf32>
    %24 = tpu.matmul %21, %23, %cst_35 {dimension_numbers = #tpu.dot_dimension_numbers<[1], [0], [0], [1], [0, 0, 1, 1], [], []>} : vector<384x384xf32>, vector<384x128xf32>, vector<384x128xf32> -> vector<384x128xf32>
    %25 = vector.shape_cast %24 : vector<384x128xf32> to vector<16x24x128xf32>
    %c1_36 = arith.constant 1 : index
    %c0_37 = arith.constant 0 : index
    %c0_38 = arith.constant 0 : index
    %26 = vector.load %arg2[%c1_36, %c0_37, %c0_38] : memref<3x384x128xf32, #tpu.memory_space<vmem>>, vector<1x384x128xf32>
    %27 = vector.shape_cast %26 : vector<1x384x128xf32> to vector<384x128xf32>
    %cst_39 = arith.constant dense<0.000000e+00> : vector<384x128xf32>
    %28 = tpu.matmul %21, %27, %cst_39 {dimension_numbers = #tpu.dot_dimension_numbers<[1], [0], [0], [1], [0, 0, 1, 1], [], []>} : vector<384x384xf32>, vector<384x128xf32>, vector<384x128xf32> -> vector<384x128xf32>
    %29 = vector.shape_cast %28 : vector<384x128xf32> to vector<16x24x128xf32>
    %c2_40 = arith.constant 2 : index
    %c0_41 = arith.constant 0 : index
    %c0_42 = arith.constant 0 : index
    %30 = vector.load %arg2[%c2_40, %c0_41, %c0_42] : memref<3x384x128xf32, #tpu.memory_space<vmem>>, vector<1x384x128xf32>
    %31 = vector.shape_cast %30 : vector<1x384x128xf32> to vector<384x128xf32>
    %cst_43 = arith.constant dense<0.000000e+00> : vector<384x128xf32>
    %32 = tpu.matmul %21, %31, %cst_43 {dimension_numbers = #tpu.dot_dimension_numbers<[1], [0], [0], [1], [0, 0, 1, 1], [], []>} : vector<384x384xf32>, vector<384x128xf32>, vector<384x128xf32> -> vector<384x128xf32>
    %33 = vector.shape_cast %32 : vector<384x128xf32> to vector<16x24x128xf32>
    %34 = vector.extract_strided_slice %25 {offsets = [0, 0, 0], sizes = [16, 16, 128], strides = [1, 1, 1]} : vector<16x24x128xf32> to vector<16x16x128xf32>
    %35 = vector.extract_strided_slice %29 {offsets = [0, 1, 0], sizes = [16, 16, 128], strides = [1, 1, 1]} : vector<16x24x128xf32> to vector<16x16x128xf32>
    %36 = arith.addf %34, %35 : vector<16x16x128xf32>
    %37 = vector.extract_strided_slice %33 {offsets = [0, 2, 0], sizes = [16, 16, 128], strides = [1, 1, 1]} : vector<16x24x128xf32> to vector<16x16x128xf32>
    %38 = arith.addf %36, %37 : vector<16x16x128xf32>
    %cst_44 = arith.constant dense<0.000000e+00> : vector<16x128xf32>
    %39 = vector.multi_reduction <add>, %38, %cst_44 [0] : vector<16x16x128xf32> to vector<16x128xf32>
    %40 = vector.shape_cast %39 : vector<16x128xf32> to vector<1x16x128xf32>
    %cst_45 = arith.constant dense<0.000000e+00> : vector<1x128xf32>
    %41 = vector.multi_reduction <add>, %40, %cst_45 [1] : vector<1x16x128xf32> to vector<1x128xf32>
    %42 = vector.shape_cast %41 : vector<1x128xf32> to vector<1x1x128xf32>
    %cst_46 = arith.constant 3.906250e-03 : f32
    %43 = vector.broadcast %cst_46 : f32 to vector<1x1x128xf32>
    %44 = arith.mulf %42, %43 : vector<1x1x128xf32>
    %45 = vector.broadcast %44 : vector<1x1x128xf32> to vector<16x16x128xf32>
    %46 = arith.subf %38, %45 : vector<16x16x128xf32>
    %47 = arith.mulf %46, %46 : vector<16x16x128xf32>
    %cst_47 = arith.constant dense<0.000000e+00> : vector<16x128xf32>
    %48 = vector.multi_reduction <add>, %47, %cst_47 [0] : vector<16x16x128xf32> to vector<16x128xf32>
    %49 = vector.shape_cast %48 : vector<16x128xf32> to vector<1x16x128xf32>
    %cst_48 = arith.constant dense<0.000000e+00> : vector<1x128xf32>
    %50 = vector.multi_reduction <add>, %49, %cst_48 [1] : vector<1x16x128xf32> to vector<1x128xf32>
    %51 = vector.shape_cast %50 : vector<1x128xf32> to vector<1x1x128xf32>
    %cst_49 = arith.constant 3.906250e-03 : f32
    %52 = vector.broadcast %cst_49 : f32 to vector<1x1x128xf32>
    %53 = arith.mulf %51, %52 : vector<1x1x128xf32>
    %cst_50 = arith.constant 9.99999974E-6 : f32
    %54 = vector.broadcast %cst_50 : f32 to vector<1x1x128xf32>
    %55 = arith.addf %53, %54 : vector<1x1x128xf32>
    %56 = math.rsqrt %55 : vector<1x1x128xf32>
    %57 = vector.broadcast %56 : vector<1x1x128xf32> to vector<16x16x128xf32>
    %58 = arith.mulf %46, %57 : vector<16x16x128xf32>
    %cst_51 = arith.constant 0.000000e+00 : f32
    %59 = vector.broadcast %cst_51 : f32 to vector<16x16x128xf32>
    %60 = arith.maximumf %58, %59 : vector<16x16x128xf32>
    %c1_52 = arith.constant 1 : index
    %c1_53 = arith.constant 1 : index
    %c0_54 = arith.constant 0 : index
    %61 = vector.load %arg6[%c1_52, %c1_53, %c0_54] : memref<18x24x128xf32, #tpu.memory_space<vmem>>, vector<16x16x128xf32>
    tpu.vector_store %arg6[%c1_52, %c1_53, %c0_54], %60 {strides = array<i32>} : memref<18x24x128xf32, #tpu.memory_space<vmem>>, vector<16x16x128xf32>,
    %62 = vector.extract_strided_slice %60 {offsets = [1, 0, 0], sizes = [1, 16, 128], strides = [1, 1, 1]} : vector<16x16x128xf32> to vector<1x16x128xf32>
    %c0_55 = arith.constant 0 : index
    %c1_56 = arith.constant 1 : index
    %c0_57 = arith.constant 0 : index
    %63 = vector.load %arg6[%c0_55, %c1_56, %c0_57] : memref<18x24x128xf32, #tpu.memory_space<vmem>>, vector<1x16x128xf32>
    tpu.vector_store %arg6[%c0_55, %c1_56, %c0_57], %62 {strides = array<i32>} : memref<18x24x128xf32, #tpu.memory_space<vmem>>, vector<1x16x128xf32>,
    %64 = vector.extract_strided_slice %60 {offsets = [14, 0, 0], sizes = [1, 16, 128], strides = [1, 1, 1]} : vector<16x16x128xf32> to vector<1x16x128xf32>
    %c17_58 = arith.constant 17 : index
    %c1_59 = arith.constant 1 : index
    %c0_60 = arith.constant 0 : index
    %65 = vector.load %arg6[%c17_58, %c1_59, %c0_60] : memref<18x24x128xf32, #tpu.memory_space<vmem>>, vector<1x16x128xf32>
    tpu.vector_store %arg6[%c17_58, %c1_59, %c0_60], %64 {strides = array<i32>} : memref<18x24x128xf32, #tpu.memory_space<vmem>>, vector<1x16x128xf32>,
    %c0_61 = arith.constant 0 : index
    %c2_62 = arith.constant 2 : index
    %c0_63 = arith.constant 0 : index
    %66 = vector.load %arg6[%c0_61, %c2_62, %c0_63] : memref<18x24x128xf32, #tpu.memory_space<vmem>>, vector<18x1x128xf32>
    %c0_64 = arith.constant 0 : index
    %c0_65 = arith.constant 0 : index
    %c0_66 = arith.constant 0 : index
    %67 = vector.load %arg6[%c0_64, %c0_65, %c0_66] : memref<18x24x128xf32, #tpu.memory_space<vmem>>, vector<18x1x128xf32>
    tpu.vector_store %arg6[%c0_64, %c0_65, %c0_66], %66 {strides = array<i32>} : memref<18x24x128xf32, #tpu.memory_space<vmem>>, vector<18x1x128xf32>,
    %c0_67 = arith.constant 0 : index
    %c15_68 = arith.constant 15 : index
    %c0_69 = arith.constant 0 : index
    %68 = vector.load %arg6[%c0_67, %c15_68, %c0_69] : memref<18x24x128xf32, #tpu.memory_space<vmem>>, vector<18x1x128xf32>
    %c0_70 = arith.constant 0 : index
    %c17_71 = arith.constant 17 : index
    %c0_72 = arith.constant 0 : index
    %69 = vector.load %arg6[%c0_70, %c17_71, %c0_72] : memref<18x24x128xf32, #tpu.memory_space<vmem>>, vector<18x1x128xf32>
    tpu.vector_store %arg6[%c0_70, %c17_71, %c0_72], %68 {strides = array<i32>} : memref<18x24x128xf32, #tpu.memory_space<vmem>>, vector<18x1x128xf32>,
    %cst_73 = arith.constant 0.000000e+00 : f32
    %70 = vector.broadcast %cst_73 : f32 to vector<18x6x128xf32>
    %c0_74 = arith.constant 0 : index
    %c18_75 = arith.constant 18 : index
    %c0_76 = arith.constant 0 : index
    %71 = vector.load %arg6[%c0_74, %c18_75, %c0_76] : memref<18x24x128xf32, #tpu.memory_space<vmem>>, vector<18x6x128xf32>
    tpu.vector_store %arg6[%c0_74, %c18_75, %c0_76], %70 {strides = array<i32>} : memref<18x24x128xf32, #tpu.memory_space<vmem>>, vector<18x6x128xf32>,
    %c0_77 = arith.constant 0 : index
    %c0_78 = arith.constant 0 : index
    %c0_79 = arith.constant 0 : index
    %72 = vector.load %arg6[%c0_77, %c0_78, %c0_79] : memref<18x24x128xf32, #tpu.memory_space<vmem>>, vector<16x24x128xf32>
    %73 = vector.shape_cast %72 : vector<16x24x128xf32> to vector<384x128xf32>
    %c1_80 = arith.constant 1 : index
    %c0_81 = arith.constant 0 : index
    %c0_82 = arith.constant 0 : index
    %74 = vector.load %arg6[%c1_80, %c0_81, %c0_82] : memref<18x24x128xf32, #tpu.memory_space<vmem>>, vector<16x24x128xf32>
    %75 = vector.shape_cast %74 : vector<16x24x128xf32> to vector<384x128xf32>
    %c2_83 = arith.constant 2 : index
    %c0_84 = arith.constant 0 : index
    %c0_85 = arith.constant 0 : index
    %76 = vector.load %arg6[%c2_83, %c0_84, %c0_85] : memref<18x24x128xf32, #tpu.memory_space<vmem>>, vector<16x24x128xf32>
    %77 = vector.shape_cast %76 : vector<16x24x128xf32> to vector<384x128xf32>
    %78 = tpu.concatenate %73, %75, %77 in 1 : vector<384x128xf32>, vector<384x128xf32>, vector<384x128xf32> -> vector<384x384xf32>
    %c0_86 = arith.constant 0 : index
    %c0_87 = arith.constant 0 : index
    %c0_88 = arith.constant 0 : index
    %79 = vector.load %arg3[%c0_86, %c0_87, %c0_88] : memref<3x384x128xf32, #tpu.memory_space<vmem>>, vector<1x384x128xf32>
    %80 = vector.shape_cast %79 : vector<1x384x128xf32> to vector<384x128xf32>
    %cst_89 = arith.constant dense<0.000000e+00> : vector<384x128xf32>
    %81 = tpu.matmul %78, %80, %cst_89 {dimension_numbers = #tpu.dot_dimension_numbers<[1], [0], [0], [1], [0, 0, 1, 1], [], []>} : vector<384x384xf32>, vector<384x128xf32>, vector<384x128xf32> -> vector<384x128xf32>
    %82 = vector.shape_cast %81 : vector<384x128xf32> to vector<16x24x128xf32>
    %c1_90 = arith.constant 1 : index
    %c0_91 = arith.constant 0 : index
    %c0_92 = arith.constant 0 : index
    %83 = vector.load %arg3[%c1_90, %c0_91, %c0_92] : memref<3x384x128xf32, #tpu.memory_space<vmem>>, vector<1x384x128xf32>
    %84 = vector.shape_cast %83 : vector<1x384x128xf32> to vector<384x128xf32>
    %cst_93 = arith.constant dense<0.000000e+00> : vector<384x128xf32>
    %85 = tpu.matmul %78, %84, %cst_93 {dimension_numbers = #tpu.dot_dimension_numbers<[1], [0], [0], [1], [0, 0, 1, 1], [], []>} : vector<384x384xf32>, vector<384x128xf32>, vector<384x128xf32> -> vector<384x128xf32>
    %86 = vector.shape_cast %85 : vector<384x128xf32> to vector<16x24x128xf32>
    %c2_94 = arith.constant 2 : index
    %c0_95 = arith.constant 0 : index
    %c0_96 = arith.constant 0 : index
    %87 = vector.load %arg3[%c2_94, %c0_95, %c0_96] : memref<3x384x128xf32, #tpu.memory_space<vmem>>, vector<1x384x128xf32>
    %88 = vector.shape_cast %87 : vector<1x384x128xf32> to vector<384x128xf32>
    %cst_97 = arith.constant dense<0.000000e+00> : vector<384x128xf32>
    %89 = tpu.matmul %78, %88, %cst_97 {dimension_numbers = #tpu.dot_dimension_numbers<[1], [0], [0], [1], [0, 0, 1, 1], [], []>} : vector<384x384xf32>, vector<384x128xf32>, vector<384x128xf32> -> vector<384x128xf32>
    %90 = vector.shape_cast %89 : vector<384x128xf32> to vector<16x24x128xf32>
    %91 = vector.extract_strided_slice %82 {offsets = [0, 0, 0], sizes = [16, 16, 128], strides = [1, 1, 1]} : vector<16x24x128xf32> to vector<16x16x128xf32>
    %92 = vector.extract_strided_slice %86 {offsets = [0, 1, 0], sizes = [16, 16, 128], strides = [1, 1, 1]} : vector<16x24x128xf32> to vector<16x16x128xf32>
    %93 = arith.addf %91, %92 : vector<16x16x128xf32>
    %94 = vector.extract_strided_slice %90 {offsets = [0, 2, 0], sizes = [16, 16, 128], strides = [1, 1, 1]} : vector<16x24x128xf32> to vector<16x16x128xf32>
    %95 = arith.addf %93, %94 : vector<16x16x128xf32>
    %cst_98 = arith.constant dense<0.000000e+00> : vector<16x128xf32>
    %96 = vector.multi_reduction <add>, %95, %cst_98 [0] : vector<16x16x128xf32> to vector<16x128xf32>
    %97 = vector.shape_cast %96 : vector<16x128xf32> to vector<1x16x128xf32>
    %cst_99 = arith.constant dense<0.000000e+00> : vector<1x128xf32>
    %98 = vector.multi_reduction <add>, %97, %cst_99 [1] : vector<1x16x128xf32> to vector<1x128xf32>
    %99 = vector.shape_cast %98 : vector<1x128xf32> to vector<1x1x128xf32>
    %cst_100 = arith.constant 3.906250e-03 : f32
    %100 = vector.broadcast %cst_100 : f32 to vector<1x1x128xf32>
    %101 = arith.mulf %99, %100 : vector<1x1x128xf32>
    %102 = vector.broadcast %101 : vector<1x1x128xf32> to vector<16x16x128xf32>
    %103 = arith.subf %95, %102 : vector<16x16x128xf32>
    %104 = arith.mulf %103, %103 : vector<16x16x128xf32>
    %cst_101 = arith.constant dense<0.000000e+00> : vector<16x128xf32>
    %105 = vector.multi_reduction <add>, %104, %cst_101 [0] : vector<16x16x128xf32> to vector<16x128xf32>
    %106 = vector.shape_cast %105 : vector<16x128xf32> to vector<1x16x128xf32>
    %cst_102 = arith.constant dense<0.000000e+00> : vector<1x128xf32>
    %107 = vector.multi_reduction <add>, %106, %cst_102 [1] : vector<1x16x128xf32> to vector<1x128xf32>
    %108 = vector.shape_cast %107 : vector<1x128xf32> to vector<1x1x128xf32>
    %cst_103 = arith.constant 3.906250e-03 : f32
    %109 = vector.broadcast %cst_103 : f32 to vector<1x1x128xf32>
    %110 = arith.mulf %108, %109 : vector<1x1x128xf32>
    %cst_104 = arith.constant 9.99999974E-6 : f32
    %111 = vector.broadcast %cst_104 : f32 to vector<1x1x128xf32>
    %112 = arith.addf %110, %111 : vector<1x1x128xf32>
    %113 = math.rsqrt %112 : vector<1x1x128xf32>
    %114 = vector.broadcast %113 : vector<1x1x128xf32> to vector<16x16x128xf32>
    %115 = arith.mulf %103, %114 : vector<16x16x128xf32>
    %c0_105 = arith.constant 0 : index
    %c0_106 = arith.constant 0 : index
    %c0_107 = arith.constant 0 : index
    %c0_108 = arith.constant 0 : index
    %116 = vector.load %arg1[%c0_105, %c0_106, %c0_107, %c0_108] : memref<1x16x16x4xf32, #tpu.memory_space<vmem>>, vector<1x16x16x4xf32>
    %117 = vector.shape_cast %116 : vector<1x16x16x4xf32> to vector<16x16x4xf32>
    %118 = vector.extract_strided_slice %115 {offsets = [0, 0, 0], sizes = [16, 16, 4], strides = [1, 1, 1]} : vector<16x16x128xf32> to vector<16x16x4xf32>
    %119 = arith.addf %117, %118 : vector<16x16x4xf32>
    %c0_109 = arith.constant 0 : index
    %c0_110 = arith.constant 0 : index
    %c0_111 = arith.constant 0 : index
    %c0_112 = arith.constant 0 : index
    %120 = vector.load %arg4[%c0_109, %c0_110, %c0_111, %c0_112] : memref<1x16x16x4xf32, #tpu.memory_space<vmem>>, vector<1x16x16x4xf32>
    %121 = vector.shape_cast %120 : vector<1x16x16x4xf32> to vector<16x16x4xf32>
    %122 = vector.shape_cast %119 : vector<16x16x4xf32> to vector<1x16x16x4xf32>
    tpu.vector_store %arg4[%c0_109, %c0_110, %c0_111, %c0_112], %122 {strides = array<i32>} : memref<1x16x16x4xf32, #tpu.memory_space<vmem>>, vector<1x16x16x4xf32>,
    return
  }
  func.func @transform_0(%arg0: i32) -> (i32, i32, i32, i32) {
    %c0_i32 = arith.constant 0 : i32
    %c0_i32_0 = arith.constant 0 : i32
    %c0_i32_1 = arith.constant 0 : i32
    %c0_i32_2 = arith.constant 0 : i32
    return %arg0, %c0_i32, %c0_i32_0, %c0_i32_1 : i32, i32, i32, i32
  }
  func.func @transform_1(%arg0: i32) -> (i32, i32, i32) {
    %c0_i32 = arith.constant 0 : i32
    %c0_i32_0 = arith.constant 0 : i32
    %c0_i32_1 = arith.constant 0 : i32
    %c0_i32_2 = arith.constant 0 : i32
    return %c0_i32, %c0_i32_0, %c0_i32_1 : i32, i32, i32
  }
  func.func @transform_2(%arg0: i32) -> (i32, i32, i32) {
    %c0_i32 = arith.constant 0 : i32
    %c0_i32_0 = arith.constant 0 : i32
    %c0_i32_1 = arith.constant 0 : i32
    %c0_i32_2 = arith.constant 0 : i32
    return %c0_i32, %c0_i32_0, %c0_i32_1 : i32, i32, i32
  }
  func.func @transform_3(%arg0: i32) -> (i32, i32, i32, i32) {
    %c0_i32 = arith.constant 0 : i32
    %c0_i32_0 = arith.constant 0 : i32
    %c0_i32_1 = arith.constant 0 : i32
    %c0_i32_2 = arith.constant 0 : i32
    return %arg0, %c0_i32, %c0_i32_0, %c0_i32_1 : i32, i32, i32, i32
  }
}

</mosaic_0001>

<llo_original>
// kernel: residual_block.1
$region0: #{residual_block.1}
  #allocation0 [shape = 'u32[]', space=smem, size = 0x4, offset = 0x4, fixed_abs, tag = 'smem constant byte address 0x4 - core index']
  #allocation1 [shape = 'u32[72,128]{1,0:T(1,128)}', space=vmem, size = 0x9000, scoped, tag = 'internal scratch']
  #allocation2 [shape = 'f32[18,24,128]{2,1,0:T(8,128)}', space=vmem, size = 0x36000, scoped, tag = 'scratch operand']
  #allocation3 [shape = 'f32[18,24,128]{2,1,0:T(8,128)}', space=vmem, size = 0x36000, scoped, tag = 'scratch operand']
  %s0 = inlined_call_operand.vmem [shape: f32[2,16,16,4], index: 0, kind: input, shape index: {}]
  %s1 = inlined_call_operand.vmem [shape: f32[3,384,128], index: 1, kind: input, shape index: {}]
  %s2 = inlined_call_operand.vmem [shape: f32[3,384,128], index: 2, kind: input, shape index: {}]
  %s3 = inlined_call_operand.vmem [shape: f32[2,16,16,4], index: 3, kind: output, shape index: {}]
  %s4 = sld [smem:[#allocation0]]
  $region45: #{residual_block.1} parent=0
    _
  %s6 = ssub.s32 1, %s4
  %s7 = scalar_select 0, %s6, %s4
  loop: start=0, step=1, limit=4
  $region2: #{residual_block.1} parent=0 // loop_pre_header
    _
  $region3: #{residual_block.1} parent=0 // loop_header
    %s9 = sphi 0, %s13
    %p10 = scmp.ge.s32.totalorder %s9, 4
    %s19 = sphi 0, %s21
    %s22 = sphi 0, %s19
    %s23 = sphi 0, %s22
    %s39 = sphi 0, %s23
    %s43 = sphi 0, %s43
    %s45 = sphi 0, %s43
    %s46 = sphi 0, %s45
    %s60 = sphi 0, %s46
    %s64 = sphi 0, %s64
    %s66 = sphi 0, %s64
    %s67 = sphi 0, %s66
    %s81 = sphi 0, %s67
    %s87 = sphi 0, %s89
    %s90 = sphi 0, %s87
    %s91 = sphi 0, %s90
    %s107 = sphi 0, %s91
  $region4: #{residual_block.1} parent=0 // loop_header_branch
    %12 = sbr.rel (%p10) target = $region8
  $region5: #{residual_block.1} parent=0 // loop_body
    %s14 = ssub.s32 %s9, 1
    %s15 = ssub.s32 %s9, 2
    %s16 = sadd.s32 %s9, 1
    %s17 = ssub.s32 %s9, %s16
    %p18 = scmp.eq.s32.totalorder %s17, 0
    %s20 = sadd.s32 %s19, 1
    %s21 = scalar_select %p18, %s19, %s20
    %p24 = pneg %p18
    %p25 = scmp.eq.s32.totalorder %s9, 1
    %p26 = por %p24, %p25
    %p27 = scmp.ne.s32.totalorder %s19, %s22
    %p28 = scmp.eq.s32.totalorder %s9, 0
    %p29 = por %p27, %p28
    %p30 = scmp.ne.s32.totalorder %s19, %s22
    %p31 = scmp.eq.s32.totalorder %s14, 1
    %p32 = por %p30, %p31
    %p33 = scmp.ne.s32.totalorder %s22, %s23
    %p34 = scmp.eq.s32.totalorder %s14, 0
    %p35 = por %p33, %p34
    %p36 = scmp.ne.s32.totalorder %s22, %s23
    %p37 = scmp.eq.s32.totalorder %s15, 1
    %p38 = por %p36, %p37
    %p40 = scmp.ne.s32.totalorder %s23, %s39
    %p41 = scmp.eq.s32.totalorder %s15, 0
    %p42 = por %p40, %p41
    %s44 = sadd.s32 %s43, 1
    %p47 = scmp.eq.s32.totalorder %s9, 1
    %p48 = scmp.ne.s32.totalorder %s43, %s45
    %p49 = scmp.eq.s32.totalorder %s9, 0
    %p50 = por %p48, %p49
    %p51 = scmp.ne.s32.totalorder %s43, %s45
    %p52 = scmp.eq.s32.totalorder %s14, 1
    %p53 = por %p51, %p52
    %p54 = scmp.ne.s32.totalorder %s45, %s46
    %p55 = scmp.eq.s32.totalorder %s14, 0
    %p56 = por %p54, %p55
    %p57 = scmp.ne.s32.totalorder %s45, %s46
    %p58 = scmp.eq.s32.totalorder %s15, 1
    %p59 = por %p57, %p58
    %p61 = scmp.ne.s32.totalorder %s46, %s60
    %p62 = scmp.eq.s32.totalorder %s15, 0
    %p63 = por %p61, %p62
    %s65 = sadd.s32 %s64, 1
    %p68 = scmp.eq.s32.totalorder %s9, 1
    %p69 = scmp.ne.s32.totalorder %s64, %s66
    %p70 = scmp.eq.s32.totalorder %s9, 0
    %p71 = por %p69, %p70
    %p72 = scmp.ne.s32.totalorder %s64, %s66
    %p73 = scmp.eq.s32.totalorder %s14, 1
    %p74 = por %p72, %p73
    %p75 = scmp.ne.s32.totalorder %s66, %s67
    %p76 = scmp.eq.s32.totalorder %s14, 0
    %p77 = por %p75, %p76
    %p78 = scmp.ne.s32.totalorder %s66, %s67
    %p79 = scmp.eq.s32.totalorder %s15, 1
    %p80 = por %p78, %p79
    %p82 = scmp.ne.s32.totalorder %s67, %s81
    %p83 = scmp.eq.s32.totalorder %s15, 0
    %p84 = por %p82, %p83
    %s85 = ssub.s32 %s9, %s16
    %p86 = scmp.eq.s32.totalorder %s85, 0
    %s88 = sadd.s32 %s87, 1
    %s89 = scalar_select %p86, %s87, %s88
    %p92 = pneg %p86
    %p93 = scmp.eq.s32.totalorder %s9, 1
    %p94 = por %p92, %p93
    %p95 = scmp.ne.s32.totalorder %s87, %s90
    %p96 = scmp.eq.s32.totalorder %s9, 0
    %p97 = por %p95, %p96
    %p98 = scmp.ne.s32.totalorder %s87, %s90
    %p99 = scmp.eq.s32.totalorder %s14, 1
    %p100 = por %p98, %p99
    %p101 = scmp.ne.s32.totalorder %s90, %s91
    %p102 = scmp.eq.s32.totalorder %s14, 0
    %p103 = por %p101, %p102
    %p104 = scmp.ne.s32.totalorder %s90, %s91
    %p105 = scmp.eq.s32.totalorder %s15, 1
    %p106 = por %p104, %p105
    %p108 = scmp.ne.s32.totalorder %s91, %s107
    %p109 = scmp.eq.s32.totalorder %s15, 0
    %p110 = por %p108, %p109
    %p111 = scmp.le.s32.totalorder 1, %s9
    %p112 = scmp.lt.s32.totalorder %s9, 3
    %p113 = pnand %p111, %p112
    %p114 = pneg %p113
    // Predicated region
    $region9: #{residual_block.1} parent=5 // pred_check
      _
    $region10: #{residual_block.1} parent=5 // pred_check_branch
      %116 = sbr.rel (%p113) target = $region12
    $region11: #{residual_block.1} parent=5 // pred_region
      %s117 = ssub.s32 %s9, 1
      // Predicated region
      $region13: #{residual_block.1} parent=11 // pred_check
        %p118 = pneg %p56
      $region14: #{residual_block.1} parent=11 // pred_check_branch
        %120 = sbr.rel (%p118) target = $region16
      $region15: #{residual_block.1} parent=11 // pred_region
        _
      $region16: #{residual_block.1} parent=11 // pred_fallthru
        _
      // Predicated region
      $region17: #{residual_block.1} parent=11 // pred_check
        %p121 = pneg %p77
      $region18: #{residual_block.1} parent=11 // pred_check_branch
        %123 = sbr.rel (%p121) target = $region20
      $region19: #{residual_block.1} parent=11 // pred_region
        _
      $region20: #{residual_block.1} parent=11 // pred_fallthru
        _
    $region12: #{residual_block.1} parent=5 // pred_fallthru
      _
    %p124 = scmp.lt.s32.totalorder %s9, 2
    // Predicated region
    $region21: #{residual_block.1} parent=5 // pred_check
      %p125 = pneg %p124
    $region22: #{residual_block.1} parent=5 // pred_check_branch
      %127 = sbr.rel (%p125) target = $region24
    $region23: #{residual_block.1} parent=5 // pred_region
      // Predicated region
      $region25: #{residual_block.1} parent=23 // pred_check
        %p128 = pneg %p29
      $region26: #{residual_block.1} parent=23 // pred_check_branch
        %130 = sbr.rel (%p128) target = $region28
      $region27: #{residual_block.1} parent=23 // pred_region
        %p131 = scmp.lt.s32.totalorder %s9, 1
        %s132 = scalar_select %p131, %s9, 1
        %s133 = smul.addr %s132, 32
        %s134 = smul.addr %s133, 8
        %s135 = scalar_lea.vmem %s0, %s134
      $region28: #{residual_block.1} parent=23 // pred_fallthru
        _
    $region24: #{residual_block.1} parent=5 // pred_fallthru
      _
    %p136 = scmp.le.s32.totalorder 1, %s9
    %p137 = scmp.lt.s32.totalorder %s9, 3
    %p138 = pnand %p136, %p137
    %p139 = pneg %p138
    // Predicated region
    $region29: #{residual_block.1} parent=5 // pred_check
      _
    $region30: #{residual_block.1} parent=5 // pred_check_branch
      %141 = sbr.rel (%p138) target = $region32
    $region31: #{residual_block.1} parent=5 // pred_region
      %s142 = ssub.s32 %s9, 1
      %p143 = scmp.lt.s32.totalorder %s14, 1
      %s144 = scalar_select %p143, %s14, 1
      %s145 = smul.addr %s144, 32
      %s146 = smul.addr %s145, 8
      %s147 = scalar_lea.vmem %s0, %s146
      %p148 = pneg %p35
      %p149 = pneg %p32
      %p150 = pneg %p56
      %p151 = pneg %p53
      %p152 = pneg %p77
      %p153 = pneg %p74
      %p154 = pneg %p103
      %p155 = pneg %p100
      %p156 = scmp.lt.s32.totalorder %s14, 1
      %s157 = scalar_select %p156, %s14, 1
      %s158 = smul.addr %s157, 32
      %s159 = smul.addr %s158, 8
      %s160 = scalar_lea.vmem %s3, %s159
      %p161 = scmp.lt.s32.totalorder %s14, 1
      %s162 = scalar_select %p161, %s14, 1
      %s163 = smul.addr %s162, 32
      %s164 = smul.addr %s163, 8
      %s165 = scalar_lea.vmem %s0, %s164
      %p166 = scmp.lt.s32.totalorder %s14, 1
      %s167 = scalar_select %p166, %s14, 1
      %s168 = smul.addr %s167, 32
      %s169 = smul.addr %s168, 8
      %s170 = scalar_lea.vmem %s3, %s169
      %v171 = vld [vmem:[%s165] sm:$0xff]
      %v172 = vld [vmem:[%s165 + $0x8] sm:$0xff]
      %v173 = vld [vmem:[%s165 + $0x10] sm:$0xff]
      %v174 = vld [vmem:[%s165 + $0x18] sm:$0xff]
      %v175 = vld [vmem:[%s165 + $0x20] sm:$0xff]
      %v176 = vld [vmem:[%s165 + $0x28] sm:$0xff]
      %v177 = vld [vmem:[%s165 + $0x30] sm:$0xff]
      %v178 = vld [vmem:[%s165 + $0x38] sm:$0xff]
      %v179 = vld [vmem:[%s165 + $0x40] sm:$0xff]
      %v180 = vld [vmem:[%s165 + $0x48] sm:$0xff]
      %v181 = vld [vmem:[%s165 + $0x50] sm:$0xff]
      %v182 = vld [vmem:[%s165 + $0x58] sm:$0xff]
      %v183 = vld [vmem:[%s165 + $0x60] sm:$0xff]
      %v184 = vld [vmem:[%s165 + $0x68] sm:$0xff]
      %v185 = vld [vmem:[%s165 + $0x70] sm:$0xff]
      %v186 = vld [vmem:[%s165 + $0x78] sm:$0xff]
      %v187 = vld [vmem:[%s165 + $0x80] sm:$0xff]
      %v188 = vld [vmem:[%s165 + $0x88] sm:$0xff]
      %v189 = vld [vmem:[%s165 + $0x90] sm:$0xff]
      %v190 = vld [vmem:[%s165 + $0x98] sm:$0xff]
      %v191 = vld [vmem:[%s165 + $0xa0] sm:$0xff]
      %v192 = vld [vmem:[%s165 + $0xa8] sm:$0xff]
      %v193 = vld [vmem:[%s165 + $0xb0] sm:$0xff]
      %v194 = vld [vmem:[%s165 + $0xb8] sm:$0xff]
      %v195 = vld [vmem:[%s165 + $0xc0] sm:$0xff]
      %v196 = vld [vmem:[%s165 + $0xc8] sm:$0xff]
      %v197 = vld [vmem:[%s165 + $0xd0] sm:$0xff]
      %v198 = vld [vmem:[%s165 + $0xd8] sm:$0xff]
      %v199 = vld [vmem:[%s165 + $0xe0] sm:$0xff]
      %v200 = vld [vmem:[%s165 + $0xe8] sm:$0xff]
      %v201 = vld [vmem:[%s165 + $0xf0] sm:$0xff]
      %v202 = vld [vmem:[%s165 + $0xf8] sm:$0xff]
      %vm203 = vcmask 31744
      %v204 = vsel %vm203, %v171, 0.0
      %v205 = vsel %vm203, %v172, 0.0
      %v206 = vsel %vm203, %v173, 0.0
      %v207 = vsel %vm203, %v174, 0.0
      %v208 = vsel %vm203, %v175, 0.0
      %v209 = vsel %vm203, %v176, 0.0
      %v210 = vsel %vm203, %v177, 0.0
      %v211 = vsel %vm203, %v178, 0.0
      %v212 = vsel %vm203, %v179, 0.0
      %v213 = vsel %vm203, %v180, 0.0
      %v214 = vsel %vm203, %v181, 0.0
      %v215 = vsel %vm203, %v182, 0.0
      %v216 = vsel %vm203, %v183, 0.0
      %v217 = vsel %vm203, %v184, 0.0
      %v218 = vsel %vm203, %v185, 0.0
      %v219 = vsel %vm203, %v186, 0.0
      %v220 = vsel %vm203, %v187, 0.0
      %v221 = vsel %vm203, %v188, 0.0
      %v222 = vsel %vm203, %v189, 0.0
      %v223 = vsel %vm203, %v190, 0.0
      %v224 = vsel %vm203, %v191, 0.0
      %v225 = vsel %vm203, %v192, 0.0
      %v226 = vsel %vm203, %v193, 0.0
      %v227 = vsel %vm203, %v194, 0.0
      %v228 = vsel %vm203, %v195, 0.0
      %v229 = vsel %vm203, %v196, 0.0
      %v230 = vsel %vm203, %v197, 0.0
      %v231 = vsel %vm203, %v198, 0.0
      %v232 = vsel %vm203, %v199, 0.0
      %v233 = vsel %vm203, %v200, 0.0
      %v234 = vsel %vm203, %v201, 0.0
      %v235 = vsel %vm203, %v202, 0.0
      %s236 = scalar_lea.vmem [#allocation2], 24
      %237 = vst [vmem:[%s236 + $0x1] sm:$0xff] %v204
      %238 = vst [vmem:[%s236 + $0x9] sm:$0xff] %v205
      %239 = vst [vmem:[%s236 + $0x19] sm:$0xff] %v206
      %240 = vst [vmem:[%s236 + $0x21] sm:$0xff] %v207
      %241 = vst [vmem:[%s236 + $0x31] sm:$0xff] %v208
      %242 = vst [vmem:[%s236 + $0x39] sm:$0xff] %v209
      %243 = vst [vmem:[%s236 + $0x49] sm:$0xff] %v210
      %244 = vst [vmem:[%s236 + $0x51] sm:$0xff] %v211
      %245 = vst [vmem:[%s236 + $0x61] sm:$0xff] %v212
      %246 = vst [vmem:[%s236 + $0x69] sm:$0xff] %v213
      %247 = vst [vmem:[%s236 + $0x79] sm:$0xff] %v214
      %248 = vst [vmem:[%s236 + $0x81] sm:$0xff] %v215
      %249 = vst [vmem:[%s236 + $0x91] sm:$0xff] %v216
      %250 = vst [vmem:[%s236 + $0x99] sm:$0xff] %v217
      %251 = vst [vmem:[%s236 + $0xa9] sm:$0xff] %v218
      %252 = vst [vmem:[%s236 + $0xb1] sm:$0xff] %v219
      %253 = vst [vmem:[%s236 + $0xc1] sm:$0xff] %v220
      %254 = vst [vmem:[%s236 + $0xc9] sm:$0xff] %v221
      %255 = vst [vmem:[%s236 + $0xd9] sm:$0xff] %v222
      %256 = vst [vmem:[%s236 + $0xe1] sm:$0xff] %v223
      %257 = vst [vmem:[%s236 + $0xf1] sm:$0xff] %v224
      %258 = vst [vmem:[%s236 + $0xf9] sm:$0xff] %v225
      %259 = vst [vmem:[%s236 + $0x109] sm:$0xff] %v226
      %260 = vst [vmem:[%s236 + $0x111] sm:$0xff] %v227
      %261 = vst [vmem:[%s236 + $0x121] sm:$0xff] %v228
      %262 = vst [vmem:[%s236 + $0x129] sm:$0xff] %v229
      %263 = vst [vmem:[%s236 + $0x139] sm:$0xff] %v230
      %264 = vst [vmem:[%s236 + $0x141] sm:$0xff] %v231
      %265 = vst [vmem:[%s236 + $0x151] sm:$0xff] %v232
      %266 = vst [vmem:[%s236 + $0x159] sm:$0xff] %v233
      %267 = vst [vmem:[%s236 + $0x169] sm:$0xff] %v234
      %268 = vst [vmem:[%s236 + $0x171] sm:$0xff] %v235
      %269 = vst [vmem:[#allocation2 + $0x1] sm:$0xff] %v206
      %270 = vst [vmem:[#allocation2 + $0x9] sm:$0xff] %v207
      %s271 = scalar_lea.vmem [#allocation2], 408
      %272 = vst [vmem:[%s271 + $0x1] sm:$0xff] %v232
      %273 = vst [vmem:[%s271 + $0x9] sm:$0xff] %v233
      %v274 = vld [vmem:[#allocation2 + $0x2] sm:$0x1]
      %v275 = vld [vmem:[#allocation2 + $0x1a] sm:$0x1]
      %v276 = vld [vmem:[#allocation2 + $0x32] sm:$0x1]
      %v277 = vld [vmem:[#allocation2 + $0x4a] sm:$0x1]
      %v278 = vld [vmem:[#allocation2 + $0x62] sm:$0x1]
      %v279 = vld [vmem:[#allocation2 + $0x7a] sm:$0x1]
      %v280 = vld [vmem:[#allocation2 + $0x92] sm:$0x1]
      %v281 = vld [vmem:[#allocation2 + $0xaa] sm:$0x1]
      %v282 = vld [vmem:[#allocation2 + $0xc2] sm:$0x1]
      %v283 = vld [vmem:[#allocation2 + $0xda] sm:$0x1]
      %v284 = vld [vmem:[#allocation2 + $0xf2] sm:$0x1]
      %v285 = vld [vmem:[#allocation2 + $0x10a] sm:$0x1]
      %v286 = vld [vmem:[#allocation2 + $0x122] sm:$0x1]
      %v287 = vld [vmem:[#allocation2 + $0x13a] sm:$0x1]
      %v288 = vld [vmem:[#allocation2 + $0x152] sm:$0x1]
      %v289 = vld [vmem:[#allocation2 + $0x16a] sm:$0x1]
      %v290 = vld [vmem:[#allocation2 + $0x182] sm:$0x1]
      %v291 = vld [vmem:[#allocation2 + $0x19a] sm:$0x1]
      %292 = vst [vmem:[#allocation2] sm:$0x1] %v274
      %293 = vst [vmem:[#allocation2 + $0x18] sm:$0x1] %v275
      %294 = vst [vmem:[#allocation2 + $0x30] sm:$0x1] %v276
      %295 = vst [vmem:[#allocation2 + $0x48] sm:$0x1] %v277
      %296 = vst [vmem:[#allocation2 + $0x60] sm:$0x1] %v278
      %297 = vst [vmem:[#allocation2 + $0x78] sm:$0x1] %v279
      %298 = vst [vmem:[#allocation2 + $0x90] sm:$0x1] %v280
      %299 = vst [vmem:[#allocation2 + $0xa8] sm:$0x1] %v281
      %300 = vst [vmem:[#allocation2 + $0xc0] sm:$0x1] %v282
      %301 = vst [vmem:[#allocation2 + $0xd8] sm:$0x1] %v283
      %302 = vst [vmem:[#allocation2 + $0xf0] sm:$0x1] %v284
      %303 = vst [vmem:[#allocation2 + $0x108] sm:$0x1] %v285
      %304 = vst [vmem:[#allocation2 + $0x120] sm:$0x1] %v286
      %305 = vst [vmem:[#allocation2 + $0x138] sm:$0x1] %v287
      %306 = vst [vmem:[#allocation2 + $0x150] sm:$0x1] %v288
      %307 = vst [vmem:[#allocation2 + $0x168] sm:$0x1] %v289
      %308 = vst [vmem:[#allocation2 + $0x180] sm:$0x1] %v290
      %309 = vst [vmem:[#allocation2 + $0x198] sm:$0x1] %v291
      %v310 = vld [vmem:[#allocation2 + $0xf] sm:$0x1]
      %v311 = vld [vmem:[#allocation2 + $0x27] sm:$0x1]
      %v312 = vld [vmem:[#allocation2 + $0x3f] sm:$0x1]
      %v313 = vld [vmem:[#allocation2 + $0x57] sm:$0x1]
      %v314 = vld [vmem:[#allocation2 + $0x6f] sm:$0x1]
      %v315 = vld [vmem:[#allocation2 + $0x87] sm:$0x1]
      %v316 = vld [vmem:[#allocation2 + $0x9f] sm:$0x1]
      %v317 = vld [vmem:[#allocation2 + $0xb7] sm:$0x1]
      %v318 = vld [vmem:[#allocation2 + $0xcf] sm:$0x1]
      %v319 = vld [vmem:[#allocation2 + $0xe7] sm:$0x1]
      %v320 = vld [vmem:[#allocation2 + $0xff] sm:$0x1]
      %v321 = vld [vmem:[#allocation2 + $0x117] sm:$0x1]
      %v322 = vld [vmem:[#allocation2 + $0x12f] sm:$0x1]
      %v323 = vld [vmem:[#allocation2 + $0x147] sm:$0x1]
      %v324 = vld [vmem:[#allocation2 + $0x15f] sm:$0x1]
      %v325 = vld [vmem:[#allocation2 + $0x177] sm:$0x1]
      %v326 = vld [vmem:[#allocation2 + $0x18f] sm:$0x1]
      %v327 = vld [vmem:[#allocation2 + $0x1a7] sm:$0x1]
      %328 = vst [vmem:[#allocation2 + $0x11] sm:$0x1] %v310
      %329 = vst [vmem:[#allocation2 + $0x29] sm:$0x1] %v311
      %330 = vst [vmem:[#allocation2 + $0x41] sm:$0x1] %v312
      %331 = vst [vmem:[#allocation2 + $0x59] sm:$0x1] %v313
      %332 = vst [vmem:[#allocation2 + $0x71] sm:$0x1] %v314
      %333 = vst [vmem:[#allocation2 + $0x89] sm:$0x1] %v315
      %334 = vst [vmem:[#allocation2 + $0xa1] sm:$0x1] %v316
      %335 = vst [vmem:[#allocation2 + $0xb9] sm:$0x1] %v317
      %336 = vst [vmem:[#allocation2 + $0xd1] sm:$0x1] %v318
      %337 = vst [vmem:[#allocation2 + $0xe9] sm:$0x1] %v319
      %338 = vst [vmem:[#allocation2 + $0x101] sm:$0x1] %v320
      %339 = vst [vmem:[#allocation2 + $0x119] sm:$0x1] %v321
      %340 = vst [vmem:[#allocation2 + $0x131] sm:$0x1] %v322
      %341 = vst [vmem:[#allocation2 + $0x149] sm:$0x1] %v323
      %342 = vst [vmem:[#allocation2 + $0x161] sm:$0x1] %v324
      %343 = vst [vmem:[#allocation2 + $0x179] sm:$0x1] %v325
      %344 = vst [vmem:[#allocation2 + $0x191] sm:$0x1] %v326
      %345 = vst [vmem:[#allocation2 + $0x1a9] sm:$0x1] %v327
      %346 = vst [vmem:[#allocation2 + $0x12] sm:$0x3f] 0.0
      %347 = vst [vmem:[#allocation2 + $0x2a] sm:$0x3f] 0.0
      %348 = vst [vmem:[#allocation2 + $0x42] sm:$0x3f] 0.0
      %349 = vst [vmem:[#allocation2 + $0x5a] sm:$0x3f] 0.0
      %350 = vst [vmem:[#allocation2 + $0x72] sm:$0x3f] 0.0
      %351 = vst [vmem:[#allocation2 + $0x8a] sm:$0x3f] 0.0
      %352 = vst [vmem:[#allocation2 + $0xa2] sm:$0x3f] 0.0
      %353 = vst [vmem:[#allocation2 + $0xba] sm:$0x3f] 0.0
      %354 = vst [vmem:[#allocation2 + $0xd2] sm:$0x3f] 0.0
      %355 = vst [vmem:[#allocation2 + $0xea] sm:$0x3f] 0.0
      %356 = vst [vmem:[#allocation2 + $0x102] sm:$0x3f] 0.0
      %357 = vst [vmem:[#allocation2 + $0x11a] sm:$0x3f] 0.0
      %358 = vst [vmem:[#allocation2 + $0x132] sm:$0x3f] 0.0
      %359 = vst [vmem:[#allocation2 + $0x14a] sm:$0x3f] 0.0
      %360 = vst [vmem:[#allocation2 + $0x162] sm:$0x3f] 0.0
      %361 = vst [vmem:[#allocation2 + $0x17a] sm:$0x3f] 0.0
      %362 = vst [vmem:[#allocation2 + $0x192] sm:$0x3f] 0.0
      %363 = vst [vmem:[#allocation2 + $0x1aa] sm:$0x3f] 0.0
      %v364 = vld [vmem:[#allocation2] sm:$0xff]
      %v365 = vld [vmem:[#allocation2 + $0x8] sm:$0xff]
      %v366 = vld [vmem:[#allocation2 + $0x10] sm:$0xff]
      %v367 = vld [vmem:[#allocation2 + $0x18] sm:$0xff]
      %v368 = vld [vmem:[#allocation2 + $0x20] sm:$0xff]
      %v369 = vld [vmem:[#allocation2 + $0x28] sm:$0xff]
      %v370 = vld [vmem:[#allocation2 + $0x30] sm:$0xff]
      %v371 = vld [vmem:[#allocation2 + $0x38] sm:$0xff]
      %v372 = vld [vmem:[#allocation2 + $0x40] sm:$0xff]
      %v373 = vld [vmem:[#allocation2 + $0x48] sm:$0xff]
      %v374 = vld [vmem:[#allocation2 + $0x50] sm:$0xff]
      %v375 = vld [vmem:[#allocation2 + $0x58] sm:$0xff]
      %v376 = vld [vmem:[#allocation2 + $0x60] sm:$0xff]
      %v377 = vld [vmem:[#allocation2 + $0x68] sm:$0xff]
      %v378 = vld [vmem:[#allocation2 + $0x70] sm:$0xff]
      %v379 = vld [vmem:[#allocation2 + $0x78] sm:$0xff]
      %v380 = vld [vmem:[#allocation2 + $0x80] sm:$0xff]
      %v381 = vld [vmem:[#allocation2 + $0x88] sm:$0xff]
      %v382 = vld [vmem:[#allocation2 + $0x90] sm:$0xff]
      %v383 = vld [vmem:[#allocation2 + $0x98] sm:$0xff]
      %v384 = vld [vmem:[#allocation2 + $0xa0] sm:$0xff]
      %v385 = vld [vmem:[#allocation2 + $0xa8] sm:$0xff]
      %v386 = vld [vmem:[#allocation2 + $0xb0] sm:$0xff]
      %v387 = vld [vmem:[#allocation2 + $0xb8] sm:$0xff]
      %v388 = vld [vmem:[#allocation2 + $0xc0] sm:$0xff]
      %v389 = vld [vmem:[#allocation2 + $0xc8] sm:$0xff]
      %v390 = vld [vmem:[#allocation2 + $0xd0] sm:$0xff]
      %v391 = vld [vmem:[#allocation2 + $0xd8] sm:$0xff]
      %v392 = vld [vmem:[#allocation2 + $0xe0] sm:$0xff]
      %v393 = vld [vmem:[#allocation2 + $0xe8] sm:$0xff]
      %v394 = vld [vmem:[#allocation2 + $0xf0] sm:$0xff]
      %v395 = vld [vmem:[#allocation2 + $0xf8] sm:$0xff]
      %v396 = vld [vmem:[#allocation2 + $0x100] sm:$0xff]
      %v397 = vld [vmem:[#allocation2 + $0x108] sm:$0xff]
      %v398 = vld [vmem:[#allocation2 + $0x110] sm:$0xff]
      %v399 = vld [vmem:[#allocation2 + $0x118] sm:$0xff]
      %v400 = vld [vmem:[#allocation2 + $0x120] sm:$0xff]
      %v401 = vld [vmem:[#allocation2 + $0x128] sm:$0xff]
      %v402 = vld [vmem:[#allocation2 + $0x130] sm:$0xff]
      %v403 = vld [vmem:[#allocation2 + $0x138] sm:$0xff]
      %v404 = vld [vmem:[#allocation2 + $0x140] sm:$0xff]
      %v405 = vld [vmem:[#allocation2 + $0x148] sm:$0xff]
      %v406 = vld [vmem:[#allocation2 + $0x150] sm:$0xff]
      %v407 = vld [vmem:[#allocation2 + $0x158] sm:$0xff]
      %v408 = vld [vmem:[#allocation2 + $0x160] sm:$0xff]
      %v409 = vld [vmem:[#allocation2 + $0x168] sm:$0xff]
      %v410 = vld [vmem:[#allocation2 + $0x170] sm:$0xff]
      %v411 = vld [vmem:[#allocation2 + $0x178] sm:$0xff]
      %v412 = vld [vmem:[%s236] sm:$0xff]
      %v413 = vld [vmem:[%s236 + $0x8] sm:$0xff]
      %v414 = vld [vmem:[%s236 + $0x10] sm:$0xff]
      %v415 = vld [vmem:[%s236 + $0x18] sm:$0xff]
      %v416 = vld [vmem:[%s236 + $0x20] sm:$0xff]
      %v417 = vld [vmem:[%s236 + $0x28] sm:$0xff]
      %v418 = vld [vmem:[%s236 + $0x30] sm:$0xff]
      %v419 = vld [vmem:[%s236 + $0x38] sm:$0xff]
      %v420 = vld [vmem:[%s236 + $0x40] sm:$0xff]
      %v421 = vld [vmem:[%s236 + $0x48] sm:$0xff]
      %v422 = vld [vmem:[%s236 + $0x50] sm:$0xff]
      %v423 = vld [vmem:[%s236 + $0x58] sm:$0xff]
      %v424 = vld [vmem:[%s236 + $0x60] sm:$0xff]
      %v425 = vld [vmem:[%s236 + $0x68] sm:$0xff]
      %v426 = vld [vmem:[%s236 + $0x70] sm:$0xff]
      %v427 = vld [vmem:[%s236 + $0x78] sm:$0xff]
      %v428 = vld [vmem:[%s236 + $0x80] sm:$0xff]
      %v429 = vld [vmem:[%s236 + $0x88] sm:$0xff]
      %v430 = vld [vmem:[%s236 + $0x90] sm:$0xff]
      %v431 = vld [vmem:[%s236 + $0x98] sm:$0xff]
      %v432 = vld [vmem:[%s236 + $0xa0] sm:$0xff]
      %v433 = vld [vmem:[%s236 + $0xa8] sm:$0xff]
      %v434 = vld [vmem:[%s236 + $0xb0] sm:$0xff]
      %v435 = vld [vmem:[%s236 + $0xb8] sm:$0xff]
      %v436 = vld [vmem:[%s236 + $0xc0] sm:$0xff]
      %v437 = vld [vmem:[%s236 + $0xc8] sm:$0xff]
      %v438 = vld [vmem:[%s236 + $0xd0] sm:$0xff]
      %v439 = vld [vmem:[%s236 + $0xd8] sm:$0xff]
      %v440 = vld [vmem:[%s236 + $0xe0] sm:$0xff]
      %v441 = vld [vmem:[%s236 + $0xe8] sm:$0xff]
      %v442 = vld [vmem:[%s236 + $0xf0] sm:$0xff]
      %v443 = vld [vmem:[%s236 + $0xf8] sm:$0xff]
      %v444 = vld [vmem:[%s236 + $0x100] sm:$0xff]
      %v445 = vld [vmem:[%s236 + $0x108] sm:$0xff]
      %v446 = vld [vmem:[%s236 + $0x110] sm:$0xff]
      %v447 = vld [vmem:[%s236 + $0x118] sm:$0xff]
      %v448 = vld [vmem:[%s236 + $0x120] sm:$0xff]
      %v449 = vld [vmem:[%s236 + $0x128] sm:$0xff]
      %v450 = vld [vmem:[%s236 + $0x130] sm:$0xff]
      %v451 = vld [vmem:[%s236 + $0x138] sm:$0xff]
      %v452 = vld [vmem:[%s236 + $0x140] sm:$0xff]
      %v453 = vld [vmem:[%s236 + $0x148] sm:$0xff]
      %v454 = vld [vmem:[%s236 + $0x150] sm:$0xff]
      %v455 = vld [vmem:[%s236 + $0x158] sm:$0xff]
      %v456 = vld [vmem:[%s236 + $0x160] sm:$0xff]
      %v457 = vld [vmem:[%s236 + $0x168] sm:$0xff]
      %v458 = vld [vmem:[%s236 + $0x170] sm:$0xff]
      %v459 = vld [vmem:[%s236 + $0x178] sm:$0xff]
      %s460 = scalar_lea.vmem [#allocation2], 48
      %v461 = vld [vmem:[%s460] sm:$0xff]
      %v462 = vld [vmem:[%s460 + $0x8] sm:$0xff]
      %v463 = vld [vmem:[%s460 + $0x10] sm:$0xff]
      %v464 = vld [vmem:[%s460 + $0x18] sm:$0xff]
      %v465 = vld [vmem:[%s460 + $0x20] sm:$0xff]
      %v466 = vld [vmem:[%s460 + $0x28] sm:$0xff]
      %v467 = vld [vmem:[%s460 + $0x30] sm:$0xff]
      %v468 = vld [vmem:[%s460 + $0x38] sm:$0xff]
      %v469 = vld [vmem:[%s460 + $0x40] sm:$0xff]
      %v470 = vld [vmem:[%s460 + $0x48] sm:$0xff]
      %v471 = vld [vmem:[%s460 + $0x50] sm:$0xff]
      %v472 = vld [vmem:[%s460 + $0x58] sm:$0xff]
      %v473 = vld [vmem:[%s460 + $0x60] sm:$0xff]
      %v474 = vld [vmem:[%s460 + $0x68] sm:$0xff]
      %v475 = vld [vmem:[%s460 + $0x70] sm:$0xff]
      %v476 = vld [vmem:[%s460 + $0x78] sm:$0xff]
      %v477 = vld [vmem:[%s460 + $0x80] sm:$0xff]
      %v478 = vld [vmem:[%s460 + $0x88] sm:$0xff]
      %v479 = vld [vmem:[%s460 + $0x90] sm:$0xff]
      %v480 = vld [vmem:[%s460 + $0x98] sm:$0xff]
      %v481 = vld [vmem:[%s460 + $0xa0] sm:$0xff]
      %v482 = vld [vmem:[%s460 + $0xa8] sm:$0xff]
      %v483 = vld [vmem:[%s460 + $0xb0] sm:$0xff]
      %v484 = vld [vmem:[%s460 + $0xb8] sm:$0xff]
      %v485 = vld [vmem:[%s460 + $0xc0] sm:$0xff]
      %v486 = vld [vmem:[%s460 + $0xc8] sm:$0xff]
      %v487 = vld [vmem:[%s460 + $0xd0] sm:$0xff]
      %v488 = vld [vmem:[%s460 + $0xd8] sm:$0xff]
      %v489 = vld [vmem:[%s460 + $0xe0] sm:$0xff]
      %v490 = vld [vmem:[%s460 + $0xe8] sm:$0xff]
      %v491 = vld [vmem:[%s460 + $0xf0] sm:$0xff]
      %v492 = vld [vmem:[%s460 + $0xf8] sm:$0xff]
      %v493 = vld [vmem:[%s460 + $0x100] sm:$0xff]
      %v494 = vld [vmem:[%s460 + $0x108] sm:$0xff]
      %v495 = vld [vmem:[%s460 + $0x110] sm:$0xff]
      %v496 = vld [vmem:[%s460 + $0x118] sm:$0xff]
      %v497 = vld [vmem:[%s460 + $0x120] sm:$0xff]
      %v498 = vld [vmem:[%s460 + $0x128] sm:$0xff]
      %v499 = vld [vmem:[%s460 + $0x130] sm:$0xff]
      %v500 = vld [vmem:[%s460 + $0x138] sm:$0xff]
      %v501 = vld [vmem:[%s460 + $0x140] sm:$0xff]
      %v502 = vld [vmem:[%s460 + $0x148] sm:$0xff]
      %v503 = vld [vmem:[%s460 + $0x150] sm:$0xff]
      %v504 = vld [vmem:[%s460 + $0x158] sm:$0xff]
      %v505 = vld [vmem:[%s460 + $0x160] sm:$0xff]
      %v506 = vld [vmem:[%s460 + $0x168] sm:$0xff]
      %v507 = vld [vmem:[%s460 + $0x170] sm:$0xff]
      %v508 = vld [vmem:[%s460 + $0x178] sm:$0xff]
      %v509 = vld [vmem:[%s1] sm:$0xff]
      %v510 = vld [vmem:[%s1 + $0x8] sm:$0xff]
      %v511 = vld [vmem:[%s1 + $0x10] sm:$0xff]
      %v512 = vld [vmem:[%s1 + $0x18] sm:$0xff]
      %v513 = vld [vmem:[%s1 + $0x20] sm:$0xff]
      %v514 = vld [vmem:[%s1 + $0x28] sm:$0xff]
      %v515 = vld [vmem:[%s1 + $0x30] sm:$0xff]
      %v516 = vld [vmem:[%s1 + $0x38] sm:$0xff]
      %v517 = vld [vmem:[%s1 + $0x40] sm:$0xff]
      %v518 = vld [vmem:[%s1 + $0x48] sm:$0xff]
      %v519 = vld [vmem:[%s1 + $0x50] sm:$0xff]
      %v520 = vld [vmem:[%s1 + $0x58] sm:$0xff]
      %v521 = vld [vmem:[%s1 + $0x60] sm:$0xff]
      %v522 = vld [vmem:[%s1 + $0x68] sm:$0xff]
      %v523 = vld [vmem:[%s1 + $0x70] sm:$0xff]
      %v524 = vld [vmem:[%s1 + $0x78] sm:$0xff]
      %v525 = vld [vmem:[%s1 + $0x80] sm:$0xff]
      %v526 = vld [vmem:[%s1 + $0x88] sm:$0xff]
      %v527 = vld [vmem:[%s1 + $0x90] sm:$0xff]
      %v528 = vld [vmem:[%s1 + $0x98] sm:$0xff]
      %v529 = vld [vmem:[%s1 + $0xa0] sm:$0xff]
      %v530 = vld [vmem:[%s1 + $0xa8] sm:$0xff]
      %v531 = vld [vmem:[%s1 + $0xb0] sm:$0xff]
      %v532 = vld [vmem:[%s1 + $0xb8] sm:$0xff]
      %v533 = vld [vmem:[%s1 + $0xc0] sm:$0xff]
      %v534 = vld [vmem:[%s1 + $0xc8] sm:$0xff]
      %v535 = vld [vmem:[%s1 + $0xd0] sm:$0xff]
      %v536 = vld [vmem:[%s1 + $0xd8] sm:$0xff]
      %v537 = vld [vmem:[%s1 + $0xe0] sm:$0xff]
      %v538 = vld [vmem:[%s1 + $0xe8] sm:$0xff]
      %v539 = vld [vmem:[%s1 + $0xf0] sm:$0xff]
      %v540 = vld [vmem:[%s1 + $0xf8] sm:$0xff]
      %v541 = vld [vmem:[%s1 + $0x100] sm:$0xff]
      %v542 = vld [vmem:[%s1 + $0x108] sm:$0xff]
      %v543 = vld [vmem:[%s1 + $0x110] sm:$0xff]
      %v544 = vld [vmem:[%s1 + $0x118] sm:$0xff]
      %v545 = vld [vmem:[%s1 + $0x120] sm:$0xff]
      %v546 = vld [vmem:[%s1 + $0x128] sm:$0xff]
      %v547 = vld [vmem:[%s1 + $0x130] sm:$0xff]
      %v548 = vld [vmem:[%s1 + $0x138] sm:$0xff]
      %v549 = vld [vmem:[%s1 + $0x140] sm:$0xff]
      %v550 = vld [vmem:[%s1 + $0x148] sm:$0xff]
      %v551 = vld [vmem:[%s1 + $0x150] sm:$0xff]
      %v552 = vld [vmem:[%s1 + $0x158] sm:$0xff]
      %v553 = vld [vmem:[%s1 + $0x160] sm:$0xff]
      %v554 = vld [vmem:[%s1 + $0x168] sm:$0xff]
      %v555 = vld [vmem:[%s1 + $0x170] sm:$0xff]
      %v556 = vld [vmem:[%s1 + $0x178] sm:$0xff]
      %557 = vmatpush.msra.mxu0 %v524
      %558 = vmatpush.msra.mxu0 %v523
      %559 = vmatpush.msra.mxu0 %v522
      %560 = vmatpush.msra.mxu0 %v521
      %561 = vmatpush.msra.mxu0 %v520
      %562 = vmatpush.msra.mxu0 %v519
      %563 = vmatpush.msra.mxu0 %v518
      %564 = vmatpush.msra.mxu0 %v517
      %565 = vmatpush.msra.mxu0 %v516
      %566 = vmatpush.msra.mxu0 %v515
      %567 = vmatpush.msra.mxu0 %v514
      %568 = vmatpush.msra.mxu0 %v513
      %569 = vmatpush.msra.mxu0 %v512
      %570 = vmatpush.msra.mxu0 %v511
      %571 = vmatpush.msra.mxu0 %v510
      %572 = vmatpush.msra.mxu0 %v509
      %573 = vmatmul.f32.gmra.mxu0 %v364
      %v574 = vpop.f32.mrf.mxu0
      %v575 = vadd.f32 0.0, %v574
      %576 = vmatmul.f32.gmra.mxu0 %v365
      %v577 = vpop.f32.mrf.mxu0
      %v578 = vadd.f32 0.0, %v577
      %579 = vmatmul.f32.gmra.mxu0 %v366
      %v580 = vpop.f32.mrf.mxu0
      %581 = vmatmul.f32.gmra.mxu0 %v367
      %v582 = vpop.f32.mrf.mxu0
      %v583 = vadd.f32 0.0, %v582
      %584 = vmatmul.f32.gmra.mxu0 %v368
      %v585 = vpop.f32.mrf.mxu0
      %v586 = vadd.f32 0.0, %v585
      %587 = vmatmul.f32.gmra.mxu0 %v369
      %v588 = vpop.f32.mrf.mxu0
      %589 = vmatmul.f32.gmra.mxu0 %v370
      %v590 = vpop.f32.mrf.mxu0
      %v591 = vadd.f32 0.0, %v590
      %592 = vmatmul.f32.gmra.mxu0 %v371
      %v593 = vpop.f32.mrf.mxu0
      %v594 = vadd.f32 0.0, %v593
      %595 = vmatmul.f32.gmra.mxu0 %v372
      %v596 = vpop.f32.mrf.mxu0
      %597 = vmatmul.f32.gmra.mxu0 %v373
      %v598 = vpop.f32.mrf.mxu0
      %v599 = vadd.f32 0.0, %v598
      %600 = vmatmul.f32.gmra.mxu0 %v374
      %v601 = vpop.f32.mrf.mxu0
      %v602 = vadd.f32 0.0, %v601
      %603 = vmatmul.f32.gmra.mxu0 %v375
      %v604 = vpop.f32.mrf.mxu0
      %605 = vmatmul.f32.gmra.mxu0 %v376
      %v606 = vpop.f32.mrf.mxu0
      %v607 = vadd.f32 0.0, %v606
      %608 = vmatmul.f32.gmra.mxu0 %v377
      %v609 = vpop.f32.mrf.mxu0
      %v610 = vadd.f32 0.0, %v609
      %611 = vmatmul.f32.gmra.mxu0 %v378
      %v612 = vpop.f32.mrf.mxu0
      %613 = vmatmul.f32.gmra.mxu0 %v379
      %v614 = vpop.f32.mrf.mxu0
      %v615 = vadd.f32 0.0, %v614
      %616 = vmatmul.f32.gmra.mxu0 %v380
      %v617 = vpop.f32.mrf.mxu0
      %v618 = vadd.f32 0.0, %v617
      %619 = vmatmul.f32.gmra.mxu0 %v381
      %v620 = vpop.f32.mrf.mxu0
      %621 = vmatmul.f32.gmra.mxu0 %v382
      %v622 = vpop.f32.mrf.mxu0
      %v623 = vadd.f32 0.0, %v622
      %624 = vmatmul.f32.gmra.mxu0 %v383
      %v625 = vpop.f32.mrf.mxu0
      %v626 = vadd.f32 0.0, %v625
      %627 = vmatmul.f32.gmra.mxu0 %v384
      %v628 = vpop.f32.mrf.mxu0
      %629 = vmatmul.f32.gmra.mxu0 %v385
      %v630 = vpop.f32.mrf.mxu0
      %v631 = vadd.f32 0.0, %v630
      %632 = vmatmul.f32.gmra.mxu0 %v386
      %v633 = vpop.f32.mrf.mxu0
      %v634 = vadd.f32 0.0, %v633
      %635 = vmatmul.f32.gmra.mxu0 %v387
      %v636 = vpop.f32.mrf.mxu0
      %637 = vmatmul.f32.gmra.mxu0 %v388
      %v638 = vpop.f32.mrf.mxu0
      %v639 = vadd.f32 0.0, %v638
      %640 = vmatmul.f32.gmra.mxu0 %v389
      %v641 = vpop.f32.mrf.mxu0
      %v642 = vadd.f32 0.0, %v641
      %643 = vmatmul.f32.gmra.mxu0 %v390
      %v644 = vpop.f32.mrf.mxu0
      %645 = vmatmul.f32.gmra.mxu0 %v391
      %v646 = vpop.f32.mrf.mxu0
      %v647 = vadd.f32 0.0, %v646
      %648 = vmatmul.f32.gmra.mxu0 %v392
      %v649 = vpop.f32.mrf.mxu0
      %v650 = vadd.f32 0.0, %v649
      %651 = vmatmul.f32.gmra.mxu0 %v393
      %v652 = vpop.f32.mrf.mxu0
      %653 = vmatmul.f32.gmra.mxu0 %v394
      %v654 = vpop.f32.mrf.mxu0
      %v655 = vadd.f32 0.0, %v654
      %656 = vmatmul.f32.gmra.mxu0 %v395
      %v657 = vpop.f32.mrf.mxu0
      %v658 = vadd.f32 0.0, %v657
      %659 = vmatmul.f32.gmra.mxu0 %v396
      %v660 = vpop.f32.mrf.mxu0
      %661 = vmatmul.f32.gmra.mxu0 %v397
      %v662 = vpop.f32.mrf.mxu0
      %v663 = vadd.f32 0.0, %v662
      %664 = vmatmul.f32.gmra.mxu0 %v398
      %v665 = vpop.f32.mrf.mxu0
      %v666 = vadd.f32 0.0, %v665
      %667 = vmatmul.f32.gmra.mxu0 %v399
      %v668 = vpop.f32.mrf.mxu0
      %669 = vmatmul.f32.gmra.mxu0 %v400
      %v670 = vpop.f32.mrf.mxu0
      %v671 = vadd.f32 0.0, %v670
      %672 = vmatmul.f32.gmra.mxu0 %v401
      %v673 = vpop.f32.mrf.mxu0
      %v674 = vadd.f32 0.0, %v673
      %675 = vmatmul.f32.gmra.mxu0 %v402
      %v676 = vpop.f32.mrf.mxu0
      %677 = vmatmul.f32.gmra.mxu0 %v403
      %v678 = vpop.f32.mrf.mxu0
      %v679 = vadd.f32 0.0, %v678
      %680 = vmatmul.f32.gmra.mxu0 %v404
      %v681 = vpop.f32.mrf.mxu0
      %v682 = vadd.f32 0.0, %v681
      %683 = vmatmul.f32.gmra.mxu0 %v405
      %v684 = vpop.f32.mrf.mxu0
      %685 = vmatmul.f32.gmra.mxu0 %v406
      %v686 = vpop.f32.mrf.mxu0
      %v687 = vadd.f32 0.0, %v686
      %688 = vmatmul.f32.gmra.mxu0 %v407
      %v689 = vpop.f32.mrf.mxu0
      %v690 = vadd.f32 0.0, %v689
      %691 = vmatmul.f32.gmra.mxu0 %v408
      %v692 = vpop.f32.mrf.mxu0
      %693 = vmatmul.f32.gmra.mxu0 %v409
      %v694 = vpop.f32.mrf.mxu0
      %v695 = vadd.f32 0.0, %v694
      %696 = vmatmul.f32.gmra.mxu0 %v410
      %v697 = vpop.f32.mrf.mxu0
      %v698 = vadd.f32 0.0, %v697
      %699 = vmatmul.f32.gmra.mxu0 %v411
      %v700 = vpop.f32.mrf.mxu0
      %701 = vdwg.mxu0
      %702 = vmatpush.msra.mxu0 %v540
      %703 = vmatpush.msra.mxu0 %v539
      %704 = vmatpush.msra.mxu0 %v538
      %705 = vmatpush.msra.mxu0 %v537
      %706 = vmatpush.msra.mxu0 %v536
      %707 = vmatpush.msra.mxu0 %v535
      %708 = vmatpush.msra.mxu0 %v534
      %709 = vmatpush.msra.mxu0 %v533
      %710 = vmatpush.msra.mxu0 %v532
      %711 = vmatpush.msra.mxu0 %v531
      %712 = vmatpush.msra.mxu0 %v530
      %713 = vmatpush.msra.mxu0 %v529
      %714 = vmatpush.msra.mxu0 %v528
      %715 = vmatpush.msra.mxu0 %v527
      %716 = vmatpush.msra.mxu0 %v526
      %717 = vmatpush.msra.mxu0 %v525
      %718 = vmatmul.f32.gmra.mxu0 %v412
      %v719 = vpop.f32.mrf.mxu0
      %v720 = vadd.f32 %v575, %v719
      %721 = vmatmul.f32.gmra.mxu0 %v413
      %v722 = vpop.f32.mrf.mxu0
      %v723 = vadd.f32 %v578, %v722
      %724 = vmatmul.f32.gmra.mxu0 %v414
      %v725 = vpop.f32.mrf.mxu0
      %726 = vmatmul.f32.gmra.mxu0 %v415
      %v727 = vpop.f32.mrf.mxu0
      %v728 = vadd.f32 %v583, %v727
      %729 = vmatmul.f32.gmra.mxu0 %v416
      %v730 = vpop.f32.mrf.mxu0
      %v731 = vadd.f32 %v586, %v730
      %732 = vmatmul.f32.gmra.mxu0 %v417
      %v733 = vpop.f32.mrf.mxu0
      %734 = vmatmul.f32.gmra.mxu0 %v418
      %v735 = vpop.f32.mrf.mxu0
      %v736 = vadd.f32 %v591, %v735
      %737 = vmatmul.f32.gmra.mxu0 %v419
      %v738 = vpop.f32.mrf.mxu0
      %v739 = vadd.f32 %v594, %v738
      %740 = vmatmul.f32.gmra.mxu0 %v420
      %v741 = vpop.f32.mrf.mxu0
      %742 = vmatmul.f32.gmra.mxu0 %v421
      %v743 = vpop.f32.mrf.mxu0
      %v744 = vadd.f32 %v599, %v743
      %745 = vmatmul.f32.gmra.mxu0 %v422
      %v746 = vpop.f32.mrf.mxu0
      %v747 = vadd.f32 %v602, %v746
      %748 = vmatmul.f32.gmra.mxu0 %v423
      %v749 = vpop.f32.mrf.mxu0
      %750 = vmatmul.f32.gmra.mxu0 %v424
      %v751 = vpop.f32.mrf.mxu0
      %v752 = vadd.f32 %v607, %v751
      %753 = vmatmul.f32.gmra.mxu0 %v425
      %v754 = vpop.f32.mrf.mxu0
      %v755 = vadd.f32 %v610, %v754
      %756 = vmatmul.f32.gmra.mxu0 %v426
      %v757 = vpop.f32.mrf.mxu0
      %758 = vmatmul.f32.gmra.mxu0 %v427
      %v759 = vpop.f32.mrf.mxu0
      %v760 = vadd.f32 %v615, %v759
      %761 = vmatmul.f32.gmra.mxu0 %v428
      %v762 = vpop.f32.mrf.mxu0
      %v763 = vadd.f32 %v618, %v762
      %764 = vmatmul.f32.gmra.mxu0 %v429
      %v765 = vpop.f32.mrf.mxu0
      %766 = vmatmul.f32.gmra.mxu0 %v430
      %v767 = vpop.f32.mrf.mxu0
      %v768 = vadd.f32 %v623, %v767
      %769 = vmatmul.f32.gmra.mxu0 %v431
      %v770 = vpop.f32.mrf.mxu0
      %v771 = vadd.f32 %v626, %v770
      %772 = vmatmul.f32.gmra.mxu0 %v432
      %v773 = vpop.f32.mrf.mxu0
      %774 = vmatmul.f32.gmra.mxu0 %v433
      %v775 = vpop.f32.mrf.mxu0
      %v776 = vadd.f32 %v631, %v775
      %777 = vmatmul.f32.gmra.mxu0 %v434
      %v778 = vpop.f32.mrf.mxu0
      %v779 = vadd.f32 %v634, %v778
      %780 = vmatmul.f32.gmra.mxu0 %v435
      %v781 = vpop.f32.mrf.mxu0
      %782 = vmatmul.f32.gmra.mxu0 %v436
      %v783 = vpop.f32.mrf.mxu0
      %v784 = vadd.f32 %v639, %v783
      %785 = vmatmul.f32.gmra.mxu0 %v437
      %v786 = vpop.f32.mrf.mxu0
      %v787 = vadd.f32 %v642, %v786
      %788 = vmatmul.f32.gmra.mxu0 %v438
      %v789 = vpop.f32.mrf.mxu0
      %790 = vmatmul.f32.gmra.mxu0 %v439
      %v791 = vpop.f32.mrf.mxu0
      %v792 = vadd.f32 %v647, %v791
      %793 = vmatmul.f32.gmra.mxu0 %v440
      %v794 = vpop.f32.mrf.mxu0
      %v795 = vadd.f32 %v650, %v794
      %796 = vmatmul.f32.gmra.mxu0 %v441
      %v797 = vpop.f32.mrf.mxu0
      %798 = vmatmul.f32.gmra.mxu0 %v442
      %v799 = vpop.f32.mrf.mxu0
      %v800 = vadd.f32 %v655, %v799
      %801 = vmatmul.f32.gmra.mxu0 %v443
      %v802 = vpop.f32.mrf.mxu0
      %v803 = vadd.f32 %v658, %v802
      %804 = vmatmul.f32.gmra.mxu0 %v444
      %v805 = vpop.f32.mrf.mxu0
      %806 = vmatmul.f32.gmra.mxu0 %v445
      %v807 = vpop.f32.mrf.mxu0
      %v808 = vadd.f32 %v663, %v807
      %809 = vmatmul.f32.gmra.mxu0 %v446
      %v810 = vpop.f32.mrf.mxu0
      %v811 = vadd.f32 %v666, %v810
      %812 = vmatmul.f32.gmra.mxu0 %v447
      %v813 = vpop.f32.mrf.mxu0
      %814 = vmatmul.f32.gmra.mxu0 %v448
      %v815 = vpop.f32.mrf.mxu0
      %v816 = vadd.f32 %v671, %v815
      %817 = vmatmul.f32.gmra.mxu0 %v449
      %v818 = vpop.f32.mrf.mxu0
      %v819 = vadd.f32 %v674, %v818
      %820 = vmatmul.f32.gmra.mxu0 %v450
      %v821 = vpop.f32.mrf.mxu0
      %822 = vmatmul.f32.gmra.mxu0 %v451
      %v823 = vpop.f32.mrf.mxu0
      %v824 = vadd.f32 %v679, %v823
      %825 = vmatmul.f32.gmra.mxu0 %v452
      %v826 = vpop.f32.mrf.mxu0
      %v827 = vadd.f32 %v682, %v826
      %828 = vmatmul.f32.gmra.mxu0 %v453
      %v829 = vpop.f32.mrf.mxu0
      %830 = vmatmul.f32.gmra.mxu0 %v454
      %v831 = vpop.f32.mrf.mxu0
      %v832 = vadd.f32 %v687, %v831
      %833 = vmatmul.f32.gmra.mxu0 %v455
      %v834 = vpop.f32.mrf.mxu0
      %v835 = vadd.f32 %v690, %v834
      %836 = vmatmul.f32.gmra.mxu0 %v456
      %v837 = vpop.f32.mrf.mxu0
      %838 = vmatmul.f32.gmra.mxu0 %v457
      %v839 = vpop.f32.mrf.mxu0
      %v840 = vadd.f32 %v695, %v839
      %841 = vmatmul.f32.gmra.mxu0 %v458
      %v842 = vpop.f32.mrf.mxu0
      %v843 = vadd.f32 %v698, %v842
      %844 = vmatmul.f32.gmra.mxu0 %v459
      %v845 = vpop.f32.mrf.mxu0
      %846 = vdwg.mxu0
      %847 = vmatpush.msra.mxu0 %v556
      %848 = vmatpush.msra.mxu0 %v555
      %849 = vmatpush.msra.mxu0 %v554
      %850 = vmatpush.msra.mxu0 %v553
      %851 = vmatpush.msra.mxu0 %v552
      %852 = vmatpush.msra.mxu0 %v551
      %853 = vmatpush.msra.mxu0 %v550
      %854 = vmatpush.msra.mxu0 %v549
      %855 = vmatpush.msra.mxu0 %v548
      %856 = vmatpush.msra.mxu0 %v547
      %857 = vmatpush.msra.mxu0 %v546
      %858 = vmatpush.msra.mxu0 %v545
      %859 = vmatpush.msra.mxu0 %v544
      %860 = vmatpush.msra.mxu0 %v543
      %861 = vmatpush.msra.mxu0 %v542
      %862 = vmatpush.msra.mxu0 %v541
      %863 = vmatmul.f32.gmra.mxu0 %v461
      %v864 = vpop.f32.mrf.mxu0
      %v865 = vadd.f32 %v720, %v864
      %866 = vmatmul.f32.gmra.mxu0 %v462
      %v867 = vpop.f32.mrf.mxu0
      %v868 = vadd.f32 %v723, %v867
      %869 = vmatmul.f32.gmra.mxu0 %v463
      %v870 = vpop.f32.mrf.mxu0
      %871 = vmatmul.f32.gmra.mxu0 %v464
      %v872 = vpop.f32.mrf.mxu0
      %v873 = vadd.f32 %v728, %v872
      %874 = vmatmul.f32.gmra.mxu0 %v465
      %v875 = vpop.f32.mrf.mxu0
      %v876 = vadd.f32 %v731, %v875
      %877 = vmatmul.f32.gmra.mxu0 %v466
      %v878 = vpop.f32.mrf.mxu0
      %879 = vmatmul.f32.gmra.mxu0 %v467
      %v880 = vpop.f32.mrf.mxu0
      %v881 = vadd.f32 %v736, %v880
      %882 = vmatmul.f32.gmra.mxu0 %v468
      %v883 = vpop.f32.mrf.mxu0
      %v884 = vadd.f32 %v739, %v883
      %885 = vmatmul.f32.gmra.mxu0 %v469
      %v886 = vpop.f32.mrf.mxu0
      %887 = vmatmul.f32.gmra.mxu0 %v470
      %v888 = vpop.f32.mrf.mxu0
      %v889 = vadd.f32 %v744, %v888
      %890 = vmatmul.f32.gmra.mxu0 %v471
      %v891 = vpop.f32.mrf.mxu0
      %v892 = vadd.f32 %v747, %v891
      %893 = vmatmul.f32.gmra.mxu0 %v472
      %v894 = vpop.f32.mrf.mxu0
      %895 = vmatmul.f32.gmra.mxu0 %v473
      %v896 = vpop.f32.mrf.mxu0
      %v897 = vadd.f32 %v752, %v896
      %898 = vmatmul.f32.gmra.mxu0 %v474
      %v899 = vpop.f32.mrf.mxu0
      %v900 = vadd.f32 %v755, %v899
      %901 = vmatmul.f32.gmra.mxu0 %v475
      %v902 = vpop.f32.mrf.mxu0
      %903 = vmatmul.f32.gmra.mxu0 %v476
      %v904 = vpop.f32.mrf.mxu0
      %v905 = vadd.f32 %v760, %v904
      %906 = vmatmul.f32.gmra.mxu0 %v477
      %v907 = vpop.f32.mrf.mxu0
      %v908 = vadd.f32 %v763, %v907
      %909 = vmatmul.f32.gmra.mxu0 %v478
      %v910 = vpop.f32.mrf.mxu0
      %911 = vmatmul.f32.gmra.mxu0 %v479
      %v912 = vpop.f32.mrf.mxu0
      %v913 = vadd.f32 %v768, %v912
      %914 = vmatmul.f32.gmra.mxu0 %v480
      %v915 = vpop.f32.mrf.mxu0
      %v916 = vadd.f32 %v771, %v915
      %917 = vmatmul.f32.gmra.mxu0 %v481
      %v918 = vpop.f32.mrf.mxu0
      %919 = vmatmul.f32.gmra.mxu0 %v482
      %v920 = vpop.f32.mrf.mxu0
      %v921 = vadd.f32 %v776, %v920
      %922 = vmatmul.f32.gmra.mxu0 %v483
      %v923 = vpop.f32.mrf.mxu0
      %v924 = vadd.f32 %v779, %v923
      %925 = vmatmul.f32.gmra.mxu0 %v484
      %v926 = vpop.f32.mrf.mxu0
      %927 = vmatmul.f32.gmra.mxu0 %v485
      %v928 = vpop.f32.mrf.mxu0
      %v929 = vadd.f32 %v784, %v928
      %930 = vmatmul.f32.gmra.mxu0 %v486
      %v931 = vpop.f32.mrf.mxu0
      %v932 = vadd.f32 %v787, %v931
      %933 = vmatmul.f32.gmra.mxu0 %v487
      %v934 = vpop.f32.mrf.mxu0
      %935 = vmatmul.f32.gmra.mxu0 %v488
      %v936 = vpop.f32.mrf.mxu0
      %v937 = vadd.f32 %v792, %v936
      %938 = vmatmul.f32.gmra.mxu0 %v489
      %v939 = vpop.f32.mrf.mxu0
      %v940 = vadd.f32 %v795, %v939
      %941 = vmatmul.f32.gmra.mxu0 %v490
      %v942 = vpop.f32.mrf.mxu0
      %943 = vmatmul.f32.gmra.mxu0 %v491
      %v944 = vpop.f32.mrf.mxu0
      %v945 = vadd.f32 %v800, %v944
      %946 = vmatmul.f32.gmra.mxu0 %v492
      %v947 = vpop.f32.mrf.mxu0
      %v948 = vadd.f32 %v803, %v947
      %949 = vmatmul.f32.gmra.mxu0 %v493
      %v950 = vpop.f32.mrf.mxu0
      %951 = vmatmul.f32.gmra.mxu0 %v494
      %v952 = vpop.f32.mrf.mxu0
      %v953 = vadd.f32 %v808, %v952
      %954 = vmatmul.f32.gmra.mxu0 %v495
      %v955 = vpop.f32.mrf.mxu0
      %v956 = vadd.f32 %v811, %v955
      %957 = vmatmul.f32.gmra.mxu0 %v496
      %v958 = vpop.f32.mrf.mxu0
      %959 = vmatmul.f32.gmra.mxu0 %v497
      %v960 = vpop.f32.mrf.mxu0
      %v961 = vadd.f32 %v816, %v960
      %962 = vmatmul.f32.gmra.mxu0 %v498
      %v963 = vpop.f32.mrf.mxu0
      %v964 = vadd.f32 %v819, %v963
      %965 = vmatmul.f32.gmra.mxu0 %v499
      %v966 = vpop.f32.mrf.mxu0
      %967 = vmatmul.f32.gmra.mxu0 %v500
      %v968 = vpop.f32.mrf.mxu0
      %v969 = vadd.f32 %v824, %v968
      %970 = vmatmul.f32.gmra.mxu0 %v501
      %v971 = vpop.f32.mrf.mxu0
      %v972 = vadd.f32 %v827, %v971
      %973 = vmatmul.f32.gmra.mxu0 %v502
      %v974 = vpop.f32.mrf.mxu0
      %975 = vmatmul.f32.gmra.mxu0 %v503
      %v976 = vpop.f32.mrf.mxu0
      %v977 = vadd.f32 %v832, %v976
      %978 = vmatmul.f32.gmra.mxu0 %v504
      %v979 = vpop.f32.mrf.mxu0
      %v980 = vadd.f32 %v835, %v979
      %981 = vmatmul.f32.gmra.mxu0 %v505
      %v982 = vpop.f32.mrf.mxu0
      %983 = vmatmul.f32.gmra.mxu0 %v506
      %v984 = vpop.f32.mrf.mxu0
      %v985 = vadd.f32 %v840, %v984
      %986 = vmatmul.f32.gmra.mxu0 %v507
      %v987 = vpop.f32.mrf.mxu0
      %v988 = vadd.f32 %v843, %v987
      %989 = vmatmul.f32.gmra.mxu0 %v508
      %v990 = vpop.f32.mrf.mxu0
      %991 = vdwg.mxu0
      %s992 = scalar_lea.vmem %s1, 384
      %v993 = vld [vmem:[%s992] sm:$0xff]
      %v994 = vld [vmem:[%s992 + $0x8] sm:$0xff]
      %v995 = vld [vmem:[%s992 + $0x10] sm:$0xff]
      %v996 = vld [vmem:[%s992 + $0x18] sm:$0xff]
      %v997 = vld [vmem:[%s992 + $0x20] sm:$0xff]
      %v998 = vld [vmem:[%s992 + $0x28] sm:$0xff]
      %v999 = vld [vmem:[%s992 + $0x30] sm:$0xff]
      %v1000 = vld [vmem:[%s992 + $0x38] sm:$0xff]
      %v1001 = vld [vmem:[%s992 + $0x40] sm:$0xff]
      %v1002 = vld [vmem:[%s992 + $0x48] sm:$0xff]
      %v1003 = vld [vmem:[%s992 + $0x50] sm:$0xff]
      %v1004 = vld [vmem:[%s992 + $0x58] sm:$0xff]
      %v1005 = vld [vmem:[%s992 + $0x60] sm:$0xff]
      %v1006 = vld [vmem:[%s992 + $0x68] sm:$0xff]
      %v1007 = vld [vmem:[%s992 + $0x70] sm:$0xff]
      %v1008 = vld [vmem:[%s992 + $0x78] sm:$0xff]
      %v1009 = vld [vmem:[%s992 + $0x80] sm:$0xff]
      %v1010 = vld [vmem:[%s992 + $0x88] sm:$0xff]
      %v1011 = vld [vmem:[%s992 + $0x90] sm:$0xff]
      %v1012 = vld [vmem:[%s992 + $0x98] sm:$0xff]
      %v1013 = vld [vmem:[%s992 + $0xa0] sm:$0xff]
      %v1014 = vld [vmem:[%s992 + $0xa8] sm:$0xff]
      %v1015 = vld [vmem:[%s992 + $0xb0] sm:$0xff]
      %v1016 = vld [vmem:[%s992 + $0xb8] sm:$0xff]
      %v1017 = vld [vmem:[%s992 + $0xc0] sm:$0xff]
      %v1018 = vld [vmem:[%s992 + $0xc8] sm:$0xff]
      %v1019 = vld [vmem:[%s992 + $0xd0] sm:$0xff]
      %v1020 = vld [vmem:[%s992 + $0xd8] sm:$0xff]
      %v1021 = vld [vmem:[%s992 + $0xe0] sm:$0xff]
      %v1022 = vld [vmem:[%s992 + $0xe8] sm:$0xff]
      %v1023 = vld [vmem:[%s992 + $0xf0] sm:$0xff]
      %v1024 = vld [vmem:[%s992 + $0xf8] sm:$0xff]
      %v1025 = vld [vmem:[%s992 + $0x100] sm:$0xff]
      %v1026 = vld [vmem:[%s992 + $0x108] sm:$0xff]
      %v1027 = vld [vmem:[%s992 + $0x110] sm:$0xff]
      %v1028 = vld [vmem:[%s992 + $0x118] sm:$0xff]
      %v1029 = vld [vmem:[%s992 + $0x120] sm:$0xff]
      %v1030 = vld [vmem:[%s992 + $0x128] sm:$0xff]
      %v1031 = vld [vmem:[%s992 + $0x130] sm:$0xff]
      %v1032 = vld [vmem:[%s992 + $0x138] sm:$0xff]
      %v1033 = vld [vmem:[%s992 + $0x140] sm:$0xff]
      %v1034 = vld [vmem:[%s992 + $0x148] sm:$0xff]
      %v1035 = vld [vmem:[%s992 + $0x150] sm:$0xff]
      %v1036 = vld [vmem:[%s992 + $0x158] sm:$0xff]
      %v1037 = vld [vmem:[%s992 + $0x160] sm:$0xff]
      %v1038 = vld [vmem:[%s992 + $0x168] sm:$0xff]
      %v1039 = vld [vmem:[%s992 + $0x170] sm:$0xff]
      %v1040 = vld [vmem:[%s992 + $0x178] sm:$0xff]
      %1041 = vmatpush.msra.mxu0 %v1008
      %1042 = vmatpush.msra.mxu0 %v1007
      %1043 = vmatpush.msra.mxu0 %v1006
      %1044 = vmatpush.msra.mxu0 %v1005
      %1045 = vmatpush.msra.mxu0 %v1004
      %1046 = vmatpush.msra.mxu0 %v1003
      %1047 = vmatpush.msra.mxu0 %v1002
      %1048 = vmatpush.msra.mxu0 %v1001
      %1049 = vmatpush.msra.mxu0 %v1000
      %1050 = vmatpush.msra.mxu0 %v999
      %1051 = vmatpush.msra.mxu0 %v998
      %1052 = vmatpush.msra.mxu0 %v997
      %1053 = vmatpush.msra.mxu0 %v996
      %1054 = vmatpush.msra.mxu0 %v995
      %1055 = vmatpush.msra.mxu0 %v994
      %1056 = vmatpush.msra.mxu0 %v993
      %1057 = vmatmul.f32.gmra.mxu0 %v364
      %v1058 = vpop.f32.mrf.mxu0
      %v1059 = vadd.f32 0.0, %v1058
      %1060 = vmatmul.f32.gmra.mxu0 %v365
      %v1061 = vpop.f32.mrf.mxu0
      %v1062 = vadd.f32 0.0, %v1061
      %1063 = vmatmul.f32.gmra.mxu0 %v366
      %v1064 = vpop.f32.mrf.mxu0
      %v1065 = vadd.f32 0.0, %v1064
      %1066 = vmatmul.f32.gmra.mxu0 %v367
      %v1067 = vpop.f32.mrf.mxu0
      %v1068 = vadd.f32 0.0, %v1067
      %1069 = vmatmul.f32.gmra.mxu0 %v368
      %v1070 = vpop.f32.mrf.mxu0
      %v1071 = vadd.f32 0.0, %v1070
      %1072 = vmatmul.f32.gmra.mxu0 %v369
      %v1073 = vpop.f32.mrf.mxu0
      %v1074 = vadd.f32 0.0, %v1073
      %1075 = vmatmul.f32.gmra.mxu0 %v370
      %v1076 = vpop.f32.mrf.mxu0
      %v1077 = vadd.f32 0.0, %v1076
      %1078 = vmatmul.f32.gmra.mxu0 %v371
      %v1079 = vpop.f32.mrf.mxu0
      %v1080 = vadd.f32 0.0, %v1079
      %1081 = vmatmul.f32.gmra.mxu0 %v372
      %v1082 = vpop.f32.mrf.mxu0
      %v1083 = vadd.f32 0.0, %v1082
      %1084 = vmatmul.f32.gmra.mxu0 %v373
      %v1085 = vpop.f32.mrf.mxu0
      %v1086 = vadd.f32 0.0, %v1085
      %1087 = vmatmul.f32.gmra.mxu0 %v374
      %v1088 = vpop.f32.mrf.mxu0
      %v1089 = vadd.f32 0.0, %v1088
      %1090 = vmatmul.f32.gmra.mxu0 %v375
      %v1091 = vpop.f32.mrf.mxu0
      %v1092 = vadd.f32 0.0, %v1091
      %1093 = vmatmul.f32.gmra.mxu0 %v376
      %v1094 = vpop.f32.mrf.mxu0
      %v1095 = vadd.f32 0.0, %v1094
      %1096 = vmatmul.f32.gmra.mxu0 %v377
      %v1097 = vpop.f32.mrf.mxu0
      %v1098 = vadd.f32 0.0, %v1097
      %1099 = vmatmul.f32.gmra.mxu0 %v378
      %v1100 = vpop.f32.mrf.mxu0
      %v1101 = vadd.f32 0.0, %v1100
      %1102 = vmatmul.f32.gmra.mxu0 %v379
      %v1103 = vpop.f32.mrf.mxu0
      %v1104 = vadd.f32 0.0, %v1103
      %1105 = vmatmul.f32.gmra.mxu0 %v380
      %v1106 = vpop.f32.mrf.mxu0
      %v1107 = vadd.f32 0.0, %v1106
      %1108 = vmatmul.f32.gmra.mxu0 %v381
      %v1109 = vpop.f32.mrf.mxu0
      %v1110 = vadd.f32 0.0, %v1109
      %1111 = vmatmul.f32.gmra.mxu0 %v382
      %v1112 = vpop.f32.mrf.mxu0
      %v1113 = vadd.f32 0.0, %v1112
      %1114 = vmatmul.f32.gmra.mxu0 %v383
      %v1115 = vpop.f32.mrf.mxu0
      %v1116 = vadd.f32 0.0, %v1115
      %1117 = vmatmul.f32.gmra.mxu0 %v384
      %v1118 = vpop.f32.mrf.mxu0
      %v1119 = vadd.f32 0.0, %v1118
      %1120 = vmatmul.f32.gmra.mxu0 %v385
      %v1121 = vpop.f32.mrf.mxu0
      %v1122 = vadd.f32 0.0, %v1121
      %1123 = vmatmul.f32.gmra.mxu0 %v386
      %v1124 = vpop.f32.mrf.mxu0
      %v1125 = vadd.f32 0.0, %v1124
      %1126 = vmatmul.f32.gmra.mxu0 %v387
      %v1127 = vpop.f32.mrf.mxu0
      %v1128 = vadd.f32 0.0, %v1127
      %1129 = vmatmul.f32.gmra.mxu0 %v388
      %v1130 = vpop.f32.mrf.mxu0
      %v1131 = vadd.f32 0.0, %v1130
      %1132 = vmatmul.f32.gmra.mxu0 %v389
      %v1133 = vpop.f32.mrf.mxu0
      %v1134 = vadd.f32 0.0, %v1133
      %1135 = vmatmul.f32.gmra.mxu0 %v390
      %v1136 = vpop.f32.mrf.mxu0
      %v1137 = vadd.f32 0.0, %v1136
      %1138 = vmatmul.f32.gmra.mxu0 %v391
      %v1139 = vpop.f32.mrf.mxu0
      %v1140 = vadd.f32 0.0, %v1139
      %1141 = vmatmul.f32.gmra.mxu0 %v392
      %v1142 = vpop.f32.mrf.mxu0
      %v1143 = vadd.f32 0.0, %v1142
      %1144 = vmatmul.f32.gmra.mxu0 %v393
      %v1145 = vpop.f32.mrf.mxu0
      %v1146 = vadd.f32 0.0, %v1145
      %1147 = vmatmul.f32.gmra.mxu0 %v394
      %v1148 = vpop.f32.mrf.mxu0
      %v1149 = vadd.f32 0.0, %v1148
      %1150 = vmatmul.f32.gmra.mxu0 %v395
      %v1151 = vpop.f32.mrf.mxu0
      %v1152 = vadd.f32 0.0, %v1151
      %1153 = vmatmul.f32.gmra.mxu0 %v396
      %v1154 = vpop.f32.mrf.mxu0
      %v1155 = vadd.f32 0.0, %v1154
      %1156 = vmatmul.f32.gmra.mxu0 %v397
      %v1157 = vpop.f32.mrf.mxu0
      %v1158 = vadd.f32 0.0, %v1157
      %1159 = vmatmul.f32.gmra.mxu0 %v398
      %v1160 = vpop.f32.mrf.mxu0
      %v1161 = vadd.f32 0.0, %v1160
      %1162 = vmatmul.f32.gmra.mxu0 %v399
      %v1163 = vpop.f32.mrf.mxu0
      %v1164 = vadd.f32 0.0, %v1163
      %1165 = vmatmul.f32.gmra.mxu0 %v400
      %v1166 = vpop.f32.mrf.mxu0
      %v1167 = vadd.f32 0.0, %v1166
      %1168 = vmatmul.f32.gmra.mxu0 %v401
      %v1169 = vpop.f32.mrf.mxu0
      %v1170 = vadd.f32 0.0, %v1169
      %1171 = vmatmul.f32.gmra.mxu0 %v402
      %v1172 = vpop.f32.mrf.mxu0
      %v1173 = vadd.f32 0.0, %v1172
      %1174 = vmatmul.f32.gmra.mxu0 %v403
      %v1175 = vpop.f32.mrf.mxu0
      %v1176 = vadd.f32 0.0, %v1175
      %1177 = vmatmul.f32.gmra.mxu0 %v404
      %v1178 = vpop.f32.mrf.mxu0
      %v1179 = vadd.f32 0.0, %v1178
      %1180 = vmatmul.f32.gmra.mxu0 %v405
      %v1181 = vpop.f32.mrf.mxu0
      %v1182 = vadd.f32 0.0, %v1181
      %1183 = vmatmul.f32.gmra.mxu0 %v406
      %v1184 = vpop.f32.mrf.mxu0
      %v1185 = vadd.f32 0.0, %v1184
      %1186 = vmatmul.f32.gmra.mxu0 %v407
      %v1187 = vpop.f32.mrf.mxu0
      %v1188 = vadd.f32 0.0, %v1187
      %1189 = vmatmul.f32.gmra.mxu0 %v408
      %v1190 = vpop.f32.mrf.mxu0
      %v1191 = vadd.f32 0.0, %v1190
      %1192 = vmatmul.f32.gmra.mxu0 %v409
      %v1193 = vpop.f32.mrf.mxu0
      %v1194 = vadd.f32 0.0, %v1193
      %1195 = vmatmul.f32.gmra.mxu0 %v410
      %v1196 = vpop.f32.mrf.mxu0
      %v1197 = vadd.f32 0.0, %v1196
      %1198 = vmatmul.f32.gmra.mxu0 %v411
      %v1199 = vpop.f32.mrf.mxu0
      %v1200 = vadd.f32 0.0, %v1199
      %1201 = vdwg.mxu0
      %1202 = vmatpush.msra.mxu0 %v1024
      %1203 = vmatpush.msra.mxu0 %v1023
      %1204 = vmatpush.msra.mxu0 %v1022
      %1205 = vmatpush.msra.mxu0 %v1021
      %1206 = vmatpush.msra.mxu0 %v1020
      %1207 = vmatpush.msra.mxu0 %v1019
      %1208 = vmatpush.msra.mxu0 %v1018
      %1209 = vmatpush.msra.mxu0 %v1017
      %1210 = vmatpush.msra.mxu0 %v1016
      %1211 = vmatpush.msra.mxu0 %v1015
      %1212 = vmatpush.msra.mxu0 %v1014
      %1213 = vmatpush.msra.mxu0 %v1013
      %1214 = vmatpush.msra.mxu0 %v1012
      %1215 = vmatpush.msra.mxu0 %v1011
      %1216 = vmatpush.msra.mxu0 %v1010
      %1217 = vmatpush.msra.mxu0 %v1009
      %1218 = vmatmul.f32.gmra.mxu0 %v412
      %v1219 = vpop.f32.mrf.mxu0
      %v1220 = vadd.f32 %v1059, %v1219
      %1221 = vmatmul.f32.gmra.mxu0 %v413
      %v1222 = vpop.f32.mrf.mxu0
      %v1223 = vadd.f32 %v1062, %v1222
      %1224 = vmatmul.f32.gmra.mxu0 %v414
      %v1225 = vpop.f32.mrf.mxu0
      %v1226 = vadd.f32 %v1065, %v1225
      %1227 = vmatmul.f32.gmra.mxu0 %v415
      %v1228 = vpop.f32.mrf.mxu0
      %v1229 = vadd.f32 %v1068, %v1228
      %1230 = vmatmul.f32.gmra.mxu0 %v416
      %v1231 = vpop.f32.mrf.mxu0
      %v1232 = vadd.f32 %v1071, %v1231
      %1233 = vmatmul.f32.gmra.mxu0 %v417
      %v1234 = vpop.f32.mrf.mxu0
      %v1235 = vadd.f32 %v1074, %v1234
      %1236 = vmatmul.f32.gmra.mxu0 %v418
      %v1237 = vpop.f32.mrf.mxu0
      %v1238 = vadd.f32 %v1077, %v1237
      %1239 = vmatmul.f32.gmra.mxu0 %v419
      %v1240 = vpop.f32.mrf.mxu0
      %v1241 = vadd.f32 %v1080, %v1240
      %1242 = vmatmul.f32.gmra.mxu0 %v420
      %v1243 = vpop.f32.mrf.mxu0
      %v1244 = vadd.f32 %v1083, %v1243
      %1245 = vmatmul.f32.gmra.mxu0 %v421
      %v1246 = vpop.f32.mrf.mxu0
      %v1247 = vadd.f32 %v1086, %v1246
      %1248 = vmatmul.f32.gmra.mxu0 %v422
      %v1249 = vpop.f32.mrf.mxu0
      %v1250 = vadd.f32 %v1089, %v1249
      %1251 = vmatmul.f32.gmra.mxu0 %v423
      %v1252 = vpop.f32.mrf.mxu0
      %v1253 = vadd.f32 %v1092, %v1252
      %1254 = vmatmul.f32.gmra.mxu0 %v424
      %v1255 = vpop.f32.mrf.mxu0
      %v1256 = vadd.f32 %v1095, %v1255
      %1257 = vmatmul.f32.gmra.mxu0 %v425
      %v1258 = vpop.f32.mrf.mxu0
      %v1259 = vadd.f32 %v1098, %v1258
      %1260 = vmatmul.f32.gmra.mxu0 %v426
      %v1261 = vpop.f32.mrf.mxu0
      %v1262 = vadd.f32 %v1101, %v1261
      %1263 = vmatmul.f32.gmra.mxu0 %v427
      %v1264 = vpop.f32.mrf.mxu0
      %v1265 = vadd.f32 %v1104, %v1264
      %1266 = vmatmul.f32.gmra.mxu0 %v428
      %v1267 = vpop.f32.mrf.mxu0
      %v1268 = vadd.f32 %v1107, %v1267
      %1269 = vmatmul.f32.gmra.mxu0 %v429
      %v1270 = vpop.f32.mrf.mxu0
      %v1271 = vadd.f32 %v1110, %v1270
      %1272 = vmatmul.f32.gmra.mxu0 %v430
      %v1273 = vpop.f32.mrf.mxu0
      %v1274 = vadd.f32 %v1113, %v1273
      %1275 = vmatmul.f32.gmra.mxu0 %v431
      %v1276 = vpop.f32.mrf.mxu0
      %v1277 = vadd.f32 %v1116, %v1276
      %1278 = vmatmul.f32.gmra.mxu0 %v432
      %v1279 = vpop.f32.mrf.mxu0
      %v1280 = vadd.f32 %v1119, %v1279
      %1281 = vmatmul.f32.gmra.mxu0 %v433
      %v1282 = vpop.f32.mrf.mxu0
      %v1283 = vadd.f32 %v1122, %v1282
      %1284 = vmatmul.f32.gmra.mxu0 %v434
      %v1285 = vpop.f32.mrf.mxu0
      %v1286 = vadd.f32 %v1125, %v1285
      %1287 = vmatmul.f32.gmra.mxu0 %v435
      %v1288 = vpop.f32.mrf.mxu0
      %v1289 = vadd.f32 %v1128, %v1288
      %1290 = vmatmul.f32.gmra.mxu0 %v436
      %v1291 = vpop.f32.mrf.mxu0
      %v1292 = vadd.f32 %v1131, %v1291
      %1293 = vmatmul.f32.gmra.mxu0 %v437
      %v1294 = vpop.f32.mrf.mxu0
      %v1295 = vadd.f32 %v1134, %v1294
      %1296 = vmatmul.f32.gmra.mxu0 %v438
      %v1297 = vpop.f32.mrf.mxu0
      %v1298 = vadd.f32 %v1137, %v1297
      %1299 = vmatmul.f32.gmra.mxu0 %v439
      %v1300 = vpop.f32.mrf.mxu0
      %v1301 = vadd.f32 %v1140, %v1300
      %1302 = vmatmul.f32.gmra.mxu0 %v440
      %v1303 = vpop.f32.mrf.mxu0
      %v1304 = vadd.f32 %v1143, %v1303
      %1305 = vmatmul.f32.gmra.mxu0 %v441
      %v1306 = vpop.f32.mrf.mxu0
      %v1307 = vadd.f32 %v1146, %v1306
      %1308 = vmatmul.f32.gmra.mxu0 %v442
      %v1309 = vpop.f32.mrf.mxu0
      %v1310 = vadd.f32 %v1149, %v1309
      %1311 = vmatmul.f32.gmra.mxu0 %v443
      %v1312 = vpop.f32.mrf.mxu0
      %v1313 = vadd.f32 %v1152, %v1312
      %1314 = vmatmul.f32.gmra.mxu0 %v444
      %v1315 = vpop.f32.mrf.mxu0
      %v1316 = vadd.f32 %v1155, %v1315
      %1317 = vmatmul.f32.gmra.mxu0 %v445
      %v1318 = vpop.f32.mrf.mxu0
      %v1319 = vadd.f32 %v1158, %v1318
      %1320 = vmatmul.f32.gmra.mxu0 %v446
      %v1321 = vpop.f32.mrf.mxu0
      %v1322 = vadd.f32 %v1161, %v1321
      %1323 = vmatmul.f32.gmra.mxu0 %v447
      %v1324 = vpop.f32.mrf.mxu0
      %v1325 = vadd.f32 %v1164, %v1324
      %1326 = vmatmul.f32.gmra.mxu0 %v448
      %v1327 = vpop.f32.mrf.mxu0
      %v1328 = vadd.f32 %v1167, %v1327
      %1329 = vmatmul.f32.gmra.mxu0 %v449
      %v1330 = vpop.f32.mrf.mxu0
      %v1331 = vadd.f32 %v1170, %v1330
      %1332 = vmatmul.f32.gmra.mxu0 %v450
      %v1333 = vpop.f32.mrf.mxu0
      %v1334 = vadd.f32 %v1173, %v1333
      %1335 = vmatmul.f32.gmra.mxu0 %v451
      %v1336 = vpop.f32.mrf.mxu0
      %v1337 = vadd.f32 %v1176, %v1336
      %1338 = vmatmul.f32.gmra.mxu0 %v452
      %v1339 = vpop.f32.mrf.mxu0
      %v1340 = vadd.f32 %v1179, %v1339
      %1341 = vmatmul.f32.gmra.mxu0 %v453
      %v1342 = vpop.f32.mrf.mxu0
      %v1343 = vadd.f32 %v1182, %v1342
      %1344 = vmatmul.f32.gmra.mxu0 %v454
      %v1345 = vpop.f32.mrf.mxu0
      %v1346 = vadd.f32 %v1185, %v1345
      %1347 = vmatmul.f32.gmra.mxu0 %v455
      %v1348 = vpop.f32.mrf.mxu0
      %v1349 = vadd.f32 %v1188, %v1348
      %1350 = vmatmul.f32.gmra.mxu0 %v456
      %v1351 = vpop.f32.mrf.mxu0
      %v1352 = vadd.f32 %v1191, %v1351
      %1353 = vmatmul.f32.gmra.mxu0 %v457
      %v1354 = vpop.f32.mrf.mxu0
      %v1355 = vadd.f32 %v1194, %v1354
      %1356 = vmatmul.f32.gmra.mxu0 %v458
      %v1357 = vpop.f32.mrf.mxu0
      %v1358 = vadd.f32 %v1197, %v1357
      %1359 = vmatmul.f32.gmra.mxu0 %v459
      %v1360 = vpop.f32.mrf.mxu0
      %v1361 = vadd.f32 %v1200, %v1360
      %1362 = vdwg.mxu0
      %1363 = vmatpush.msra.mxu0 %v1040
      %1364 = vmatpush.msra.mxu0 %v1039
      %1365 = vmatpush.msra.mxu0 %v1038
      %1366 = vmatpush.msra.mxu0 %v1037
      %1367 = vmatpush.msra.mxu0 %v1036
      %1368 = vmatpush.msra.mxu0 %v1035
      %1369 = vmatpush.msra.mxu0 %v1034
      %1370 = vmatpush.msra.mxu0 %v1033
      %1371 = vmatpush.msra.mxu0 %v1032
      %1372 = vmatpush.msra.mxu0 %v1031
      %1373 = vmatpush.msra.mxu0 %v1030
      %1374 = vmatpush.msra.mxu0 %v1029
      %1375 = vmatpush.msra.mxu0 %v1028
      %1376 = vmatpush.msra.mxu0 %v1027
      %1377 = vmatpush.msra.mxu0 %v1026
      %1378 = vmatpush.msra.mxu0 %v1025
      %1379 = vmatmul.f32.gmra.mxu0 %v461
      %v1380 = vpop.f32.mrf.mxu0
      %v1381 = vadd.f32 %v1220, %v1380
      %1382 = vmatmul.f32.gmra.mxu0 %v462
      %v1383 = vpop.f32.mrf.mxu0
      %v1384 = vadd.f32 %v1223, %v1383
      %1385 = vmatmul.f32.gmra.mxu0 %v463
      %v1386 = vpop.f32.mrf.mxu0
      %v1387 = vadd.f32 %v1226, %v1386
      %1388 = vmatmul.f32.gmra.mxu0 %v464
      %v1389 = vpop.f32.mrf.mxu0
      %v1390 = vadd.f32 %v1229, %v1389
      %1391 = vmatmul.f32.gmra.mxu0 %v465
      %v1392 = vpop.f32.mrf.mxu0
      %v1393 = vadd.f32 %v1232, %v1392
      %1394 = vmatmul.f32.gmra.mxu0 %v466
      %v1395 = vpop.f32.mrf.mxu0
      %v1396 = vadd.f32 %v1235, %v1395
      %1397 = vmatmul.f32.gmra.mxu0 %v467
      %v1398 = vpop.f32.mrf.mxu0
      %v1399 = vadd.f32 %v1238, %v1398
      %1400 = vmatmul.f32.gmra.mxu0 %v468
      %v1401 = vpop.f32.mrf.mxu0
      %v1402 = vadd.f32 %v1241, %v1401
      %1403 = vmatmul.f32.gmra.mxu0 %v469
      %v1404 = vpop.f32.mrf.mxu0
      %v1405 = vadd.f32 %v1244, %v1404
      %1406 = vmatmul.f32.gmra.mxu0 %v470
      %v1407 = vpop.f32.mrf.mxu0
      %v1408 = vadd.f32 %v1247, %v1407
      %1409 = vmatmul.f32.gmra.mxu0 %v471
      %v1410 = vpop.f32.mrf.mxu0
      %v1411 = vadd.f32 %v1250, %v1410
      %1412 = vmatmul.f32.gmra.mxu0 %v472
      %v1413 = vpop.f32.mrf.mxu0
      %v1414 = vadd.f32 %v1253, %v1413
      %1415 = vmatmul.f32.gmra.mxu0 %v473
      %v1416 = vpop.f32.mrf.mxu0
      %v1417 = vadd.f32 %v1256, %v1416
      %1418 = vmatmul.f32.gmra.mxu0 %v474
      %v1419 = vpop.f32.mrf.mxu0
      %v1420 = vadd.f32 %v1259, %v1419
      %1421 = vmatmul.f32.gmra.mxu0 %v475
      %v1422 = vpop.f32.mrf.mxu0
      %v1423 = vadd.f32 %v1262, %v1422
      %1424 = vmatmul.f32.gmra.mxu0 %v476
      %v1425 = vpop.f32.mrf.mxu0
      %v1426 = vadd.f32 %v1265, %v1425
      %1427 = vmatmul.f32.gmra.mxu0 %v477
      %v1428 = vpop.f32.mrf.mxu0
      %v1429 = vadd.f32 %v1268, %v1428
      %1430 = vmatmul.f32.gmra.mxu0 %v478
      %v1431 = vpop.f32.mrf.mxu0
      %v1432 = vadd.f32 %v1271, %v1431
      %1433 = vmatmul.f32.gmra.mxu0 %v479
      %v1434 = vpop.f32.mrf.mxu0
      %v1435 = vadd.f32 %v1274, %v1434
      %1436 = vmatmul.f32.gmra.mxu0 %v480
      %v1437 = vpop.f32.mrf.mxu0
      %v1438 = vadd.f32 %v1277, %v1437
      %1439 = vmatmul.f32.gmra.mxu0 %v481
      %v1440 = vpop.f32.mrf.mxu0
      %v1441 = vadd.f32 %v1280, %v1440
      %1442 = vmatmul.f32.gmra.mxu0 %v482
      %v1443 = vpop.f32.mrf.mxu0
      %v1444 = vadd.f32 %v1283, %v1443
      %1445 = vmatmul.f32.gmra.mxu0 %v483
      %v1446 = vpop.f32.mrf.mxu0
      %v1447 = vadd.f32 %v1286, %v1446
      %1448 = vmatmul.f32.gmra.mxu0 %v484
      %v1449 = vpop.f32.mrf.mxu0
      %v1450 = vadd.f32 %v1289, %v1449
      %1451 = vmatmul.f32.gmra.mxu0 %v485
      %v1452 = vpop.f32.mrf.mxu0
      %v1453 = vadd.f32 %v1292, %v1452
      %1454 = vmatmul.f32.gmra.mxu0 %v486
      %v1455 = vpop.f32.mrf.mxu0
      %v1456 = vadd.f32 %v1295, %v1455
      %1457 = vmatmul.f32.gmra.mxu0 %v487
      %v1458 = vpop.f32.mrf.mxu0
      %v1459 = vadd.f32 %v1298, %v1458
      %1460 = vmatmul.f32.gmra.mxu0 %v488
      %v1461 = vpop.f32.mrf.mxu0
      %v1462 = vadd.f32 %v1301, %v1461
      %1463 = vmatmul.f32.gmra.mxu0 %v489
      %v1464 = vpop.f32.mrf.mxu0
      %v1465 = vadd.f32 %v1304, %v1464
      %1466 = vmatmul.f32.gmra.mxu0 %v490
      %v1467 = vpop.f32.mrf.mxu0
      %v1468 = vadd.f32 %v1307, %v1467
      %1469 = vmatmul.f32.gmra.mxu0 %v491
      %v1470 = vpop.f32.mrf.mxu0
      %v1471 = vadd.f32 %v1310, %v1470
      %1472 = vmatmul.f32.gmra.mxu0 %v492
      %v1473 = vpop.f32.mrf.mxu0
      %v1474 = vadd.f32 %v1313, %v1473
      %1475 = vmatmul.f32.gmra.mxu0 %v493
      %v1476 = vpop.f32.mrf.mxu0
      %v1477 = vadd.f32 %v1316, %v1476
      %1478 = vmatmul.f32.gmra.mxu0 %v494
      %v1479 = vpop.f32.mrf.mxu0
      %v1480 = vadd.f32 %v1319, %v1479
      %1481 = vmatmul.f32.gmra.mxu0 %v495
      %v1482 = vpop.f32.mrf.mxu0
      %v1483 = vadd.f32 %v1322, %v1482
      %1484 = vmatmul.f32.gmra.mxu0 %v496
      %v1485 = vpop.f32.mrf.mxu0
      %v1486 = vadd.f32 %v1325, %v1485
      %1487 = vmatmul.f32.gmra.mxu0 %v497
      %v1488 = vpop.f32.mrf.mxu0
      %v1489 = vadd.f32 %v1328, %v1488
      %1490 = vmatmul.f32.gmra.mxu0 %v498
      %v1491 = vpop.f32.mrf.mxu0
      %v1492 = vadd.f32 %v1331, %v1491
      %1493 = vmatmul.f32.gmra.mxu0 %v499
      %v1494 = vpop.f32.mrf.mxu0
      %v1495 = vadd.f32 %v1334, %v1494
      %1496 = vmatmul.f32.gmra.mxu0 %v500
      %v1497 = vpop.f32.mrf.mxu0
      %v1498 = vadd.f32 %v1337, %v1497
      %1499 = vmatmul.f32.gmra.mxu0 %v501
      %v1500 = vpop.f32.mrf.mxu0
      %v1501 = vadd.f32 %v1340, %v1500
      %1502 = vmatmul.f32.gmra.mxu0 %v502
      %v1503 = vpop.f32.mrf.mxu0
      %v1504 = vadd.f32 %v1343, %v1503
      %1505 = vmatmul.f32.gmra.mxu0 %v503
      %v1506 = vpop.f32.mrf.mxu0
      %v1507 = vadd.f32 %v1346, %v1506
      %1508 = vmatmul.f32.gmra.mxu0 %v504
      %v1509 = vpop.f32.mrf.mxu0
      %v1510 = vadd.f32 %v1349, %v1509
      %1511 = vmatmul.f32.gmra.mxu0 %v505
      %v1512 = vpop.f32.mrf.mxu0
      %v1513 = vadd.f32 %v1352, %v1512
      %1514 = vmatmul.f32.gmra.mxu0 %v506
      %v1515 = vpop.f32.mrf.mxu0
      %v1516 = vadd.f32 %v1355, %v1515
      %1517 = vmatmul.f32.gmra.mxu0 %v507
      %v1518 = vpop.f32.mrf.mxu0
      %v1519 = vadd.f32 %v1358, %v1518
      %1520 = vmatmul.f32.gmra.mxu0 %v508
      %v1521 = vpop.f32.mrf.mxu0
      %v1522 = vadd.f32 %v1361, %v1521
      %1523 = vdwg.mxu0
      %s1524 = scalar_lea.vmem %s1, 768
      %v1525 = vld [vmem:[%s1524] sm:$0xff]
      %v1526 = vld [vmem:[%s1524 + $0x8] sm:$0xff]
      %v1527 = vld [vmem:[%s1524 + $0x10] sm:$0xff]
      %v1528 = vld [vmem:[%s1524 + $0x18] sm:$0xff]
      %v1529 = vld [vmem:[%s1524 + $0x20] sm:$0xff]
      %v1530 = vld [vmem:[%s1524 + $0x28] sm:$0xff]
      %v1531 = vld [vmem:[%s1524 + $0x30] sm:$0xff]
      %v1532 = vld [vmem:[%s1524 + $0x38] sm:$0xff]
      %v1533 = vld [vmem:[%s1524 + $0x40] sm:$0xff]
      %v1534 = vld [vmem:[%s1524 + $0x48] sm:$0xff]
      %v1535 = vld [vmem:[%s1524 + $0x50] sm:$0xff]
      %v1536 = vld [vmem:[%s1524 + $0x58] sm:$0xff]
      %v1537 = vld [vmem:[%s1524 + $0x60] sm:$0xff]
      %v1538 = vld [vmem:[%s1524 + $0x68] sm:$0xff]
      %v1539 = vld [vmem:[%s1524 + $0x70] sm:$0xff]
      %v1540 = vld [vmem:[%s1524 + $0x78] sm:$0xff]
      %v1541 = vld [vmem:[%s1524 + $0x80] sm:$0xff]
      %v1542 = vld [vmem:[%s1524 + $0x88] sm:$0xff]
      %v1543 = vld [vmem:[%s1524 + $0x90] sm:$0xff]
      %v1544 = vld [vmem:[%s1524 + $0x98] sm:$0xff]
      %v1545 = vld [vmem:[%s1524 + $0xa0] sm:$0xff]
      %v1546 = vld [vmem:[%s1524 + $0xa8] sm:$0xff]
      %v1547 = vld [vmem:[%s1524 + $0xb0] sm:$0xff]
      %v1548 = vld [vmem:[%s1524 + $0xb8] sm:$0xff]
      %v1549 = vld [vmem:[%s1524 + $0xc0] sm:$0xff]
      %v1550 = vld [vmem:[%s1524 + $0xc8] sm:$0xff]
      %v1551 = vld [vmem:[%s1524 + $0xd0] sm:$0xff]
      %v1552 = vld [vmem:[%s1524 + $0xd8] sm:$0xff]
      %v1553 = vld [vmem:[%s1524 + $0xe0] sm:$0xff]
      %v1554 = vld [vmem:[%s1524 + $0xe8] sm:$0xff]
      %v1555 = vld [vmem:[%s1524 + $0xf0] sm:$0xff]
      %v1556 = vld [vmem:[%s1524 + $0xf8] sm:$0xff]
      %v1557 = vld [vmem:[%s1524 + $0x100] sm:$0xff]
      %v1558 = vld [vmem:[%s1524 + $0x108] sm:$0xff]
      %v1559 = vld [vmem:[%s1524 + $0x110] sm:$0xff]
      %v1560 = vld [vmem:[%s1524 + $0x118] sm:$0xff]
      %v1561 = vld [vmem:[%s1524 + $0x120] sm:$0xff]
      %v1562 = vld [vmem:[%s1524 + $0x128] sm:$0xff]
      %v1563 = vld [vmem:[%s1524 + $0x130] sm:$0xff]
      %v1564 = vld [vmem:[%s1524 + $0x138] sm:$0xff]
      %v1565 = vld [vmem:[%s1524 + $0x140] sm:$0xff]
      %v1566 = vld [vmem:[%s1524 + $0x148] sm:$0xff]
      %v1567 = vld [vmem:[%s1524 + $0x150] sm:$0xff]
      %v1568 = vld [vmem:[%s1524 + $0x158] sm:$0xff]
      %v1569 = vld [vmem:[%s1524 + $0x160] sm:$0xff]
      %v1570 = vld [vmem:[%s1524 + $0x168] sm:$0xff]
      %v1571 = vld [vmem:[%s1524 + $0x170] sm:$0xff]
      %v1572 = vld [vmem:[%s1524 + $0x178] sm:$0xff]
      %1573 = vmatpush.msra.mxu0 %v1540
      %1574 = vmatpush.msra.mxu0 %v1539
      %1575 = vmatpush.msra.mxu0 %v1538
      %1576 = vmatpush.msra.mxu0 %v1537
      %1577 = vmatpush.msra.mxu0 %v1536
      %1578 = vmatpush.msra.mxu0 %v1535
      %1579 = vmatpush.msra.mxu0 %v1534
      %1580 = vmatpush.msra.mxu0 %v1533
      %1581 = vmatpush.msra.mxu0 %v1532
      %1582 = vmatpush.msra.mxu0 %v1531
      %1583 = vmatpush.msra.mxu0 %v1530
      %1584 = vmatpush.msra.mxu0 %v1529
      %1585 = vmatpush.msra.mxu0 %v1528
      %1586 = vmatpush.msra.mxu0 %v1527
      %1587 = vmatpush.msra.mxu0 %v1526
      %1588 = vmatpush.msra.mxu0 %v1525
      %1589 = vmatmul.f32.gmra.mxu0 %v364
      %v1590 = vpop.f32.mrf.mxu0
      %v1591 = vadd.f32 0.0, %v1590
      %1592 = vmatmul.f32.gmra.mxu0 %v365
      %v1593 = vpop.f32.mrf.mxu0
      %v1594 = vadd.f32 0.0, %v1593
      %1595 = vmatmul.f32.gmra.mxu0 %v366
      %v1596 = vpop.f32.mrf.mxu0
      %v1597 = vadd.f32 0.0, %v1596
      %1598 = vmatmul.f32.gmra.mxu0 %v367
      %v1599 = vpop.f32.mrf.mxu0
      %v1600 = vadd.f32 0.0, %v1599
      %1601 = vmatmul.f32.gmra.mxu0 %v368
      %v1602 = vpop.f32.mrf.mxu0
      %v1603 = vadd.f32 0.0, %v1602
      %1604 = vmatmul.f32.gmra.mxu0 %v369
      %v1605 = vpop.f32.mrf.mxu0
      %v1606 = vadd.f32 0.0, %v1605
      %1607 = vmatmul.f32.gmra.mxu0 %v370
      %v1608 = vpop.f32.mrf.mxu0
      %v1609 = vadd.f32 0.0, %v1608
      %1610 = vmatmul.f32.gmra.mxu0 %v371
      %v1611 = vpop.f32.mrf.mxu0
      %v1612 = vadd.f32 0.0, %v1611
      %1613 = vmatmul.f32.gmra.mxu0 %v372
      %v1614 = vpop.f32.mrf.mxu0
      %v1615 = vadd.f32 0.0, %v1614
      %1616 = vmatmul.f32.gmra.mxu0 %v373
      %v1617 = vpop.f32.mrf.mxu0
      %v1618 = vadd.f32 0.0, %v1617
      %1619 = vmatmul.f32.gmra.mxu0 %v374
      %v1620 = vpop.f32.mrf.mxu0
      %v1621 = vadd.f32 0.0, %v1620
      %1622 = vmatmul.f32.gmra.mxu0 %v375
      %v1623 = vpop.f32.mrf.mxu0
      %v1624 = vadd.f32 0.0, %v1623
      %1625 = vmatmul.f32.gmra.mxu0 %v376
      %v1626 = vpop.f32.mrf.mxu0
      %v1627 = vadd.f32 0.0, %v1626
      %1628 = vmatmul.f32.gmra.mxu0 %v377
      %v1629 = vpop.f32.mrf.mxu0
      %v1630 = vadd.f32 0.0, %v1629
      %1631 = vmatmul.f32.gmra.mxu0 %v378
      %v1632 = vpop.f32.mrf.mxu0
      %v1633 = vadd.f32 0.0, %v1632
      %1634 = vmatmul.f32.gmra.mxu0 %v379
      %v1635 = vpop.f32.mrf.mxu0
      %v1636 = vadd.f32 0.0, %v1635
      %1637 = vmatmul.f32.gmra.mxu0 %v380
      %v1638 = vpop.f32.mrf.mxu0
      %v1639 = vadd.f32 0.0, %v1638
      %1640 = vmatmul.f32.gmra.mxu0 %v381
      %v1641 = vpop.f32.mrf.mxu0
      %v1642 = vadd.f32 0.0, %v1641
      %1643 = vmatmul.f32.gmra.mxu0 %v382
      %v1644 = vpop.f32.mrf.mxu0
      %v1645 = vadd.f32 0.0, %v1644
      %1646 = vmatmul.f32.gmra.mxu0 %v383
      %v1647 = vpop.f32.mrf.mxu0
      %v1648 = vadd.f32 0.0, %v1647
      %1649 = vmatmul.f32.gmra.mxu0 %v384
      %v1650 = vpop.f32.mrf.mxu0
      %v1651 = vadd.f32 0.0, %v1650
      %1652 = vmatmul.f32.gmra.mxu0 %v385
      %v1653 = vpop.f32.mrf.mxu0
      %v1654 = vadd.f32 0.0, %v1653
      %1655 = vmatmul.f32.gmra.mxu0 %v386
      %v1656 = vpop.f32.mrf.mxu0
      %v1657 = vadd.f32 0.0, %v1656
      %1658 = vmatmul.f32.gmra.mxu0 %v387
      %v1659 = vpop.f32.mrf.mxu0
      %v1660 = vadd.f32 0.0, %v1659
      %1661 = vmatmul.f32.gmra.mxu0 %v388
      %v1662 = vpop.f32.mrf.mxu0
      %v1663 = vadd.f32 0.0, %v1662
      %1664 = vmatmul.f32.gmra.mxu0 %v389
      %v1665 = vpop.f32.mrf.mxu0
      %v1666 = vadd.f32 0.0, %v1665
      %1667 = vmatmul.f32.gmra.mxu0 %v390
      %v1668 = vpop.f32.mrf.mxu0
      %v1669 = vadd.f32 0.0, %v1668
      %1670 = vmatmul.f32.gmra.mxu0 %v391
      %v1671 = vpop.f32.mrf.mxu0
      %v1672 = vadd.f32 0.0, %v1671
      %1673 = vmatmul.f32.gmra.mxu0 %v392
      %v1674 = vpop.f32.mrf.mxu0
      %v1675 = vadd.f32 0.0, %v1674
      %1676 = vmatmul.f32.gmra.mxu0 %v393
      %v1677 = vpop.f32.mrf.mxu0
      %v1678 = vadd.f32 0.0, %v1677
      %1679 = vmatmul.f32.gmra.mxu0 %v394
      %v1680 = vpop.f32.mrf.mxu0
      %v1681 = vadd.f32 0.0, %v1680
      %1682 = vmatmul.f32.gmra.mxu0 %v395
      %v1683 = vpop.f32.mrf.mxu0
      %v1684 = vadd.f32 0.0, %v1683
      %1685 = vmatmul.f32.gmra.mxu0 %v396
      %v1686 = vpop.f32.mrf.mxu0
      %v1687 = vadd.f32 0.0, %v1686
      %1688 = vmatmul.f32.gmra.mxu0 %v397
      %v1689 = vpop.f32.mrf.mxu0
      %v1690 = vadd.f32 0.0, %v1689
      %1691 = vmatmul.f32.gmra.mxu0 %v398
      %v1692 = vpop.f32.mrf.mxu0
      %v1693 = vadd.f32 0.0, %v1692
      %1694 = vmatmul.f32.gmra.mxu0 %v399
      %v1695 = vpop.f32.mrf.mxu0
      %v1696 = vadd.f32 0.0, %v1695
      %1697 = vmatmul.f32.gmra.mxu0 %v400
      %v1698 = vpop.f32.mrf.mxu0
      %v1699 = vadd.f32 0.0, %v1698
      %1700 = vmatmul.f32.gmra.mxu0 %v401
      %v1701 = vpop.f32.mrf.mxu0
      %v1702 = vadd.f32 0.0, %v1701
      %1703 = vmatmul.f32.gmra.mxu0 %v402
      %v1704 = vpop.f32.mrf.mxu0
      %v1705 = vadd.f32 0.0, %v1704
      %1706 = vmatmul.f32.gmra.mxu0 %v403
      %v1707 = vpop.f32.mrf.mxu0
      %v1708 = vadd.f32 0.0, %v1707
      %1709 = vmatmul.f32.gmra.mxu0 %v404
      %v1710 = vpop.f32.mrf.mxu0
      %v1711 = vadd.f32 0.0, %v1710
      %1712 = vmatmul.f32.gmra.mxu0 %v405
      %v1713 = vpop.f32.mrf.mxu0
      %v1714 = vadd.f32 0.0, %v1713
      %1715 = vmatmul.f32.gmra.mxu0 %v406
      %v1716 = vpop.f32.mrf.mxu0
      %v1717 = vadd.f32 0.0, %v1716
      %1718 = vmatmul.f32.gmra.mxu0 %v407
      %v1719 = vpop.f32.mrf.mxu0
      %v1720 = vadd.f32 0.0, %v1719
      %1721 = vmatmul.f32.gmra.mxu0 %v408
      %v1722 = vpop.f32.mrf.mxu0
      %v1723 = vadd.f32 0.0, %v1722
      %1724 = vmatmul.f32.gmra.mxu0 %v409
      %v1725 = vpop.f32.mrf.mxu0
      %v1726 = vadd.f32 0.0, %v1725
      %1727 = vmatmul.f32.gmra.mxu0 %v410
      %v1728 = vpop.f32.mrf.mxu0
      %v1729 = vadd.f32 0.0, %v1728
      %1730 = vmatmul.f32.gmra.mxu0 %v411
      %v1731 = vpop.f32.mrf.mxu0
      %v1732 = vadd.f32 0.0, %v1731
      %1733 = vdwg.mxu0
      %1734 = vmatpush.msra.mxu0 %v1556
      %1735 = vmatpush.msra.mxu0 %v1555
      %1736 = vmatpush.msra.mxu0 %v1554
      %1737 = vmatpush.msra.mxu0 %v1553
      %1738 = vmatpush.msra.mxu0 %v1552
      %1739 = vmatpush.msra.mxu0 %v1551
      %1740 = vmatpush.msra.mxu0 %v1550
      %1741 = vmatpush.msra.mxu0 %v1549
      %1742 = vmatpush.msra.mxu0 %v1548
      %1743 = vmatpush.msra.mxu0 %v1547
      %1744 = vmatpush.msra.mxu0 %v1546
      %1745 = vmatpush.msra.mxu0 %v1545
      %1746 = vmatpush.msra.mxu0 %v1544
      %1747 = vmatpush.msra.mxu0 %v1543
      %1748 = vmatpush.msra.mxu0 %v1542
      %1749 = vmatpush.msra.mxu0 %v1541
      %1750 = vmatmul.f32.gmra.mxu0 %v412
      %v1751 = vpop.f32.mrf.mxu0
      %v1752 = vadd.f32 %v1591, %v1751
      %1753 = vmatmul.f32.gmra.mxu0 %v413
      %v1754 = vpop.f32.mrf.mxu0
      %v1755 = vadd.f32 %v1594, %v1754
      %1756 = vmatmul.f32.gmra.mxu0 %v414
      %v1757 = vpop.f32.mrf.mxu0
      %v1758 = vadd.f32 %v1597, %v1757
      %1759 = vmatmul.f32.gmra.mxu0 %v415
      %v1760 = vpop.f32.mrf.mxu0
      %v1761 = vadd.f32 %v1600, %v1760
      %1762 = vmatmul.f32.gmra.mxu0 %v416
      %v1763 = vpop.f32.mrf.mxu0
      %v1764 = vadd.f32 %v1603, %v1763
      %1765 = vmatmul.f32.gmra.mxu0 %v417
      %v1766 = vpop.f32.mrf.mxu0
      %v1767 = vadd.f32 %v1606, %v1766
      %1768 = vmatmul.f32.gmra.mxu0 %v418
      %v1769 = vpop.f32.mrf.mxu0
      %v1770 = vadd.f32 %v1609, %v1769
      %1771 = vmatmul.f32.gmra.mxu0 %v419
      %v1772 = vpop.f32.mrf.mxu0
      %v1773 = vadd.f32 %v1612, %v1772
      %1774 = vmatmul.f32.gmra.mxu0 %v420
      %v1775 = vpop.f32.mrf.mxu0
      %v1776 = vadd.f32 %v1615, %v1775
      %1777 = vmatmul.f32.gmra.mxu0 %v421
      %v1778 = vpop.f32.mrf.mxu0
      %v1779 = vadd.f32 %v1618, %v1778
      %1780 = vmatmul.f32.gmra.mxu0 %v422
      %v1781 = vpop.f32.mrf.mxu0
      %v1782 = vadd.f32 %v1621, %v1781
      %1783 = vmatmul.f32.gmra.mxu0 %v423
      %v1784 = vpop.f32.mrf.mxu0
      %v1785 = vadd.f32 %v1624, %v1784
      %1786 = vmatmul.f32.gmra.mxu0 %v424
      %v1787 = vpop.f32.mrf.mxu0
      %v1788 = vadd.f32 %v1627, %v1787
      %1789 = vmatmul.f32.gmra.mxu0 %v425
      %v1790 = vpop.f32.mrf.mxu0
      %v1791 = vadd.f32 %v1630, %v1790
      %1792 = vmatmul.f32.gmra.mxu0 %v426
      %v1793 = vpop.f32.mrf.mxu0
      %v1794 = vadd.f32 %v1633, %v1793
      %1795 = vmatmul.f32.gmra.mxu0 %v427
      %v1796 = vpop.f32.mrf.mxu0
      %v1797 = vadd.f32 %v1636, %v1796
      %1798 = vmatmul.f32.gmra.mxu0 %v428
      %v1799 = vpop.f32.mrf.mxu0
      %v1800 = vadd.f32 %v1639, %v1799
      %1801 = vmatmul.f32.gmra.mxu0 %v429
      %v1802 = vpop.f32.mrf.mxu0
      %v1803 = vadd.f32 %v1642, %v1802
      %1804 = vmatmul.f32.gmra.mxu0 %v430
      %v1805 = vpop.f32.mrf.mxu0
      %v1806 = vadd.f32 %v1645, %v1805
      %1807 = vmatmul.f32.gmra.mxu0 %v431
      %v1808 = vpop.f32.mrf.mxu0
      %v1809 = vadd.f32 %v1648, %v1808
      %1810 = vmatmul.f32.gmra.mxu0 %v432
      %v1811 = vpop.f32.mrf.mxu0
      %v1812 = vadd.f32 %v1651, %v1811
      %1813 = vmatmul.f32.gmra.mxu0 %v433
      %v1814 = vpop.f32.mrf.mxu0
      %v1815 = vadd.f32 %v1654, %v1814
      %1816 = vmatmul.f32.gmra.mxu0 %v434
      %v1817 = vpop.f32.mrf.mxu0
      %v1818 = vadd.f32 %v1657, %v1817
      %1819 = vmatmul.f32.gmra.mxu0 %v435
      %v1820 = vpop.f32.mrf.mxu0
      %v1821 = vadd.f32 %v1660, %v1820
      %1822 = vmatmul.f32.gmra.mxu0 %v436
      %v1823 = vpop.f32.mrf.mxu0
      %v1824 = vadd.f32 %v1663, %v1823
      %1825 = vmatmul.f32.gmra.mxu0 %v437
      %v1826 = vpop.f32.mrf.mxu0
      %v1827 = vadd.f32 %v1666, %v1826
      %1828 = vmatmul.f32.gmra.mxu0 %v438
      %v1829 = vpop.f32.mrf.mxu0
      %v1830 = vadd.f32 %v1669, %v1829
      %1831 = vmatmul.f32.gmra.mxu0 %v439
      %v1832 = vpop.f32.mrf.mxu0
      %v1833 = vadd.f32 %v1672, %v1832
      %1834 = vmatmul.f32.gmra.mxu0 %v440
      %v1835 = vpop.f32.mrf.mxu0
      %v1836 = vadd.f32 %v1675, %v1835
      %1837 = vmatmul.f32.gmra.mxu0 %v441
      %v1838 = vpop.f32.mrf.mxu0
      %v1839 = vadd.f32 %v1678, %v1838
      %1840 = vmatmul.f32.gmra.mxu0 %v442
      %v1841 = vpop.f32.mrf.mxu0
      %v1842 = vadd.f32 %v1681, %v1841
      %1843 = vmatmul.f32.gmra.mxu0 %v443
      %v1844 = vpop.f32.mrf.mxu0
      %v1845 = vadd.f32 %v1684, %v1844
      %1846 = vmatmul.f32.gmra.mxu0 %v444
      %v1847 = vpop.f32.mrf.mxu0
      %v1848 = vadd.f32 %v1687, %v1847
      %1849 = vmatmul.f32.gmra.mxu0 %v445
      %v1850 = vpop.f32.mrf.mxu0
      %v1851 = vadd.f32 %v1690, %v1850
      %1852 = vmatmul.f32.gmra.mxu0 %v446
      %v1853 = vpop.f32.mrf.mxu0
      %v1854 = vadd.f32 %v1693, %v1853
      %1855 = vmatmul.f32.gmra.mxu0 %v447
      %v1856 = vpop.f32.mrf.mxu0
      %v1857 = vadd.f32 %v1696, %v1856
      %1858 = vmatmul.f32.gmra.mxu0 %v448
      %v1859 = vpop.f32.mrf.mxu0
      %v1860 = vadd.f32 %v1699, %v1859
      %1861 = vmatmul.f32.gmra.mxu0 %v449
      %v1862 = vpop.f32.mrf.mxu0
      %v1863 = vadd.f32 %v1702, %v1862
      %1864 = vmatmul.f32.gmra.mxu0 %v450
      %v1865 = vpop.f32.mrf.mxu0
      %v1866 = vadd.f32 %v1705, %v1865
      %1867 = vmatmul.f32.gmra.mxu0 %v451
      %v1868 = vpop.f32.mrf.mxu0
      %v1869 = vadd.f32 %v1708, %v1868
      %1870 = vmatmul.f32.gmra.mxu0 %v452
      %v1871 = vpop.f32.mrf.mxu0
      %v1872 = vadd.f32 %v1711, %v1871
      %1873 = vmatmul.f32.gmra.mxu0 %v453
      %v1874 = vpop.f32.mrf.mxu0
      %v1875 = vadd.f32 %v1714, %v1874
      %1876 = vmatmul.f32.gmra.mxu0 %v454
      %v1877 = vpop.f32.mrf.mxu0
      %v1878 = vadd.f32 %v1717, %v1877
      %1879 = vmatmul.f32.gmra.mxu0 %v455
      %v1880 = vpop.f32.mrf.mxu0
      %v1881 = vadd.f32 %v1720, %v1880
      %1882 = vmatmul.f32.gmra.mxu0 %v456
      %v1883 = vpop.f32.mrf.mxu0
      %v1884 = vadd.f32 %v1723, %v1883
      %1885 = vmatmul.f32.gmra.mxu0 %v457
      %v1886 = vpop.f32.mrf.mxu0
      %v1887 = vadd.f32 %v1726, %v1886
      %1888 = vmatmul.f32.gmra.mxu0 %v458
      %v1889 = vpop.f32.mrf.mxu0
      %v1890 = vadd.f32 %v1729, %v1889
      %1891 = vmatmul.f32.gmra.mxu0 %v459
      %v1892 = vpop.f32.mrf.mxu0
      %v1893 = vadd.f32 %v1732, %v1892
      %1894 = vdwg.mxu0
      %1895 = vmatpush.msra.mxu0 %v1572
      %1896 = vmatpush.msra.mxu0 %v1571
      %1897 = vmatpush.msra.mxu0 %v1570
      %1898 = vmatpush.msra.mxu0 %v1569
      %1899 = vmatpush.msra.mxu0 %v1568
      %1900 = vmatpush.msra.mxu0 %v1567
      %1901 = vmatpush.msra.mxu0 %v1566
      %1902 = vmatpush.msra.mxu0 %v1565
      %1903 = vmatpush.msra.mxu0 %v1564
      %1904 = vmatpush.msra.mxu0 %v1563
      %1905 = vmatpush.msra.mxu0 %v1562
      %1906 = vmatpush.msra.mxu0 %v1561
      %1907 = vmatpush.msra.mxu0 %v1560
      %1908 = vmatpush.msra.mxu0 %v1559
      %1909 = vmatpush.msra.mxu0 %v1558
      %1910 = vmatpush.msra.mxu0 %v1557
      %1911 = vmatmul.f32.gmra.mxu0 %v461
      %v1912 = vpop.f32.mrf.mxu0
      %v1913 = vadd.f32 %v1752, %v1912
      %1914 = vmatmul.f32.gmra.mxu0 %v462
      %v1915 = vpop.f32.mrf.mxu0
      %v1916 = vadd.f32 %v1755, %v1915
      %1917 = vmatmul.f32.gmra.mxu0 %v463
      %v1918 = vpop.f32.mrf.mxu0
      %v1919 = vadd.f32 %v1758, %v1918
      %1920 = vmatmul.f32.gmra.mxu0 %v464
      %v1921 = vpop.f32.mrf.mxu0
      %v1922 = vadd.f32 %v1761, %v1921
      %1923 = vmatmul.f32.gmra.mxu0 %v465
      %v1924 = vpop.f32.mrf.mxu0
      %v1925 = vadd.f32 %v1764, %v1924
      %1926 = vmatmul.f32.gmra.mxu0 %v466
      %v1927 = vpop.f32.mrf.mxu0
      %v1928 = vadd.f32 %v1767, %v1927
      %1929 = vmatmul.f32.gmra.mxu0 %v467
      %v1930 = vpop.f32.mrf.mxu0
      %v1931 = vadd.f32 %v1770, %v1930
      %1932 = vmatmul.f32.gmra.mxu0 %v468
      %v1933 = vpop.f32.mrf.mxu0
      %v1934 = vadd.f32 %v1773, %v1933
      %1935 = vmatmul.f32.gmra.mxu0 %v469
      %v1936 = vpop.f32.mrf.mxu0
      %v1937 = vadd.f32 %v1776, %v1936
      %1938 = vmatmul.f32.gmra.mxu0 %v470
      %v1939 = vpop.f32.mrf.mxu0
      %v1940 = vadd.f32 %v1779, %v1939
      %1941 = vmatmul.f32.gmra.mxu0 %v471
      %v1942 = vpop.f32.mrf.mxu0
      %v1943 = vadd.f32 %v1782, %v1942
      %1944 = vmatmul.f32.gmra.mxu0 %v472
      %v1945 = vpop.f32.mrf.mxu0
      %v1946 = vadd.f32 %v1785, %v1945
      %1947 = vmatmul.f32.gmra.mxu0 %v473
      %v1948 = vpop.f32.mrf.mxu0
      %v1949 = vadd.f32 %v1788, %v1948
      %1950 = vmatmul.f32.gmra.mxu0 %v474
      %v1951 = vpop.f32.mrf.mxu0
      %v1952 = vadd.f32 %v1791, %v1951
      %1953 = vmatmul.f32.gmra.mxu0 %v475
      %v1954 = vpop.f32.mrf.mxu0
      %v1955 = vadd.f32 %v1794, %v1954
      %1956 = vmatmul.f32.gmra.mxu0 %v476
      %v1957 = vpop.f32.mrf.mxu0
      %v1958 = vadd.f32 %v1797, %v1957
      %1959 = vmatmul.f32.gmra.mxu0 %v477
      %v1960 = vpop.f32.mrf.mxu0
      %v1961 = vadd.f32 %v1800, %v1960
      %1962 = vmatmul.f32.gmra.mxu0 %v478
      %v1963 = vpop.f32.mrf.mxu0
      %v1964 = vadd.f32 %v1803, %v1963
      %1965 = vmatmul.f32.gmra.mxu0 %v479
      %v1966 = vpop.f32.mrf.mxu0
      %v1967 = vadd.f32 %v1806, %v1966
      %1968 = vmatmul.f32.gmra.mxu0 %v480
      %v1969 = vpop.f32.mrf.mxu0
      %v1970 = vadd.f32 %v1809, %v1969
      %1971 = vmatmul.f32.gmra.mxu0 %v481
      %v1972 = vpop.f32.mrf.mxu0
      %v1973 = vadd.f32 %v1812, %v1972
      %1974 = vmatmul.f32.gmra.mxu0 %v482
      %v1975 = vpop.f32.mrf.mxu0
      %v1976 = vadd.f32 %v1815, %v1975
      %1977 = vmatmul.f32.gmra.mxu0 %v483
      %v1978 = vpop.f32.mrf.mxu0
      %v1979 = vadd.f32 %v1818, %v1978
      %1980 = vmatmul.f32.gmra.mxu0 %v484
      %v1981 = vpop.f32.mrf.mxu0
      %v1982 = vadd.f32 %v1821, %v1981
      %1983 = vmatmul.f32.gmra.mxu0 %v485
      %v1984 = vpop.f32.mrf.mxu0
      %v1985 = vadd.f32 %v1824, %v1984
      %1986 = vmatmul.f32.gmra.mxu0 %v486
      %v1987 = vpop.f32.mrf.mxu0
      %v1988 = vadd.f32 %v1827, %v1987
      %1989 = vmatmul.f32.gmra.mxu0 %v487
      %v1990 = vpop.f32.mrf.mxu0
      %v1991 = vadd.f32 %v1830, %v1990
      %1992 = vmatmul.f32.gmra.mxu0 %v488
      %v1993 = vpop.f32.mrf.mxu0
      %v1994 = vadd.f32 %v1833, %v1993
      %1995 = vmatmul.f32.gmra.mxu0 %v489
      %v1996 = vpop.f32.mrf.mxu0
      %v1997 = vadd.f32 %v1836, %v1996
      %1998 = vmatmul.f32.gmra.mxu0 %v490
      %v1999 = vpop.f32.mrf.mxu0
      %v2000 = vadd.f32 %v1839, %v1999
      %2001 = vmatmul.f32.gmra.mxu0 %v491
      %v2002 = vpop.f32.mrf.mxu0
      %v2003 = vadd.f32 %v1842, %v2002
      %2004 = vmatmul.f32.gmra.mxu0 %v492
      %v2005 = vpop.f32.mrf.mxu0
      %v2006 = vadd.f32 %v1845, %v2005
      %2007 = vmatmul.f32.gmra.mxu0 %v493
      %v2008 = vpop.f32.mrf.mxu0
      %v2009 = vadd.f32 %v1848, %v2008
      %2010 = vmatmul.f32.gmra.mxu0 %v494
      %v2011 = vpop.f32.mrf.mxu0
      %v2012 = vadd.f32 %v1851, %v2011
      %2013 = vmatmul.f32.gmra.mxu0 %v495
      %v2014 = vpop.f32.mrf.mxu0
      %v2015 = vadd.f32 %v1854, %v2014
      %2016 = vmatmul.f32.gmra.mxu0 %v496
      %v2017 = vpop.f32.mrf.mxu0
      %v2018 = vadd.f32 %v1857, %v2017
      %2019 = vmatmul.f32.gmra.mxu0 %v497
      %v2020 = vpop.f32.mrf.mxu0
      %v2021 = vadd.f32 %v1860, %v2020
      %2022 = vmatmul.f32.gmra.mxu0 %v498
      %v2023 = vpop.f32.mrf.mxu0
      %v2024 = vadd.f32 %v1863, %v2023
      %2025 = vmatmul.f32.gmra.mxu0 %v499
      %v2026 = vpop.f32.mrf.mxu0
      %v2027 = vadd.f32 %v1866, %v2026
      %2028 = vmatmul.f32.gmra.mxu0 %v500
      %v2029 = vpop.f32.mrf.mxu0
      %v2030 = vadd.f32 %v1869, %v2029
      %2031 = vmatmul.f32.gmra.mxu0 %v501
      %v2032 = vpop.f32.mrf.mxu0
      %v2033 = vadd.f32 %v1872, %v2032
      %2034 = vmatmul.f32.gmra.mxu0 %v502
      %v2035 = vpop.f32.mrf.mxu0
      %v2036 = vadd.f32 %v1875, %v2035
      %2037 = vmatmul.f32.gmra.mxu0 %v503
      %v2038 = vpop.f32.mrf.mxu0
      %v2039 = vadd.f32 %v1878, %v2038
      %2040 = vmatmul.f32.gmra.mxu0 %v504
      %v2041 = vpop.f32.mrf.mxu0
      %v2042 = vadd.f32 %v1881, %v2041
      %2043 = vmatmul.f32.gmra.mxu0 %v505
      %v2044 = vpop.f32.mrf.mxu0
      %v2045 = vadd.f32 %v1884, %v2044
      %2046 = vmatmul.f32.gmra.mxu0 %v506
      %v2047 = vpop.f32.mrf.mxu0
      %v2048 = vadd.f32 %v1887, %v2047
      %2049 = vmatmul.f32.gmra.mxu0 %v507
      %v2050 = vpop.f32.mrf.mxu0
      %v2051 = vadd.f32 %v1890, %v2050
      %2052 = vmatmul.f32.gmra.mxu0 %v508
      %v2053 = vpop.f32.mrf.mxu0
      %v2054 = vadd.f32 %v1893, %v2053
      %2055 = vdwg.mxu0
      %vm2104 = vcmask 1046528
      %v2105 = vrot.slane %v1381, 1
      %v2106 = vrot.slane %v1384, 1
      %v2107 = vsel %vm2104, %v2105, %v2106
      %v2108 = vrot.slane %v1387, 1
      %v2109 = vsel %vm2104, %v2106, %v2108
      %v2110 = vrot.slane %v1390, 1
      %v2111 = vrot.slane %v1393, 1
      %v2112 = vsel %vm2104, %v2110, %v2111
      %v2113 = vrot.slane %v1396, 1
      %v2114 = vsel %vm2104, %v2111, %v2113
      %v2115 = vrot.slane %v1399, 1
      %v2116 = vrot.slane %v1402, 1
      %v2117 = vsel %vm2104, %v2115, %v2116
      %v2118 = vrot.slane %v1405, 1
      %v2119 = vsel %vm2104, %v2116, %v2118
      %v2120 = vrot.slane %v1408, 1
      %v2121 = vrot.slane %v1411, 1
      %v2122 = vsel %vm2104, %v2120, %v2121
      %v2123 = vrot.slane %v1414, 1
      %v2124 = vsel %vm2104, %v2121, %v2123
      %v2125 = vrot.slane %v1417, 1
      %v2126 = vrot.slane %v1420, 1
      %v2127 = vsel %vm2104, %v2125, %v2126
      %v2128 = vrot.slane %v1423, 1
      %v2129 = vsel %vm2104, %v2126, %v2128
      %v2130 = vrot.slane %v1426, 1
      %v2131 = vrot.slane %v1429, 1
      %v2132 = vsel %vm2104, %v2130, %v2131
      %v2133 = vrot.slane %v1432, 1
      %v2134 = vsel %vm2104, %v2131, %v2133
      %v2135 = vrot.slane %v1435, 1
      %v2136 = vrot.slane %v1438, 1
      %v2137 = vsel %vm2104, %v2135, %v2136
      %v2138 = vrot.slane %v1441, 1
      %v2139 = vsel %vm2104, %v2136, %v2138
      %v2140 = vrot.slane %v1444, 1
      %v2141 = vrot.slane %v1447, 1
      %v2142 = vsel %vm2104, %v2140, %v2141
      %v2143 = vrot.slane %v1450, 1
      %v2144 = vsel %vm2104, %v2141, %v2143
      %v2145 = vrot.slane %v1453, 1
      %v2146 = vrot.slane %v1456, 1
      %v2147 = vsel %vm2104, %v2145, %v2146
      %v2148 = vrot.slane %v1459, 1
      %v2149 = vsel %vm2104, %v2146, %v2148
      %v2150 = vrot.slane %v1462, 1
      %v2151 = vrot.slane %v1465, 1
      %v2152 = vsel %vm2104, %v2150, %v2151
      %v2153 = vrot.slane %v1468, 1
      %v2154 = vsel %vm2104, %v2151, %v2153
      %v2155 = vrot.slane %v1471, 1
      %v2156 = vrot.slane %v1474, 1
      %v2157 = vsel %vm2104, %v2155, %v2156
      %v2158 = vrot.slane %v1477, 1
      %v2159 = vsel %vm2104, %v2156, %v2158
      %v2160 = vrot.slane %v1480, 1
      %v2161 = vrot.slane %v1483, 1
      %v2162 = vsel %vm2104, %v2160, %v2161
      %v2163 = vrot.slane %v1486, 1
      %v2164 = vsel %vm2104, %v2161, %v2163
      %v2165 = vrot.slane %v1489, 1
      %v2166 = vrot.slane %v1492, 1
      %v2167 = vsel %vm2104, %v2165, %v2166
      %v2168 = vrot.slane %v1495, 1
      %v2169 = vsel %vm2104, %v2166, %v2168
      %v2170 = vrot.slane %v1498, 1
      %v2171 = vrot.slane %v1501, 1
      %v2172 = vsel %vm2104, %v2170, %v2171
      %v2173 = vrot.slane %v1504, 1
      %v2174 = vsel %vm2104, %v2171, %v2173
      %v2175 = vrot.slane %v1507, 1
      %v2176 = vrot.slane %v1510, 1
      %v2177 = vsel %vm2104, %v2175, %v2176
      %v2178 = vrot.slane %v1513, 1
      %v2179 = vsel %vm2104, %v2176, %v2178
      %v2180 = vrot.slane %v1516, 1
      %v2181 = vrot.slane %v1519, 1
      %v2182 = vsel %vm2104, %v2180, %v2181
      %v2183 = vrot.slane %v1522, 1
      %v2184 = vsel %vm2104, %v2181, %v2183
      %v2217 = vadd.f32 %v865, %v2107
      %v2218 = vadd.f32 %v868, %v2109
      %v2219 = vadd.f32 %v873, %v2112
      %v2220 = vadd.f32 %v876, %v2114
      %v2221 = vadd.f32 %v881, %v2117
      %v2222 = vadd.f32 %v884, %v2119
      %v2223 = vadd.f32 %v889, %v2122
      %v2224 = vadd.f32 %v892, %v2124
      %v2225 = vadd.f32 %v897, %v2127
      %v2226 = vadd.f32 %v900, %v2129
      %v2227 = vadd.f32 %v905, %v2132
      %v2228 = vadd.f32 %v908, %v2134
      %v2229 = vadd.f32 %v913, %v2137
      %v2230 = vadd.f32 %v916, %v2139
      %v2231 = vadd.f32 %v921, %v2142
      %v2232 = vadd.f32 %v924, %v2144
      %v2233 = vadd.f32 %v929, %v2147
      %v2234 = vadd.f32 %v932, %v2149
      %v2235 = vadd.f32 %v937, %v2152
      %v2236 = vadd.f32 %v940, %v2154
      %v2237 = vadd.f32 %v945, %v2157
      %v2238 = vadd.f32 %v948, %v2159
      %v2239 = vadd.f32 %v953, %v2162
      %v2240 = vadd.f32 %v956, %v2164
      %v2241 = vadd.f32 %v961, %v2167
      %v2242 = vadd.f32 %v964, %v2169
      %v2243 = vadd.f32 %v969, %v2172
      %v2244 = vadd.f32 %v972, %v2174
      %v2245 = vadd.f32 %v977, %v2177
      %v2246 = vadd.f32 %v980, %v2179
      %v2247 = vadd.f32 %v985, %v2182
      %v2248 = vadd.f32 %v988, %v2184
      %vm2297 = vcmask 1045504
      %v2298 = vrot.slane %v1913, 2
      %v2299 = vrot.slane %v1916, 2
      %v2300 = vsel %vm2297, %v2298, %v2299
      %v2301 = vrot.slane %v1919, 2
      %v2302 = vsel %vm2297, %v2299, %v2301
      %v2303 = vrot.slane %v1922, 2
      %v2304 = vrot.slane %v1925, 2
      %v2305 = vsel %vm2297, %v2303, %v2304
      %v2306 = vrot.slane %v1928, 2
      %v2307 = vsel %vm2297, %v2304, %v2306
      %v2308 = vrot.slane %v1931, 2
      %v2309 = vrot.slane %v1934, 2
      %v2310 = vsel %vm2297, %v2308, %v2309
      %v2311 = vrot.slane %v1937, 2
      %v2312 = vsel %vm2297, %v2309, %v2311
      %v2313 = vrot.slane %v1940, 2
      %v2314 = vrot.slane %v1943, 2
      %v2315 = vsel %vm2297, %v2313, %v2314
      %v2316 = vrot.slane %v1946, 2
      %v2317 = vsel %vm2297, %v2314, %v2316
      %v2318 = vrot.slane %v1949, 2
      %v2319 = vrot.slane %v1952, 2
      %v2320 = vsel %vm2297, %v2318, %v2319
      %v2321 = vrot.slane %v1955, 2
      %v2322 = vsel %vm2297, %v2319, %v2321
      %v2323 = vrot.slane %v1958, 2
      %v2324 = vrot.slane %v1961, 2
      %v2325 = vsel %vm2297, %v2323, %v2324
      %v2326 = vrot.slane %v1964, 2
      %v2327 = vsel %vm2297, %v2324, %v2326
      %v2328 = vrot.slane %v1967, 2
      %v2329 = vrot.slane %v1970, 2
      %v2330 = vsel %vm2297, %v2328, %v2329
      %v2331 = vrot.slane %v1973, 2
      %v2332 = vsel %vm2297, %v2329, %v2331
      %v2333 = vrot.slane %v1976, 2
      %v2334 = vrot.slane %v1979, 2
      %v2335 = vsel %vm2297, %v2333, %v2334
      %v2336 = vrot.slane %v1982, 2
      %v2337 = vsel %vm2297, %v2334, %v2336
      %v2338 = vrot.slane %v1985, 2
      %v2339 = vrot.slane %v1988, 2
      %v2340 = vsel %vm2297, %v2338, %v2339
      %v2341 = vrot.slane %v1991, 2
      %v2342 = vsel %vm2297, %v2339, %v2341
      %v2343 = vrot.slane %v1994, 2
      %v2344 = vrot.slane %v1997, 2
      %v2345 = vsel %vm2297, %v2343, %v2344
      %v2346 = vrot.slane %v2000, 2
      %v2347 = vsel %vm2297, %v2344, %v2346
      %v2348 = vrot.slane %v2003, 2
      %v2349 = vrot.slane %v2006, 2
      %v2350 = vsel %vm2297, %v2348, %v2349
      %v2351 = vrot.slane %v2009, 2
      %v2352 = vsel %vm2297, %v2349, %v2351
      %v2353 = vrot.slane %v2012, 2
      %v2354 = vrot.slane %v2015, 2
      %v2355 = vsel %vm2297, %v2353, %v2354
      %v2356 = vrot.slane %v2018, 2
      %v2357 = vsel %vm2297, %v2354, %v2356
      %v2358 = vrot.slane %v2021, 2
      %v2359 = vrot.slane %v2024, 2
      %v2360 = vsel %vm2297, %v2358, %v2359
      %v2361 = vrot.slane %v2027, 2
      %v2362 = vsel %vm2297, %v2359, %v2361
      %v2363 = vrot.slane %v2030, 2
      %v2364 = vrot.slane %v2033, 2
      %v2365 = vsel %vm2297, %v2363, %v2364
      %v2366 = vrot.slane %v2036, 2
      %v2367 = vsel %vm2297, %v2364, %v2366
      %v2368 = vrot.slane %v2039, 2
      %v2369 = vrot.slane %v2042, 2
      %v2370 = vsel %vm2297, %v2368, %v2369
      %v2371 = vrot.slane %v2045, 2
      %v2372 = vsel %vm2297, %v2369, %v2371
      %v2373 = vrot.slane %v2048, 2
      %v2374 = vrot.slane %v2051, 2
      %v2375 = vsel %vm2297, %v2373, %v2374
      %v2376 = vrot.slane %v2054, 2
      %v2377 = vsel %vm2297, %v2374, %v2376
      %v2410 = vadd.f32 %v2217, %v2300
      %v2411 = vadd.f32 %v2218, %v2302
      %v2412 = vadd.f32 %v2219, %v2305
      %v2413 = vadd.f32 %v2220, %v2307
      %v2414 = vadd.f32 %v2221, %v2310
      %v2415 = vadd.f32 %v2222, %v2312
      %v2416 = vadd.f32 %v2223, %v2315
      %v2417 = vadd.f32 %v2224, %v2317
      %v2418 = vadd.f32 %v2225, %v2320
      %v2419 = vadd.f32 %v2226, %v2322
      %v2420 = vadd.f32 %v2227, %v2325
      %v2421 = vadd.f32 %v2228, %v2327
      %v2422 = vadd.f32 %v2229, %v2330
      %v2423 = vadd.f32 %v2230, %v2332
      %v2424 = vadd.f32 %v2231, %v2335
      %v2425 = vadd.f32 %v2232, %v2337
      %v2426 = vadd.f32 %v2233, %v2340
      %v2427 = vadd.f32 %v2234, %v2342
      %v2428 = vadd.f32 %v2235, %v2345
      %v2429 = vadd.f32 %v2236, %v2347
      %v2430 = vadd.f32 %v2237, %v2350
      %v2431 = vadd.f32 %v2238, %v2352
      %v2432 = vadd.f32 %v2239, %v2355
      %v2433 = vadd.f32 %v2240, %v2357
      %v2434 = vadd.f32 %v2241, %v2360
      %v2435 = vadd.f32 %v2242, %v2362
      %v2436 = vadd.f32 %v2243, %v2365
      %v2437 = vadd.f32 %v2244, %v2367
      %v2438 = vadd.f32 %v2245, %v2370
      %v2439 = vadd.f32 %v2246, %v2372
      %v2440 = vadd.f32 %v2247, %v2375
      %v2441 = vadd.f32 %v2248, %v2377
      %v2442 = vadd.f32 %v2410, %v2412
      %v2443 = vadd.f32 %v2442, %v2414
      %v2444 = vadd.f32 %v2443, %v2416
      %v2445 = vadd.f32 %v2444, %v2418
      %v2446 = vadd.f32 %v2445, %v2420
      %v2447 = vadd.f32 %v2446, %v2422
      %v2448 = vadd.f32 %v2447, %v2424
      %v2449 = vadd.f32 %v2448, %v2426
      %v2450 = vadd.f32 %v2449, %v2428
      %v2451 = vadd.f32 %v2450, %v2430
      %v2452 = vadd.f32 %v2451, %v2432
      %v2453 = vadd.f32 %v2452, %v2434
      %v2454 = vadd.f32 %v2453, %v2436
      %v2455 = vadd.f32 %v2454, %v2438
      %v2456 = vadd.f32 %v2455, %v2440
      %v2457 = vadd.f32 %v2411, %v2413
      %v2458 = vadd.f32 %v2457, %v2415
      %v2459 = vadd.f32 %v2458, %v2417
      %v2460 = vadd.f32 %v2459, %v2419
      %v2461 = vadd.f32 %v2460, %v2421
      %v2462 = vadd.f32 %v2461, %v2423
      %v2463 = vadd.f32 %v2462, %v2425
      %v2464 = vadd.f32 %v2463, %v2427
      %v2465 = vadd.f32 %v2464, %v2429
      %v2466 = vadd.f32 %v2465, %v2431
      %v2467 = vadd.f32 %v2466, %v2433
      %v2468 = vadd.f32 %v2467, %v2435
      %v2469 = vadd.f32 %v2468, %v2437
      %v2470 = vadd.f32 %v2469, %v2439
      %v2471 = vadd.f32 %v2470, %v2441
      %v2472 = vadd.f32 %v2456, %v2471
      %v2473 = vrot.slane %v2472, 4
      %v2474 = vadd.f32 %v2472, %v2473
      %v2475 = vrot.slane %v2474, 2
      %v2476 = vadd.f32 %v2474, %v2475
      %v2477 = vrot.slane %v2476, 1
      %v2478 = vadd.f32 %v2476, %v2477
      %v2479 = vmul.f32 %v2478, 0.00390625
      %v2480 = vsub.f32 %v2410, %v2479
      %v2481 = vsub.f32 %v2411, %v2479
      %v2482 = vsub.f32 %v2412, %v2479
      %v2483 = vsub.f32 %v2413, %v2479
      %v2484 = vsub.f32 %v2414, %v2479
      %v2485 = vsub.f32 %v2415, %v2479
      %v2486 = vsub.f32 %v2416, %v2479
      %v2487 = vsub.f32 %v2417, %v2479
      %v2488 = vsub.f32 %v2418, %v2479
      %v2489 = vsub.f32 %v2419, %v2479
      %v2490 = vsub.f32 %v2420, %v2479
      %v2491 = vsub.f32 %v2421, %v2479
      %v2492 = vsub.f32 %v2422, %v2479
      %v2493 = vsub.f32 %v2423, %v2479
      %v2494 = vsub.f32 %v2424, %v2479
      %v2495 = vsub.f32 %v2425, %v2479
      %v2496 = vsub.f32 %v2426, %v2479
      %v2497 = vsub.f32 %v2427, %v2479
      %v2498 = vsub.f32 %v2428, %v2479
      %v2499 = vsub.f32 %v2429, %v2479
      %v2500 = vsub.f32 %v2430, %v2479
      %v2501 = vsub.f32 %v2431, %v2479
      %v2502 = vsub.f32 %v2432, %v2479
      %v2503 = vsub.f32 %v2433, %v2479
      %v2504 = vsub.f32 %v2434, %v2479
      %v2505 = vsub.f32 %v2435, %v2479
      %v2506 = vsub.f32 %v2436, %v2479
      %v2507 = vsub.f32 %v2437, %v2479
      %v2508 = vsub.f32 %v2438, %v2479
      %v2509 = vsub.f32 %v2439, %v2479
      %v2510 = vsub.f32 %v2440, %v2479
      %v2511 = vsub.f32 %v2441, %v2479
      %v2512 = vmul.f32 %v2480, %v2480
      %v2513 = vmul.f32 %v2481, %v2481
      %v2514 = vmul.f32 %v2482, %v2482
      %v2515 = vmul.f32 %v2483, %v2483
      %v2516 = vmul.f32 %v2484, %v2484
      %v2517 = vmul.f32 %v2485, %v2485
      %v2518 = vmul.f32 %v2486, %v2486
      %v2519 = vmul.f32 %v2487, %v2487
      %v2520 = vmul.f32 %v2488, %v2488
      %v2521 = vmul.f32 %v2489, %v2489
      %v2522 = vmul.f32 %v2490, %v2490
      %v2523 = vmul.f32 %v2491, %v2491
      %v2524 = vmul.f32 %v2492, %v2492
      %v2525 = vmul.f32 %v2493, %v2493
      %v2526 = vmul.f32 %v2494, %v2494
      %v2527 = vmul.f32 %v2495, %v2495
      %v2528 = vmul.f32 %v2496, %v2496
      %v2529 = vmul.f32 %v2497, %v2497
      %v2530 = vmul.f32 %v2498, %v2498
      %v2531 = vmul.f32 %v2499, %v2499
      %v2532 = vmul.f32 %v2500, %v2500
      %v2533 = vmul.f32 %v2501, %v2501
      %v2534 = vmul.f32 %v2502, %v2502
      %v2535 = vmul.f32 %v2503, %v2503
      %v2536 = vmul.f32 %v2504, %v2504
      %v2537 = vmul.f32 %v2505, %v2505
      %v2538 = vmul.f32 %v2506, %v2506
      %v2539 = vmul.f32 %v2507, %v2507
      %v2540 = vmul.f32 %v2508, %v2508
      %v2541 = vmul.f32 %v2509, %v2509
      %v2542 = vmul.f32 %v2510, %v2510
      %v2543 = vmul.f32 %v2511, %v2511
      %v2544 = vadd.f32 %v2512, %v2514
      %v2545 = vadd.f32 %v2544, %v2516
      %v2546 = vadd.f32 %v2545, %v2518
      %v2547 = vadd.f32 %v2546, %v2520
      %v2548 = vadd.f32 %v2547, %v2522
      %v2549 = vadd.f32 %v2548, %v2524
      %v2550 = vadd.f32 %v2549, %v2526
      %v2551 = vadd.f32 %v2550, %v2528
      %v2552 = vadd.f32 %v2551, %v2530
      %v2553 = vadd.f32 %v2552, %v2532
      %v2554 = vadd.f32 %v2553, %v2534
      %v2555 = vadd.f32 %v2554, %v2536
      %v2556 = vadd.f32 %v2555, %v2538
      %v2557 = vadd.f32 %v2556, %v2540
      %v2558 = vadd.f32 %v2557, %v2542
      %v2559 = vadd.f32 %v2513, %v2515
      %v2560 = vadd.f32 %v2559, %v2517
      %v2561 = vadd.f32 %v2560, %v2519
      %v2562 = vadd.f32 %v2561, %v2521
      %v2563 = vadd.f32 %v2562, %v2523
      %v2564 = vadd.f32 %v2563, %v2525
      %v2565 = vadd.f32 %v2564, %v2527
      %v2566 = vadd.f32 %v2565, %v2529
      %v2567 = vadd.f32 %v2566, %v2531
      %v2568 = vadd.f32 %v2567, %v2533
      %v2569 = vadd.f32 %v2568, %v2535
      %v2570 = vadd.f32 %v2569, %v2537
      %v2571 = vadd.f32 %v2570, %v2539
      %v2572 = vadd.f32 %v2571, %v2541
      %v2573 = vadd.f32 %v2572, %v2543
      %v2574 = vadd.f32 %v2558, %v2573
      %v2575 = vrot.slane %v2574, 4
      %v2576 = vadd.f32 %v2574, %v2575
      %v2577 = vrot.slane %v2576, 2
      %v2578 = vadd.f32 %v2576, %v2577
      %v2579 = vrot.slane %v2578, 1
      %v2580 = vadd.f32 %v2578, %v2579
      %v2581 = vmul.f32 %v2580, 0.00390625
      %v2582 = vadd.f32 %v2581, 1e-05
      %v2583 = vrsqrt.pop %v2582
      %v2584 = vmul.f32 %v2583, %v2582
      %v2585 = vmul.f32 %v2584, %v2583
      %v2586 = vmul.f32 0.5, %v2585
      %v2587 = vsub.f32 1.5, %v2586
      %v2588 = vmul.f32 %v2583, %v2587
      %vm2589 = vweird.f32 %v2582
      %vm2590 = vweird.f32 %v2583
      %vm2591 = vmor %vm2589, %vm2590
      %v2592 = vsel %vm2591, %v2583, %v2588
      %v2593 = vmul.f32 %v2480, %v2592
      %v2594 = vmul.f32 %v2481, %v2592
      %v2595 = vmul.f32 %v2482, %v2592
      %v2596 = vmul.f32 %v2483, %v2592
      %v2597 = vmul.f32 %v2484, %v2592
      %v2598 = vmul.f32 %v2485, %v2592
      %v2599 = vmul.f32 %v2486, %v2592
      %v2600 = vmul.f32 %v2487, %v2592
      %v2601 = vmul.f32 %v2488, %v2592
      %v2602 = vmul.f32 %v2489, %v2592
      %v2603 = vmul.f32 %v2490, %v2592
      %v2604 = vmul.f32 %v2491, %v2592
      %v2605 = vmul.f32 %v2492, %v2592
      %v2606 = vmul.f32 %v2493, %v2592
      %v2607 = vmul.f32 %v2494, %v2592
      %v2608 = vmul.f32 %v2495, %v2592
      %v2609 = vmul.f32 %v2496, %v2592
      %v2610 = vmul.f32 %v2497, %v2592
      %v2611 = vmul.f32 %v2498, %v2592
      %v2612 = vmul.f32 %v2499, %v2592
      %v2613 = vmul.f32 %v2500, %v2592
      %v2614 = vmul.f32 %v2501, %v2592
      %v2615 = vmul.f32 %v2502, %v2592
      %v2616 = vmul.f32 %v2503, %v2592
      %v2617 = vmul.f32 %v2504, %v2592
      %v2618 = vmul.f32 %v2505, %v2592
      %v2619 = vmul.f32 %v2506, %v2592
      %v2620 = vmul.f32 %v2507, %v2592
      %v2621 = vmul.f32 %v2508, %v2592
      %v2622 = vmul.f32 %v2509, %v2592
      %v2623 = vmul.f32 %v2510, %v2592
      %v2624 = vmul.f32 %v2511, %v2592
      %v2625 = vmax.f32 %v2593, 0.0
      %v2626 = vmax.f32 %v2594, 0.0
      %v2627 = vmax.f32 %v2595, 0.0
      %v2628 = vmax.f32 %v2596, 0.0
      %v2629 = vmax.f32 %v2597, 0.0
      %v2630 = vmax.f32 %v2598, 0.0
      %v2631 = vmax.f32 %v2599, 0.0
      %v2632 = vmax.f32 %v2600, 0.0
      %v2633 = vmax.f32 %v2601, 0.0
      %v2634 = vmax.f32 %v2602, 0.0
      %v2635 = vmax.f32 %v2603, 0.0
      %v2636 = vmax.f32 %v2604, 0.0
      %v2637 = vmax.f32 %v2605, 0.0
      %v2638 = vmax.f32 %v2606, 0.0
      %v2639 = vmax.f32 %v2607, 0.0
      %v2640 = vmax.f32 %v2608, 0.0
      %v2641 = vmax.f32 %v2609, 0.0
      %v2642 = vmax.f32 %v2610, 0.0
      %v2643 = vmax.f32 %v2611, 0.0
      %v2644 = vmax.f32 %v2612, 0.0
      %v2645 = vmax.f32 %v2613, 0.0
      %v2646 = vmax.f32 %v2614, 0.0
      %v2647 = vmax.f32 %v2615, 0.0
      %v2648 = vmax.f32 %v2616, 0.0
      %v2649 = vmax.f32 %v2617, 0.0
      %v2650 = vmax.f32 %v2618, 0.0
      %v2651 = vmax.f32 %v2619, 0.0
      %v2652 = vmax.f32 %v2620, 0.0
      %v2653 = vmax.f32 %v2621, 0.0
      %v2654 = vmax.f32 %v2622, 0.0
      %v2655 = vmax.f32 %v2623, 0.0
      %v2656 = vmax.f32 %v2624, 0.0
      %s2657 = scalar_lea.vmem [#allocation3], 24
      %2658 = vst [vmem:[%s2657 + $0x1] sm:$0xff] %v2625
      %2659 = vst [vmem:[%s2657 + $0x9] sm:$0xff] %v2626
      %2660 = vst [vmem:[%s2657 + $0x19] sm:$0xff] %v2627
      %2661 = vst [vmem:[%s2657 + $0x21] sm:$0xff] %v2628
      %2662 = vst [vmem:[%s2657 + $0x31] sm:$0xff] %v2629
      %2663 = vst [vmem:[%s2657 + $0x39] sm:$0xff] %v2630
      %2664 = vst [vmem:[%s2657 + $0x49] sm:$0xff] %v2631
      %2665 = vst [vmem:[%s2657 + $0x51] sm:$0xff] %v2632
      %2666 = vst [vmem:[%s2657 + $0x61] sm:$0xff] %v2633
      %2667 = vst [vmem:[%s2657 + $0x69] sm:$0xff] %v2634
      %2668 = vst [vmem:[%s2657 + $0x79] sm:$0xff] %v2635
      %2669 = vst [vmem:[%s2657 + $0x81] sm:$0xff] %v2636
      %2670 = vst [vmem:[%s2657 + $0x91] sm:$0xff] %v2637
      %2671 = vst [vmem:[%s2657 + $0x99] sm:$0xff] %v2638
      %2672 = vst [vmem:[%s2657 + $0xa9] sm:$0xff] %v2639
      %2673 = vst [vmem:[%s2657 + $0xb1] sm:$0xff] %v2640
      %2674 = vst [vmem:[%s2657 + $0xc1] sm:$0xff] %v2641
      %2675 = vst [vmem:[%s2657 + $0xc9] sm:$0xff] %v2642
      %2676 = vst [vmem:[%s2657 + $0xd9] sm:$0xff] %v2643
      %2677 = vst [vmem:[%s2657 + $0xe1] sm:$0xff] %v2644
      %2678 = vst [vmem:[%s2657 + $0xf1] sm:$0xff] %v2645
      %2679 = vst [vmem:[%s2657 + $0xf9] sm:$0xff] %v2646
      %2680 = vst [vmem:[%s2657 + $0x109] sm:$0xff] %v2647
      %2681 = vst [vmem:[%s2657 + $0x111] sm:$0xff] %v2648
      %2682 = vst [vmem:[%s2657 + $0x121] sm:$0xff] %v2649
      %2683 = vst [vmem:[%s2657 + $0x129] sm:$0xff] %v2650
      %2684 = vst [vmem:[%s2657 + $0x139] sm:$0xff] %v2651
      %2685 = vst [vmem:[%s2657 + $0x141] sm:$0xff] %v2652
      %2686 = vst [vmem:[%s2657 + $0x151] sm:$0xff] %v2653
      %2687 = vst [vmem:[%s2657 + $0x159] sm:$0xff] %v2654
      %2688 = vst [vmem:[%s2657 + $0x169] sm:$0xff] %v2655
      %2689 = vst [vmem:[%s2657 + $0x171] sm:$0xff] %v2656
      %2690 = vst [vmem:[#allocation3 + $0x1] sm:$0xff] %v2627
      %2691 = vst [vmem:[#allocation3 + $0x9] sm:$0xff] %v2628
      %s2692 = scalar_lea.vmem [#allocation3], 408
      %2693 = vst [vmem:[%s2692 + $0x1] sm:$0xff] %v2653
      %2694 = vst [vmem:[%s2692 + $0x9] sm:$0xff] %v2654
      %v2695 = vld [vmem:[#allocation3 + $0x2] sm:$0x1]
      %v2696 = vld [vmem:[#allocation3 + $0x1a] sm:$0x1]
      %v2697 = vld [vmem:[#allocation3 + $0x32] sm:$0x1]
      %v2698 = vld [vmem:[#allocation3 + $0x4a] sm:$0x1]
      %v2699 = vld [vmem:[#allocation3 + $0x62] sm:$0x1]
      %v2700 = vld [vmem:[#allocation3 + $0x7a] sm:$0x1]
      %v2701 = vld [vmem:[#allocation3 + $0x92] sm:$0x1]
      %v2702 = vld [vmem:[#allocation3 + $0xaa] sm:$0x1]
      %v2703 = vld [vmem:[#allocation3 + $0xc2] sm:$0x1]
      %v2704 = vld [vmem:[#allocation3 + $0xda] sm:$0x1]
      %v2705 = vld [vmem:[#allocation3 + $0xf2] sm:$0x1]
      %v2706 = vld [vmem:[#allocation3 + $0x10a] sm:$0x1]
      %v2707 = vld [vmem:[#allocation3 + $0x122] sm:$0x1]
      %v2708 = vld [vmem:[#allocation3 + $0x13a] sm:$0x1]
      %v2709 = vld [vmem:[#allocation3 + $0x152] sm:$0x1]
      %v2710 = vld [vmem:[#allocation3 + $0x16a] sm:$0x1]
      %v2711 = vld [vmem:[#allocation3 + $0x182] sm:$0x1]
      %v2712 = vld [vmem:[#allocation3 + $0x19a] sm:$0x1]
      %2713 = vst [vmem:[#allocation3] sm:$0x1] %v2695
      %2714 = vst [vmem:[#allocation3 + $0x18] sm:$0x1] %v2696
      %2715 = vst [vmem:[#allocation3 + $0x30] sm:$0x1] %v2697
      %2716 = vst [vmem:[#allocation3 + $0x48] sm:$0x1] %v2698
      %2717 = vst [vmem:[#allocation3 + $0x60] sm:$0x1] %v2699
      %2718 = vst [vmem:[#allocation3 + $0x78] sm:$0x1] %v2700
      %2719 = vst [vmem:[#allocation3 + $0x90] sm:$0x1] %v2701
      %2720 = vst [vmem:[#allocation3 + $0xa8] sm:$0x1] %v2702
      %2721 = vst [vmem:[#allocation3 + $0xc0] sm:$0x1] %v2703
      %2722 = vst [vmem:[#allocation3 + $0xd8] sm:$0x1] %v2704
      %2723 = vst [vmem:[#allocation3 + $0xf0] sm:$0x1] %v2705
      %2724 = vst [vmem:[#allocation3 + $0x108] sm:$0x1] %v2706
      %2725 = vst [vmem:[#allocation3 + $0x120] sm:$0x1] %v2707
      %2726 = vst [vmem:[#allocation3 + $0x138] sm:$0x1] %v2708
      %2727 = vst [vmem:[#allocation3 + $0x150] sm:$0x1] %v2709
      %2728 = vst [vmem:[#allocation3 + $0x168] sm:$0x1] %v2710
      %2729 = vst [vmem:[#allocation3 + $0x180] sm:$0x1] %v2711
      %2730 = vst [vmem:[#allocation3 + $0x198] sm:$0x1] %v2712
      %v2731 = vld [vmem:[#allocation3 + $0xf] sm:$0x1]
      %v2732 = vld [vmem:[#allocation3 + $0x27] sm:$0x1]
      %v2733 = vld [vmem:[#allocation3 + $0x3f] sm:$0x1]
      %v2734 = vld [vmem:[#allocation3 + $0x57] sm:$0x1]
      %v2735 = vld [vmem:[#allocation3 + $0x6f] sm:$0x1]
      %v2736 = vld [vmem:[#allocation3 + $0x87] sm:$0x1]
      %v2737 = vld [vmem:[#allocation3 + $0x9f] sm:$0x1]
      %v2738 = vld [vmem:[#allocation3 + $0xb7] sm:$0x1]
      %v2739 = vld [vmem:[#allocation3 + $0xcf] sm:$0x1]
      %v2740 = vld [vmem:[#allocation3 + $0xe7] sm:$0x1]
      %v2741 = vld [vmem:[#allocation3 + $0xff] sm:$0x1]
      %v2742 = vld [vmem:[#allocation3 + $0x117] sm:$0x1]
      %v2743 = vld [vmem:[#allocation3 + $0x12f] sm:$0x1]
      %v2744 = vld [vmem:[#allocation3 + $0x147] sm:$0x1]
      %v2745 = vld [vmem:[#allocation3 + $0x15f] sm:$0x1]
      %v2746 = vld [vmem:[#allocation3 + $0x177] sm:$0x1]
      %v2747 = vld [vmem:[#allocation3 + $0x18f] sm:$0x1]
      %v2748 = vld [vmem:[#allocation3 + $0x1a7] sm:$0x1]
      %2749 = vst [vmem:[#allocation3 + $0x11] sm:$0x1] %v2731
      %2750 = vst [vmem:[#allocation3 + $0x29] sm:$0x1] %v2732
      %2751 = vst [vmem:[#allocation3 + $0x41] sm:$0x1] %v2733
      %2752 = vst [vmem:[#allocation3 + $0x59] sm:$0x1] %v2734
      %2753 = vst [vmem:[#allocation3 + $0x71] sm:$0x1] %v2735
      %2754 = vst [vmem:[#allocation3 + $0x89] sm:$0x1] %v2736
      %2755 = vst [vmem:[#allocation3 + $0xa1] sm:$0x1] %v2737
      %2756 = vst [vmem:[#allocation3 + $0xb9] sm:$0x1] %v2738
      %2757 = vst [vmem:[#allocation3 + $0xd1] sm:$0x1] %v2739
      %2758 = vst [vmem:[#allocation3 + $0xe9] sm:$0x1] %v2740
      %2759 = vst [vmem:[#allocation3 + $0x101] sm:$0x1] %v2741
      %2760 = vst [vmem:[#allocation3 + $0x119] sm:$0x1] %v2742
      %2761 = vst [vmem:[#allocation3 + $0x131] sm:$0x1] %v2743
      %2762 = vst [vmem:[#allocation3 + $0x149] sm:$0x1] %v2744
      %2763 = vst [vmem:[#allocation3 + $0x161] sm:$0x1] %v2745
      %2764 = vst [vmem:[#allocation3 + $0x179] sm:$0x1] %v2746
      %2765 = vst [vmem:[#allocation3 + $0x191] sm:$0x1] %v2747
      %2766 = vst [vmem:[#allocation3 + $0x1a9] sm:$0x1] %v2748
      %2767 = vst [vmem:[#allocation3 + $0x12] sm:$0x3f] 0.0
      %2768 = vst [vmem:[#allocation3 + $0x2a] sm:$0x3f] 0.0
      %2769 = vst [vmem:[#allocation3 + $0x42] sm:$0x3f] 0.0
      %2770 = vst [vmem:[#allocation3 + $0x5a] sm:$0x3f] 0.0
      %2771 = vst [vmem:[#allocation3 + $0x72] sm:$0x3f] 0.0
      %2772 = vst [vmem:[#allocation3 + $0x8a] sm:$0x3f] 0.0
      %2773 = vst [vmem:[#allocation3 + $0xa2] sm:$0x3f] 0.0
      %2774 = vst [vmem:[#allocation3 + $0xba] sm:$0x3f] 0.0
      %2775 = vst [vmem:[#allocation3 + $0xd2] sm:$0x3f] 0.0
      %2776 = vst [vmem:[#allocation3 + $0xea] sm:$0x3f] 0.0
      %2777 = vst [vmem:[#allocation3 + $0x102] sm:$0x3f] 0.0
      %2778 = vst [vmem:[#allocation3 + $0x11a] sm:$0x3f] 0.0
      %2779 = vst [vmem:[#allocation3 + $0x132] sm:$0x3f] 0.0
      %2780 = vst [vmem:[#allocation3 + $0x14a] sm:$0x3f] 0.0
      %2781 = vst [vmem:[#allocation3 + $0x162] sm:$0x3f] 0.0
      %2782 = vst [vmem:[#allocation3 + $0x17a] sm:$0x3f] 0.0
      %2783 = vst [vmem:[#allocation3 + $0x192] sm:$0x3f] 0.0
      %2784 = vst [vmem:[#allocation3 + $0x1aa] sm:$0x3f] 0.0
      %v2785 = vld [vmem:[#allocation3] sm:$0xff]
      %v2786 = vld [vmem:[#allocation3 + $0x8] sm:$0xff]
      %v2787 = vld [vmem:[#allocation3 + $0x10] sm:$0xff]
      %v2788 = vld [vmem:[#allocation3 + $0x18] sm:$0xff]
      %v2789 = vld [vmem:[#allocation3 + $0x20] sm:$0xff]
      %v2790 = vld [vmem:[#allocation3 + $0x28] sm:$0xff]
      %v2791 = vld [vmem:[#allocation3 + $0x30] sm:$0xff]
      %v2792 = vld [vmem:[#allocation3 + $0x38] sm:$0xff]
      %v2793 = vld [vmem:[#allocation3 + $0x40] sm:$0xff]
      %v2794 = vld [vmem:[#allocation3 + $0x48] sm:$0xff]
      %v2795 = vld [vmem:[#allocation3 + $0x50] sm:$0xff]
      %v2796 = vld [vmem:[#allocation3 + $0x58] sm:$0xff]
      %v2797 = vld [vmem:[#allocation3 + $0x60] sm:$0xff]
      %v2798 = vld [vmem:[#allocation3 + $0x68] sm:$0xff]
      %v2799 = vld [vmem:[#allocation3 + $0x70] sm:$0xff]
      %v2800 = vld [vmem:[#allocation3 + $0x78] sm:$0xff]
      %v2801 = vld [vmem:[#allocation3 + $0x80] sm:$0xff]
      %v2802 = vld [vmem:[#allocation3 + $0x88] sm:$0xff]
      %v2803 = vld [vmem:[#allocation3 + $0x90] sm:$0xff]
      %v2804 = vld [vmem:[#allocation3 + $0x98] sm:$0xff]
      %v2805 = vld [vmem:[#allocation3 + $0xa0] sm:$0xff]
      %v2806 = vld [vmem:[#allocation3 + $0xa8] sm:$0xff]
      %v2807 = vld [vmem:[#allocation3 + $0xb0] sm:$0xff]
      %v2808 = vld [vmem:[#allocation3 + $0xb8] sm:$0xff]
      %v2809 = vld [vmem:[#allocation3 + $0xc0] sm:$0xff]
      %v2810 = vld [vmem:[#allocation3 + $0xc8] sm:$0xff]
      %v2811 = vld [vmem:[#allocation3 + $0xd0] sm:$0xff]
      %v2812 = vld [vmem:[#allocation3 + $0xd8] sm:$0xff]
      %v2813 = vld [vmem:[#allocation3 + $0xe0] sm:$0xff]
      %v2814 = vld [vmem:[#allocation3 + $0xe8] sm:$0xff]
      %v2815 = vld [vmem:[#allocation3 + $0xf0] sm:$0xff]
      %v2816 = vld [vmem:[#allocation3 + $0xf8] sm:$0xff]
      %v2817 = vld [vmem:[#allocation3 + $0x100] sm:$0xff]
      %v2818 = vld [vmem:[#allocation3 + $0x108] sm:$0xff]
      %v2819 = vld [vmem:[#allocation3 + $0x110] sm:$0xff]
      %v2820 = vld [vmem:[#allocation3 + $0x118] sm:$0xff]
      %v2821 = vld [vmem:[#allocation3 + $0x120] sm:$0xff]
      %v2822 = vld [vmem:[#allocation3 + $0x128] sm:$0xff]
      %v2823 = vld [vmem:[#allocation3 + $0x130] sm:$0xff]
      %v2824 = vld [vmem:[#allocation3 + $0x138] sm:$0xff]
      %v2825 = vld [vmem:[#allocation3 + $0x140] sm:$0xff]
      %v2826 = vld [vmem:[#allocation3 + $0x148] sm:$0xff]
      %v2827 = vld [vmem:[#allocation3 + $0x150] sm:$0xff]
      %v2828 = vld [vmem:[#allocation3 + $0x158] sm:$0xff]
      %v2829 = vld [vmem:[#allocation3 + $0x160] sm:$0xff]
      %v2830 = vld [vmem:[#allocation3 + $0x168] sm:$0xff]
      %v2831 = vld [vmem:[#allocation3 + $0x170] sm:$0xff]
      %v2832 = vld [vmem:[#allocation3 + $0x178] sm:$0xff]
      %v2833 = vld [vmem:[%s2657] sm:$0xff]
      %v2834 = vld [vmem:[%s2657 + $0x8] sm:$0xff]
      %v2835 = vld [vmem:[%s2657 + $0x10] sm:$0xff]
      %v2836 = vld [vmem:[%s2657 + $0x18] sm:$0xff]
      %v2837 = vld [vmem:[%s2657 + $0x20] sm:$0xff]
      %v2838 = vld [vmem:[%s2657 + $0x28] sm:$0xff]
      %v2839 = vld [vmem:[%s2657 + $0x30] sm:$0xff]
      %v2840 = vld [vmem:[%s2657 + $0x38] sm:$0xff]
      %v2841 = vld [vmem:[%s2657 + $0x40] sm:$0xff]
      %v2842 = vld [vmem:[%s2657 + $0x48] sm:$0xff]
      %v2843 = vld [vmem:[%s2657 + $0x50] sm:$0xff]
      %v2844 = vld [vmem:[%s2657 + $0x58] sm:$0xff]
      %v2845 = vld [vmem:[%s2657 + $0x60] sm:$0xff]
      %v2846 = vld [vmem:[%s2657 + $0x68] sm:$0xff]
      %v2847 = vld [vmem:[%s2657 + $0x70] sm:$0xff]
      %v2848 = vld [vmem:[%s2657 + $0x78] sm:$0xff]
      %v2849 = vld [vmem:[%s2657 + $0x80] sm:$0xff]
      %v2850 = vld [vmem:[%s2657 + $0x88] sm:$0xff]
      %v2851 = vld [vmem:[%s2657 + $0x90] sm:$0xff]
      %v2852 = vld [vmem:[%s2657 + $0x98] sm:$0xff]
      %v2853 = vld [vmem:[%s2657 + $0xa0] sm:$0xff]
      %v2854 = vld [vmem:[%s2657 + $0xa8] sm:$0xff]
      %v2855 = vld [vmem:[%s2657 + $0xb0] sm:$0xff]
      %v2856 = vld [vmem:[%s2657 + $0xb8] sm:$0xff]
      %v2857 = vld [vmem:[%s2657 + $0xc0] sm:$0xff]
      %v2858 = vld [vmem:[%s2657 + $0xc8] sm:$0xff]
      %v2859 = vld [vmem:[%s2657 + $0xd0] sm:$0xff]
      %v2860 = vld [vmem:[%s2657 + $0xd8] sm:$0xff]
      %v2861 = vld [vmem:[%s2657 + $0xe0] sm:$0xff]
      %v2862 = vld [vmem:[%s2657 + $0xe8] sm:$0xff]
      %v2863 = vld [vmem:[%s2657 + $0xf0] sm:$0xff]
      %v2864 = vld [vmem:[%s2657 + $0xf8] sm:$0xff]
      %v2865 = vld [vmem:[%s2657 + $0x100] sm:$0xff]
      %v2866 = vld [vmem:[%s2657 + $0x108] sm:$0xff]
      %v2867 = vld [vmem:[%s2657 + $0x110] sm:$0xff]
      %v2868 = vld [vmem:[%s2657 + $0x118] sm:$0xff]
      %v2869 = vld [vmem:[%s2657 + $0x120] sm:$0xff]
      %v2870 = vld [vmem:[%s2657 + $0x128] sm:$0xff]
      %v2871 = vld [vmem:[%s2657 + $0x130] sm:$0xff]
      %v2872 = vld [vmem:[%s2657 + $0x138] sm:$0xff]
      %v2873 = vld [vmem:[%s2657 + $0x140] sm:$0xff]
      %v2874 = vld [vmem:[%s2657 + $0x148] sm:$0xff]
      %v2875 = vld [vmem:[%s2657 + $0x150] sm:$0xff]
      %v2876 = vld [vmem:[%s2657 + $0x158] sm:$0xff]
      %v2877 = vld [vmem:[%s2657 + $0x160] sm:$0xff]
      %v2878 = vld [vmem:[%s2657 + $0x168] sm:$0xff]
      %v2879 = vld [vmem:[%s2657 + $0x170] sm:$0xff]
      %v2880 = vld [vmem:[%s2657 + $0x178] sm:$0xff]
      %s2881 = scalar_lea.vmem [#allocation3], 48
      %v2882 = vld [vmem:[%s2881] sm:$0xff]
      %v2883 = vld [vmem:[%s2881 + $0x8] sm:$0xff]
      %v2884 = vld [vmem:[%s2881 + $0x10] sm:$0xff]
      %v2885 = vld [vmem:[%s2881 + $0x18] sm:$0xff]
      %v2886 = vld [vmem:[%s2881 + $0x20] sm:$0xff]
      %v2887 = vld [vmem:[%s2881 + $0x28] sm:$0xff]
      %v2888 = vld [vmem:[%s2881 + $0x30] sm:$0xff]
      %v2889 = vld [vmem:[%s2881 + $0x38] sm:$0xff]
      %v2890 = vld [vmem:[%s2881 + $0x40] sm:$0xff]
      %v2891 = vld [vmem:[%s2881 + $0x48] sm:$0xff]
      %v2892 = vld [vmem:[%s2881 + $0x50] sm:$0xff]
      %v2893 = vld [vmem:[%s2881 + $0x58] sm:$0xff]
      %v2894 = vld [vmem:[%s2881 + $0x60] sm:$0xff]
      %v2895 = vld [vmem:[%s2881 + $0x68] sm:$0xff]
      %v2896 = vld [vmem:[%s2881 + $0x70] sm:$0xff]
      %v2897 = vld [vmem:[%s2881 + $0x78] sm:$0xff]
      %v2898 = vld [vmem:[%s2881 + $0x80] sm:$0xff]
      %v2899 = vld [vmem:[%s2881 + $0x88] sm:$0xff]
      %v2900 = vld [vmem:[%s2881 + $0x90] sm:$0xff]
      %v2901 = vld [vmem:[%s2881 + $0x98] sm:$0xff]
      %v2902 = vld [vmem:[%s2881 + $0xa0] sm:$0xff]
      %v2903 = vld [vmem:[%s2881 + $0xa8] sm:$0xff]
      %v2904 = vld [vmem:[%s2881 + $0xb0] sm:$0xff]
      %v2905 = vld [vmem:[%s2881 + $0xb8] sm:$0xff]
      %v2906 = vld [vmem:[%s2881 + $0xc0] sm:$0xff]
      %v2907 = vld [vmem:[%s2881 + $0xc8] sm:$0xff]
      %v2908 = vld [vmem:[%s2881 + $0xd0] sm:$0xff]
      %v2909 = vld [vmem:[%s2881 + $0xd8] sm:$0xff]
      %v2910 = vld [vmem:[%s2881 + $0xe0] sm:$0xff]
      %v2911 = vld [vmem:[%s2881 + $0xe8] sm:$0xff]
      %v2912 = vld [vmem:[%s2881 + $0xf0] sm:$0xff]
      %v2913 = vld [vmem:[%s2881 + $0xf8] sm:$0xff]
      %v2914 = vld [vmem:[%s2881 + $0x100] sm:$0xff]
      %v2915 = vld [vmem:[%s2881 + $0x108] sm:$0xff]
      %v2916 = vld [vmem:[%s2881 + $0x110] sm:$0xff]
      %v2917 = vld [vmem:[%s2881 + $0x118] sm:$0xff]
      %v2918 = vld [vmem:[%s2881 + $0x120] sm:$0xff]
      %v2919 = vld [vmem:[%s2881 + $0x128] sm:$0xff]
      %v2920 = vld [vmem:[%s2881 + $0x130] sm:$0xff]
      %v2921 = vld [vmem:[%s2881 + $0x138] sm:$0xff]
      %v2922 = vld [vmem:[%s2881 + $0x140] sm:$0xff]
      %v2923 = vld [vmem:[%s2881 + $0x148] sm:$0xff]
      %v2924 = vld [vmem:[%s2881 + $0x150] sm:$0xff]
      %v2925 = vld [vmem:[%s2881 + $0x158] sm:$0xff]
      %v2926 = vld [vmem:[%s2881 + $0x160] sm:$0xff]
      %v2927 = vld [vmem:[%s2881 + $0x168] sm:$0xff]
      %v2928 = vld [vmem:[%s2881 + $0x170] sm:$0xff]
      %v2929 = vld [vmem:[%s2881 + $0x178] sm:$0xff]
      %v2930 = vld [vmem:[%s2] sm:$0xff]
      %v2931 = vld [vmem:[%s2 + $0x8] sm:$0xff]
      %v2932 = vld [vmem:[%s2 + $0x10] sm:$0xff]
      %v2933 = vld [vmem:[%s2 + $0x18] sm:$0xff]
      %v2934 = vld [vmem:[%s2 + $0x20] sm:$0xff]
      %v2935 = vld [vmem:[%s2 + $0x28] sm:$0xff]
      %v2936 = vld [vmem:[%s2 + $0x30] sm:$0xff]
      %v2937 = vld [vmem:[%s2 + $0x38] sm:$0xff]
      %v2938 = vld [vmem:[%s2 + $0x40] sm:$0xff]
      %v2939 = vld [vmem:[%s2 + $0x48] sm:$0xff]
      %v2940 = vld [vmem:[%s2 + $0x50] sm:$0xff]
      %v2941 = vld [vmem:[%s2 + $0x58] sm:$0xff]
      %v2942 = vld [vmem:[%s2 + $0x60] sm:$0xff]
      %v2943 = vld [vmem:[%s2 + $0x68] sm:$0xff]
      %v2944 = vld [vmem:[%s2 + $0x70] sm:$0xff]
      %v2945 = vld [vmem:[%s2 + $0x78] sm:$0xff]
      %v2946 = vld [vmem:[%s2 + $0x80] sm:$0xff]
      %v2947 = vld [vmem:[%s2 + $0x88] sm:$0xff]
      %v2948 = vld [vmem:[%s2 + $0x90] sm:$0xff]
      %v2949 = vld [vmem:[%s2 + $0x98] sm:$0xff]
      %v2950 = vld [vmem:[%s2 + $0xa0] sm:$0xff]
      %v2951 = vld [vmem:[%s2 + $0xa8] sm:$0xff]
      %v2952 = vld [vmem:[%s2 + $0xb0] sm:$0xff]
      %v2953 = vld [vmem:[%s2 + $0xb8] sm:$0xff]
      %v2954 = vld [vmem:[%s2 + $0xc0] sm:$0xff]
      %v2955 = vld [vmem:[%s2 + $0xc8] sm:$0xff]
      %v2956 = vld [vmem:[%s2 + $0xd0] sm:$0xff]
      %v2957 = vld [vmem:[%s2 + $0xd8] sm:$0xff]
      %v2958 = vld [vmem:[%s2 + $0xe0] sm:$0xff]
      %v2959 = vld [vmem:[%s2 + $0xe8] sm:$0xff]
      %v2960 = vld [vmem:[%s2 + $0xf0] sm:$0xff]
      %v2961 = vld [vmem:[%s2 + $0xf8] sm:$0xff]
      %v2962 = vld [vmem:[%s2 + $0x100] sm:$0xff]
      %v2963 = vld [vmem:[%s2 + $0x108] sm:$0xff]
      %v2964 = vld [vmem:[%s2 + $0x110] sm:$0xff]
      %v2965 = vld [vmem:[%s2 + $0x118] sm:$0xff]
      %v2966 = vld [vmem:[%s2 + $0x120] sm:$0xff]
      %v2967 = vld [vmem:[%s2 + $0x128] sm:$0xff]
      %v2968 = vld [vmem:[%s2 + $0x130] sm:$0xff]
      %v2969 = vld [vmem:[%s2 + $0x138] sm:$0xff]
      %v2970 = vld [vmem:[%s2 + $0x140] sm:$0xff]
      %v2971 = vld [vmem:[%s2 + $0x148] sm:$0xff]
      %v2972 = vld [vmem:[%s2 + $0x150] sm:$0xff]
      %v2973 = vld [vmem:[%s2 + $0x158] sm:$0xff]
      %v2974 = vld [vmem:[%s2 + $0x160] sm:$0xff]
      %v2975 = vld [vmem:[%s2 + $0x168] sm:$0xff]
      %v2976 = vld [vmem:[%s2 + $0x170] sm:$0xff]
      %v2977 = vld [vmem:[%s2 + $0x178] sm:$0xff]
      %2978 = vmatpush.msra.mxu0 %v2945
      %2979 = vmatpush.msra.mxu0 %v2944
      %2980 = vmatpush.msra.mxu0 %v2943
      %2981 = vmatpush.msra.mxu0 %v2942
      %2982 = vmatpush.msra.mxu0 %v2941
      %2983 = vmatpush.msra.mxu0 %v2940
      %2984 = vmatpush.msra.mxu0 %v2939
      %2985 = vmatpush.msra.mxu0 %v2938
      %2986 = vmatpush.msra.mxu0 %v2937
      %2987 = vmatpush.msra.mxu0 %v2936
      %2988 = vmatpush.msra.mxu0 %v2935
      %2989 = vmatpush.msra.mxu0 %v2934
      %2990 = vmatpush.msra.mxu0 %v2933
      %2991 = vmatpush.msra.mxu0 %v2932
      %2992 = vmatpush.msra.mxu0 %v2931
      %2993 = vmatpush.msra.mxu0 %v2930
      %2994 = vmatmul.f32.gmra.mxu0 %v2785
      %v2995 = vpop.f32.mrf.mxu0
      %v2996 = vadd.f32 0.0, %v2995
      %2997 = vmatmul.f32.gmra.mxu0 %v2786
      %v2998 = vpop.f32.mrf.mxu0
      %v2999 = vadd.f32 0.0, %v2998
      %3000 = vmatmul.f32.gmra.mxu0 %v2787
      %v3001 = vpop.f32.mrf.mxu0
      %3002 = vmatmul.f32.gmra.mxu0 %v2788
      %v3003 = vpop.f32.mrf.mxu0
      %v3004 = vadd.f32 0.0, %v3003
      %3005 = vmatmul.f32.gmra.mxu0 %v2789
      %v3006 = vpop.f32.mrf.mxu0
      %v3007 = vadd.f32 0.0, %v3006
      %3008 = vmatmul.f32.gmra.mxu0 %v2790
      %v3009 = vpop.f32.mrf.mxu0
      %3010 = vmatmul.f32.gmra.mxu0 %v2791
      %v3011 = vpop.f32.mrf.mxu0
      %v3012 = vadd.f32 0.0, %v3011
      %3013 = vmatmul.f32.gmra.mxu0 %v2792
      %v3014 = vpop.f32.mrf.mxu0
      %v3015 = vadd.f32 0.0, %v3014
      %3016 = vmatmul.f32.gmra.mxu0 %v2793
      %v3017 = vpop.f32.mrf.mxu0
      %3018 = vmatmul.f32.gmra.mxu0 %v2794
      %v3019 = vpop.f32.mrf.mxu0
      %v3020 = vadd.f32 0.0, %v3019
      %3021 = vmatmul.f32.gmra.mxu0 %v2795
      %v3022 = vpop.f32.mrf.mxu0
      %v3023 = vadd.f32 0.0, %v3022
      %3024 = vmatmul.f32.gmra.mxu0 %v2796
      %v3025 = vpop.f32.mrf.mxu0
      %3026 = vmatmul.f32.gmra.mxu0 %v2797
      %v3027 = vpop.f32.mrf.mxu0
      %v3028 = vadd.f32 0.0, %v3027
      %3029 = vmatmul.f32.gmra.mxu0 %v2798
      %v3030 = vpop.f32.mrf.mxu0
      %v3031 = vadd.f32 0.0, %v3030
      %3032 = vmatmul.f32.gmra.mxu0 %v2799
      %v3033 = vpop.f32.mrf.mxu0
      %3034 = vmatmul.f32.gmra.mxu0 %v2800
      %v3035 = vpop.f32.mrf.mxu0
      %v3036 = vadd.f32 0.0, %v3035
      %3037 = vmatmul.f32.gmra.mxu0 %v2801
      %v3038 = vpop.f32.mrf.mxu0
      %v3039 = vadd.f32 0.0, %v3038
      %3040 = vmatmul.f32.gmra.mxu0 %v2802
      %v3041 = vpop.f32.mrf.mxu0
      %3042 = vmatmul.f32.gmra.mxu0 %v2803
      %v3043 = vpop.f32.mrf.mxu0
      %v3044 = vadd.f32 0.0, %v3043
      %3045 = vmatmul.f32.gmra.mxu0 %v2804
      %v3046 = vpop.f32.mrf.mxu0
      %v3047 = vadd.f32 0.0, %v3046
      %3048 = vmatmul.f32.gmra.mxu0 %v2805
      %v3049 = vpop.f32.mrf.mxu0
      %3050 = vmatmul.f32.gmra.mxu0 %v2806
      %v3051 = vpop.f32.mrf.mxu0
      %v3052 = vadd.f32 0.0, %v3051
      %3053 = vmatmul.f32.gmra.mxu0 %v2807
      %v3054 = vpop.f32.mrf.mxu0
      %v3055 = vadd.f32 0.0, %v3054
      %3056 = vmatmul.f32.gmra.mxu0 %v2808
      %v3057 = vpop.f32.mrf.mxu0
      %3058 = vmatmul.f32.gmra.mxu0 %v2809
      %v3059 = vpop.f32.mrf.mxu0
      %v3060 = vadd.f32 0.0, %v3059
      %3061 = vmatmul.f32.gmra.mxu0 %v2810
      %v3062 = vpop.f32.mrf.mxu0
      %v3063 = vadd.f32 0.0, %v3062
      %3064 = vmatmul.f32.gmra.mxu0 %v2811
      %v3065 = vpop.f32.mrf.mxu0
      %3066 = vmatmul.f32.gmra.mxu0 %v2812
      %v3067 = vpop.f32.mrf.mxu0
      %v3068 = vadd.f32 0.0, %v3067
      %3069 = vmatmul.f32.gmra.mxu0 %v2813
      %v3070 = vpop.f32.mrf.mxu0
      %v3071 = vadd.f32 0.0, %v3070
      %3072 = vmatmul.f32.gmra.mxu0 %v2814
      %v3073 = vpop.f32.mrf.mxu0
      %3074 = vmatmul.f32.gmra.mxu0 %v2815
      %v3075 = vpop.f32.mrf.mxu0
      %v3076 = vadd.f32 0.0, %v3075
      %3077 = vmatmul.f32.gmra.mxu0 %v2816
      %v3078 = vpop.f32.mrf.mxu0
      %v3079 = vadd.f32 0.0, %v3078
      %3080 = vmatmul.f32.gmra.mxu0 %v2817
      %v3081 = vpop.f32.mrf.mxu0
      %3082 = vmatmul.f32.gmra.mxu0 %v2818
      %v3083 = vpop.f32.mrf.mxu0
      %v3084 = vadd.f32 0.0, %v3083
      %3085 = vmatmul.f32.gmra.mxu0 %v2819
      %v3086 = vpop.f32.mrf.mxu0
      %v3087 = vadd.f32 0.0, %v3086
      %3088 = vmatmul.f32.gmra.mxu0 %v2820
      %v3089 = vpop.f32.mrf.mxu0
      %3090 = vmatmul.f32.gmra.mxu0 %v2821
      %v3091 = vpop.f32.mrf.mxu0
      %v3092 = vadd.f32 0.0, %v3091
      %3093 = vmatmul.f32.gmra.mxu0 %v2822
      %v3094 = vpop.f32.mrf.mxu0
      %v3095 = vadd.f32 0.0, %v3094
      %3096 = vmatmul.f32.gmra.mxu0 %v2823
      %v3097 = vpop.f32.mrf.mxu0
      %3098 = vmatmul.f32.gmra.mxu0 %v2824
      %v3099 = vpop.f32.mrf.mxu0
      %v3100 = vadd.f32 0.0, %v3099
      %3101 = vmatmul.f32.gmra.mxu0 %v2825
      %v3102 = vpop.f32.mrf.mxu0
      %v3103 = vadd.f32 0.0, %v3102
      %3104 = vmatmul.f32.gmra.mxu0 %v2826
      %v3105 = vpop.f32.mrf.mxu0
      %3106 = vmatmul.f32.gmra.mxu0 %v2827
      %v3107 = vpop.f32.mrf.mxu0
      %v3108 = vadd.f32 0.0, %v3107
      %3109 = vmatmul.f32.gmra.mxu0 %v2828
      %v3110 = vpop.f32.mrf.mxu0
      %v3111 = vadd.f32 0.0, %v3110
      %3112 = vmatmul.f32.gmra.mxu0 %v2829
      %v3113 = vpop.f32.mrf.mxu0
      %3114 = vmatmul.f32.gmra.mxu0 %v2830
      %v3115 = vpop.f32.mrf.mxu0
      %v3116 = vadd.f32 0.0, %v3115
      %3117 = vmatmul.f32.gmra.mxu0 %v2831
      %v3118 = vpop.f32.mrf.mxu0
      %v3119 = vadd.f32 0.0, %v3118
      %3120 = vmatmul.f32.gmra.mxu0 %v2832
      %v3121 = vpop.f32.mrf.mxu0
      %3122 = vdwg.mxu0
      %3123 = vmatpush.msra.mxu0 %v2961
      %3124 = vmatpush.msra.mxu0 %v2960
      %3125 = vmatpush.msra.mxu0 %v2959
      %3126 = vmatpush.msra.mxu0 %v2958
      %3127 = vmatpush.msra.mxu0 %v2957
      %3128 = vmatpush.msra.mxu0 %v2956
      %3129 = vmatpush.msra.mxu0 %v2955
      %3130 = vmatpush.msra.mxu0 %v2954
      %3131 = vmatpush.msra.mxu0 %v2953
      %3132 = vmatpush.msra.mxu0 %v2952
      %3133 = vmatpush.msra.mxu0 %v2951
      %3134 = vmatpush.msra.mxu0 %v2950
      %3135 = vmatpush.msra.mxu0 %v2949
      %3136 = vmatpush.msra.mxu0 %v2948
      %3137 = vmatpush.msra.mxu0 %v2947
      %3138 = vmatpush.msra.mxu0 %v2946
      %3139 = vmatmul.f32.gmra.mxu0 %v2833
      %v3140 = vpop.f32.mrf.mxu0
      %v3141 = vadd.f32 %v2996, %v3140
      %3142 = vmatmul.f32.gmra.mxu0 %v2834
      %v3143 = vpop.f32.mrf.mxu0
      %v3144 = vadd.f32 %v2999, %v3143
      %3145 = vmatmul.f32.gmra.mxu0 %v2835
      %v3146 = vpop.f32.mrf.mxu0
      %3147 = vmatmul.f32.gmra.mxu0 %v2836
      %v3148 = vpop.f32.mrf.mxu0
      %v3149 = vadd.f32 %v3004, %v3148
      %3150 = vmatmul.f32.gmra.mxu0 %v2837
      %v3151 = vpop.f32.mrf.mxu0
      %v3152 = vadd.f32 %v3007, %v3151
      %3153 = vmatmul.f32.gmra.mxu0 %v2838
      %v3154 = vpop.f32.mrf.mxu0
      %3155 = vmatmul.f32.gmra.mxu0 %v2839
      %v3156 = vpop.f32.mrf.mxu0
      %v3157 = vadd.f32 %v3012, %v3156
      %3158 = vmatmul.f32.gmra.mxu0 %v2840
      %v3159 = vpop.f32.mrf.mxu0
      %v3160 = vadd.f32 %v3015, %v3159
      %3161 = vmatmul.f32.gmra.mxu0 %v2841
      %v3162 = vpop.f32.mrf.mxu0
      %3163 = vmatmul.f32.gmra.mxu0 %v2842
      %v3164 = vpop.f32.mrf.mxu0
      %v3165 = vadd.f32 %v3020, %v3164
      %3166 = vmatmul.f32.gmra.mxu0 %v2843
      %v3167 = vpop.f32.mrf.mxu0
      %v3168 = vadd.f32 %v3023, %v3167
      %3169 = vmatmul.f32.gmra.mxu0 %v2844
      %v3170 = vpop.f32.mrf.mxu0
      %3171 = vmatmul.f32.gmra.mxu0 %v2845
      %v3172 = vpop.f32.mrf.mxu0
      %v3173 = vadd.f32 %v3028, %v3172
      %3174 = vmatmul.f32.gmra.mxu0 %v2846
      %v3175 = vpop.f32.mrf.mxu0
      %v3176 = vadd.f32 %v3031, %v3175
      %3177 = vmatmul.f32.gmra.mxu0 %v2847
      %v3178 = vpop.f32.mrf.mxu0
      %3179 = vmatmul.f32.gmra.mxu0 %v2848
      %v3180 = vpop.f32.mrf.mxu0
      %v3181 = vadd.f32 %v3036, %v3180
      %3182 = vmatmul.f32.gmra.mxu0 %v2849
      %v3183 = vpop.f32.mrf.mxu0
      %v3184 = vadd.f32 %v3039, %v3183
      %3185 = vmatmul.f32.gmra.mxu0 %v2850
      %v3186 = vpop.f32.mrf.mxu0
      %3187 = vmatmul.f32.gmra.mxu0 %v2851
      %v3188 = vpop.f32.mrf.mxu0
      %v3189 = vadd.f32 %v3044, %v3188
      %3190 = vmatmul.f32.gmra.mxu0 %v2852
      %v3191 = vpop.f32.mrf.mxu0
      %v3192 = vadd.f32 %v3047, %v3191
      %3193 = vmatmul.f32.gmra.mxu0 %v2853
      %v3194 = vpop.f32.mrf.mxu0
      %3195 = vmatmul.f32.gmra.mxu0 %v2854
      %v3196 = vpop.f32.mrf.mxu0
      %v3197 = vadd.f32 %v3052, %v3196
      %3198 = vmatmul.f32.gmra.mxu0 %v2855
      %v3199 = vpop.f32.mrf.mxu0
      %v3200 = vadd.f32 %v3055, %v3199
      %3201 = vmatmul.f32.gmra.mxu0 %v2856
      %v3202 = vpop.f32.mrf.mxu0
      %3203 = vmatmul.f32.gmra.mxu0 %v2857
      %v3204 = vpop.f32.mrf.mxu0
      %v3205 = vadd.f32 %v3060, %v3204
      %3206 = vmatmul.f32.gmra.mxu0 %v2858
      %v3207 = vpop.f32.mrf.mxu0
      %v3208 = vadd.f32 %v3063, %v3207
      %3209 = vmatmul.f32.gmra.mxu0 %v2859
      %v3210 = vpop.f32.mrf.mxu0
      %3211 = vmatmul.f32.gmra.mxu0 %v2860
      %v3212 = vpop.f32.mrf.mxu0
      %v3213 = vadd.f32 %v3068, %v3212
      %3214 = vmatmul.f32.gmra.mxu0 %v2861
      %v3215 = vpop.f32.mrf.mxu0
      %v3216 = vadd.f32 %v3071, %v3215
      %3217 = vmatmul.f32.gmra.mxu0 %v2862
      %v3218 = vpop.f32.mrf.mxu0
      %3219 = vmatmul.f32.gmra.mxu0 %v2863
      %v3220 = vpop.f32.mrf.mxu0
      %v3221 = vadd.f32 %v3076, %v3220
      %3222 = vmatmul.f32.gmra.mxu0 %v2864
      %v3223 = vpop.f32.mrf.mxu0
      %v3224 = vadd.f32 %v3079, %v3223
      %3225 = vmatmul.f32.gmra.mxu0 %v2865
      %v3226 = vpop.f32.mrf.mxu0
      %3227 = vmatmul.f32.gmra.mxu0 %v2866
      %v3228 = vpop.f32.mrf.mxu0
      %v3229 = vadd.f32 %v3084, %v3228
      %3230 = vmatmul.f32.gmra.mxu0 %v2867
      %v3231 = vpop.f32.mrf.mxu0
      %v3232 = vadd.f32 %v3087, %v3231
      %3233 = vmatmul.f32.gmra.mxu0 %v2868
      %v3234 = vpop.f32.mrf.mxu0
      %3235 = vmatmul.f32.gmra.mxu0 %v2869
      %v3236 = vpop.f32.mrf.mxu0
      %v3237 = vadd.f32 %v3092, %v3236
      %3238 = vmatmul.f32.gmra.mxu0 %v2870
      %v3239 = vpop.f32.mrf.mxu0
      %v3240 = vadd.f32 %v3095, %v3239
      %3241 = vmatmul.f32.gmra.mxu0 %v2871
      %v3242 = vpop.f32.mrf.mxu0
      %3243 = vmatmul.f32.gmra.mxu0 %v2872
      %v3244 = vpop.f32.mrf.mxu0
      %v3245 = vadd.f32 %v3100, %v3244
      %3246 = vmatmul.f32.gmra.mxu0 %v2873
      %v3247 = vpop.f32.mrf.mxu0
      %v3248 = vadd.f32 %v3103, %v3247
      %3249 = vmatmul.f32.gmra.mxu0 %v2874
      %v3250 = vpop.f32.mrf.mxu0
      %3251 = vmatmul.f32.gmra.mxu0 %v2875
      %v3252 = vpop.f32.mrf.mxu0
      %v3253 = vadd.f32 %v3108, %v3252
      %3254 = vmatmul.f32.gmra.mxu0 %v2876
      %v3255 = vpop.f32.mrf.mxu0
      %v3256 = vadd.f32 %v3111, %v3255
      %3257 = vmatmul.f32.gmra.mxu0 %v2877
      %v3258 = vpop.f32.mrf.mxu0
      %3259 = vmatmul.f32.gmra.mxu0 %v2878
      %v3260 = vpop.f32.mrf.mxu0
      %v3261 = vadd.f32 %v3116, %v3260
      %3262 = vmatmul.f32.gmra.mxu0 %v2879
      %v3263 = vpop.f32.mrf.mxu0
      %v3264 = vadd.f32 %v3119, %v3263
      %3265 = vmatmul.f32.gmra.mxu0 %v2880
      %v3266 = vpop.f32.mrf.mxu0
      %3267 = vdwg.mxu0
      %3268 = vmatpush.msra.mxu0 %v2977
      %3269 = vmatpush.msra.mxu0 %v2976
      %3270 = vmatpush.msra.mxu0 %v2975
      %3271 = vmatpush.msra.mxu0 %v2974
      %3272 = vmatpush.msra.mxu0 %v2973
      %3273 = vmatpush.msra.mxu0 %v2972
      %3274 = vmatpush.msra.mxu0 %v2971
      %3275 = vmatpush.msra.mxu0 %v2970
      %3276 = vmatpush.msra.mxu0 %v2969
      %3277 = vmatpush.msra.mxu0 %v2968
      %3278 = vmatpush.msra.mxu0 %v2967
      %3279 = vmatpush.msra.mxu0 %v2966
      %3280 = vmatpush.msra.mxu0 %v2965
      %3281 = vmatpush.msra.mxu0 %v2964
      %3282 = vmatpush.msra.mxu0 %v2963
      %3283 = vmatpush.msra.mxu0 %v2962
      %3284 = vmatmul.f32.gmra.mxu0 %v2882
      %v3285 = vpop.f32.mrf.mxu0
      %v3286 = vadd.f32 %v3141, %v3285
      %3287 = vmatmul.f32.gmra.mxu0 %v2883
      %v3288 = vpop.f32.mrf.mxu0
      %v3289 = vadd.f32 %v3144, %v3288
      %3290 = vmatmul.f32.gmra.mxu0 %v2884
      %v3291 = vpop.f32.mrf.mxu0
      %3292 = vmatmul.f32.gmra.mxu0 %v2885
      %v3293 = vpop.f32.mrf.mxu0
      %v3294 = vadd.f32 %v3149, %v3293
      %3295 = vmatmul.f32.gmra.mxu0 %v2886
      %v3296 = vpop.f32.mrf.mxu0
      %v3297 = vadd.f32 %v3152, %v3296
      %3298 = vmatmul.f32.gmra.mxu0 %v2887
      %v3299 = vpop.f32.mrf.mxu0
      %3300 = vmatmul.f32.gmra.mxu0 %v2888
      %v3301 = vpop.f32.mrf.mxu0
      %v3302 = vadd.f32 %v3157, %v3301
      %3303 = vmatmul.f32.gmra.mxu0 %v2889
      %v3304 = vpop.f32.mrf.mxu0
      %v3305 = vadd.f32 %v3160, %v3304
      %3306 = vmatmul.f32.gmra.mxu0 %v2890
      %v3307 = vpop.f32.mrf.mxu0
      %3308 = vmatmul.f32.gmra.mxu0 %v2891
      %v3309 = vpop.f32.mrf.mxu0
      %v3310 = vadd.f32 %v3165, %v3309
      %3311 = vmatmul.f32.gmra.mxu0 %v2892
      %v3312 = vpop.f32.mrf.mxu0
      %v3313 = vadd.f32 %v3168, %v3312
      %3314 = vmatmul.f32.gmra.mxu0 %v2893
      %v3315 = vpop.f32.mrf.mxu0
      %3316 = vmatmul.f32.gmra.mxu0 %v2894
      %v3317 = vpop.f32.mrf.mxu0
      %v3318 = vadd.f32 %v3173, %v3317
      %3319 = vmatmul.f32.gmra.mxu0 %v2895
      %v3320 = vpop.f32.mrf.mxu0
      %v3321 = vadd.f32 %v3176, %v3320
      %3322 = vmatmul.f32.gmra.mxu0 %v2896
      %v3323 = vpop.f32.mrf.mxu0
      %3324 = vmatmul.f32.gmra.mxu0 %v2897
      %v3325 = vpop.f32.mrf.mxu0
      %v3326 = vadd.f32 %v3181, %v3325
      %3327 = vmatmul.f32.gmra.mxu0 %v2898
      %v3328 = vpop.f32.mrf.mxu0
      %v3329 = vadd.f32 %v3184, %v3328
      %3330 = vmatmul.f32.gmra.mxu0 %v2899
      %v3331 = vpop.f32.mrf.mxu0
      %3332 = vmatmul.f32.gmra.mxu0 %v2900
      %v3333 = vpop.f32.mrf.mxu0
      %v3334 = vadd.f32 %v3189, %v3333
      %3335 = vmatmul.f32.gmra.mxu0 %v2901
      %v3336 = vpop.f32.mrf.mxu0
      %v3337 = vadd.f32 %v3192, %v3336
      %3338 = vmatmul.f32.gmra.mxu0 %v2902
      %v3339 = vpop.f32.mrf.mxu0
      %3340 = vmatmul.f32.gmra.mxu0 %v2903
      %v3341 = vpop.f32.mrf.mxu0
      %v3342 = vadd.f32 %v3197, %v3341
      %3343 = vmatmul.f32.gmra.mxu0 %v2904
      %v3344 = vpop.f32.mrf.mxu0
      %v3345 = vadd.f32 %v3200, %v3344
      %3346 = vmatmul.f32.gmra.mxu0 %v2905
      %v3347 = vpop.f32.mrf.mxu0
      %3348 = vmatmul.f32.gmra.mxu0 %v2906
      %v3349 = vpop.f32.mrf.mxu0
      %v3350 = vadd.f32 %v3205, %v3349
      %3351 = vmatmul.f32.gmra.mxu0 %v2907
      %v3352 = vpop.f32.mrf.mxu0
      %v3353 = vadd.f32 %v3208, %v3352
      %3354 = vmatmul.f32.gmra.mxu0 %v2908
      %v3355 = vpop.f32.mrf.mxu0
      %3356 = vmatmul.f32.gmra.mxu0 %v2909
      %v3357 = vpop.f32.mrf.mxu0
      %v3358 = vadd.f32 %v3213, %v3357
      %3359 = vmatmul.f32.gmra.mxu0 %v2910
      %v3360 = vpop.f32.mrf.mxu0
      %v3361 = vadd.f32 %v3216, %v3360
      %3362 = vmatmul.f32.gmra.mxu0 %v2911
      %v3363 = vpop.f32.mrf.mxu0
      %3364 = vmatmul.f32.gmra.mxu0 %v2912
      %v3365 = vpop.f32.mrf.mxu0
      %v3366 = vadd.f32 %v3221, %v3365
      %3367 = vmatmul.f32.gmra.mxu0 %v2913
      %v3368 = vpop.f32.mrf.mxu0
      %v3369 = vadd.f32 %v3224, %v3368
      %3370 = vmatmul.f32.gmra.mxu0 %v2914
      %v3371 = vpop.f32.mrf.mxu0
      %3372 = vmatmul.f32.gmra.mxu0 %v2915
      %v3373 = vpop.f32.mrf.mxu0
      %v3374 = vadd.f32 %v3229, %v3373
      %3375 = vmatmul.f32.gmra.mxu0 %v2916
      %v3376 = vpop.f32.mrf.mxu0
      %v3377 = vadd.f32 %v3232, %v3376
      %3378 = vmatmul.f32.gmra.mxu0 %v2917
      %v3379 = vpop.f32.mrf.mxu0
      %3380 = vmatmul.f32.gmra.mxu0 %v2918
      %v3381 = vpop.f32.mrf.mxu0
      %v3382 = vadd.f32 %v3237, %v3381
      %3383 = vmatmul.f32.gmra.mxu0 %v2919
      %v3384 = vpop.f32.mrf.mxu0
      %v3385 = vadd.f32 %v3240, %v3384
      %3386 = vmatmul.f32.gmra.mxu0 %v2920
      %v3387 = vpop.f32.mrf.mxu0
      %3388 = vmatmul.f32.gmra.mxu0 %v2921
      %v3389 = vpop.f32.mrf.mxu0
      %v3390 = vadd.f32 %v3245, %v3389
      %3391 = vmatmul.f32.gmra.mxu0 %v2922
      %v3392 = vpop.f32.mrf.mxu0
      %v3393 = vadd.f32 %v3248, %v3392
      %3394 = vmatmul.f32.gmra.mxu0 %v2923
      %v3395 = vpop.f32.mrf.mxu0
      %3396 = vmatmul.f32.gmra.mxu0 %v2924
      %v3397 = vpop.f32.mrf.mxu0
      %v3398 = vadd.f32 %v3253, %v3397
      %3399 = vmatmul.f32.gmra.mxu0 %v2925
      %v3400 = vpop.f32.mrf.mxu0
      %v3401 = vadd.f32 %v3256, %v3400
      %3402 = vmatmul.f32.gmra.mxu0 %v2926
      %v3403 = vpop.f32.mrf.mxu0
      %3404 = vmatmul.f32.gmra.mxu0 %v2927
      %v3405 = vpop.f32.mrf.mxu0
      %v3406 = vadd.f32 %v3261, %v3405
      %3407 = vmatmul.f32.gmra.mxu0 %v2928
      %v3408 = vpop.f32.mrf.mxu0
      %v3409 = vadd.f32 %v3264, %v3408
      %3410 = vmatmul.f32.gmra.mxu0 %v2929
      %v3411 = vpop.f32.mrf.mxu0
      %3412 = vdwg.mxu0
      %s3413 = scalar_lea.vmem %s2, 384
      %v3414 = vld [vmem:[%s3413] sm:$0xff]
      %v3415 = vld [vmem:[%s3413 + $0x8] sm:$0xff]
      %v3416 = vld [vmem:[%s3413 + $0x10] sm:$0xff]
      %v3417 = vld [vmem:[%s3413 + $0x18] sm:$0xff]
      %v3418 = vld [vmem:[%s3413 + $0x20] sm:$0xff]
      %v3419 = vld [vmem:[%s3413 + $0x28] sm:$0xff]
      %v3420 = vld [vmem:[%s3413 + $0x30] sm:$0xff]
      %v3421 = vld [vmem:[%s3413 + $0x38] sm:$0xff]
      %v3422 = vld [vmem:[%s3413 + $0x40] sm:$0xff]
      %v3423 = vld [vmem:[%s3413 + $0x48] sm:$0xff]
      %v3424 = vld [vmem:[%s3413 + $0x50] sm:$0xff]
      %v3425 = vld [vmem:[%s3413 + $0x58] sm:$0xff]
      %v3426 = vld [vmem:[%s3413 + $0x60] sm:$0xff]
      %v3427 = vld [vmem:[%s3413 + $0x68] sm:$0xff]
      %v3428 = vld [vmem:[%s3413 + $0x70] sm:$0xff]
      %v3429 = vld [vmem:[%s3413 + $0x78] sm:$0xff]
      %v3430 = vld [vmem:[%s3413 + $0x80] sm:$0xff]
      %v3431 = vld [vmem:[%s3413 + $0x88] sm:$0xff]
      %v3432 = vld [vmem:[%s3413 + $0x90] sm:$0xff]
      %v3433 = vld [vmem:[%s3413 + $0x98] sm:$0xff]
      %v3434 = vld [vmem:[%s3413 + $0xa0] sm:$0xff]
      %v3435 = vld [vmem:[%s3413 + $0xa8] sm:$0xff]
      %v3436 = vld [vmem:[%s3413 + $0xb0] sm:$0xff]
      %v3437 = vld [vmem:[%s3413 + $0xb8] sm:$0xff]
      %v3438 = vld [vmem:[%s3413 + $0xc0] sm:$0xff]
      %v3439 = vld [vmem:[%s3413 + $0xc8] sm:$0xff]
      %v3440 = vld [vmem:[%s3413 + $0xd0] sm:$0xff]
      %v3441 = vld [vmem:[%s3413 + $0xd8] sm:$0xff]
      %v3442 = vld [vmem:[%s3413 + $0xe0] sm:$0xff]
      %v3443 = vld [vmem:[%s3413 + $0xe8] sm:$0xff]
      %v3444 = vld [vmem:[%s3413 + $0xf0] sm:$0xff]
      %v3445 = vld [vmem:[%s3413 + $0xf8] sm:$0xff]
      %v3446 = vld [vmem:[%s3413 + $0x100] sm:$0xff]
      %v3447 = vld [vmem:[%s3413 + $0x108] sm:$0xff]
      %v3448 = vld [vmem:[%s3413 + $0x110] sm:$0xff]
      %v3449 = vld [vmem:[%s3413 + $0x118] sm:$0xff]
      %v3450 = vld [vmem:[%s3413 + $0x120] sm:$0xff]
      %v3451 = vld [vmem:[%s3413 + $0x128] sm:$0xff]
      %v3452 = vld [vmem:[%s3413 + $0x130] sm:$0xff]
      %v3453 = vld [vmem:[%s3413 + $0x138] sm:$0xff]
      %v3454 = vld [vmem:[%s3413 + $0x140] sm:$0xff]
      %v3455 = vld [vmem:[%s3413 + $0x148] sm:$0xff]
      %v3456 = vld [vmem:[%s3413 + $0x150] sm:$0xff]
      %v3457 = vld [vmem:[%s3413 + $0x158] sm:$0xff]
      %v3458 = vld [vmem:[%s3413 + $0x160] sm:$0xff]
      %v3459 = vld [vmem:[%s3413 + $0x168] sm:$0xff]
      %v3460 = vld [vmem:[%s3413 + $0x170] sm:$0xff]
      %v3461 = vld [vmem:[%s3413 + $0x178] sm:$0xff]
      %3462 = vmatpush.msra.mxu0 %v3429
      %3463 = vmatpush.msra.mxu0 %v3428
      %3464 = vmatpush.msra.mxu0 %v3427
      %3465 = vmatpush.msra.mxu0 %v3426
      %3466 = vmatpush.msra.mxu0 %v3425
      %3467 = vmatpush.msra.mxu0 %v3424
      %3468 = vmatpush.msra.mxu0 %v3423
      %3469 = vmatpush.msra.mxu0 %v3422
      %3470 = vmatpush.msra.mxu0 %v3421
      %3471 = vmatpush.msra.mxu0 %v3420
      %3472 = vmatpush.msra.mxu0 %v3419
      %3473 = vmatpush.msra.mxu0 %v3418
      %3474 = vmatpush.msra.mxu0 %v3417
      %3475 = vmatpush.msra.mxu0 %v3416
      %3476 = vmatpush.msra.mxu0 %v3415
      %3477 = vmatpush.msra.mxu0 %v3414
      %3478 = vmatmul.f32.gmra.mxu0 %v2785
      %v3479 = vpop.f32.mrf.mxu0
      %v3480 = vadd.f32 0.0, %v3479
      %3481 = vmatmul.f32.gmra.mxu0 %v2786
      %v3482 = vpop.f32.mrf.mxu0
      %v3483 = vadd.f32 0.0, %v3482
      %3484 = vmatmul.f32.gmra.mxu0 %v2787
      %v3485 = vpop.f32.mrf.mxu0
      %v3486 = vadd.f32 0.0, %v3485
      %3487 = vmatmul.f32.gmra.mxu0 %v2788
      %v3488 = vpop.f32.mrf.mxu0
      %v3489 = vadd.f32 0.0, %v3488
      %3490 = vmatmul.f32.gmra.mxu0 %v2789
      %v3491 = vpop.f32.mrf.mxu0
      %v3492 = vadd.f32 0.0, %v3491
      %3493 = vmatmul.f32.gmra.mxu0 %v2790
      %v3494 = vpop.f32.mrf.mxu0
      %v3495 = vadd.f32 0.0, %v3494
      %3496 = vmatmul.f32.gmra.mxu0 %v2791
      %v3497 = vpop.f32.mrf.mxu0
      %v3498 = vadd.f32 0.0, %v3497
      %3499 = vmatmul.f32.gmra.mxu0 %v2792
      %v3500 = vpop.f32.mrf.mxu0
      %v3501 = vadd.f32 0.0, %v3500
      %3502 = vmatmul.f32.gmra.mxu0 %v2793
      %v3503 = vpop.f32.mrf.mxu0
      %v3504 = vadd.f32 0.0, %v3503
      %3505 = vmatmul.f32.gmra.mxu0 %v2794
      %v3506 = vpop.f32.mrf.mxu0
      %v3507 = vadd.f32 0.0, %v3506
      %3508 = vmatmul.f32.gmra.mxu0 %v2795
      %v3509 = vpop.f32.mrf.mxu0
      %v3510 = vadd.f32 0.0, %v3509
      %3511 = vmatmul.f32.gmra.mxu0 %v2796
      %v3512 = vpop.f32.mrf.mxu0
      %v3513 = vadd.f32 0.0, %v3512
      %3514 = vmatmul.f32.gmra.mxu0 %v2797
      %v3515 = vpop.f32.mrf.mxu0
      %v3516 = vadd.f32 0.0, %v3515
      %3517 = vmatmul.f32.gmra.mxu0 %v2798
      %v3518 = vpop.f32.mrf.mxu0
      %v3519 = vadd.f32 0.0, %v3518
      %3520 = vmatmul.f32.gmra.mxu0 %v2799
      %v3521 = vpop.f32.mrf.mxu0
      %v3522 = vadd.f32 0.0, %v3521
      %3523 = vmatmul.f32.gmra.mxu0 %v2800
      %v3524 = vpop.f32.mrf.mxu0
      %v3525 = vadd.f32 0.0, %v3524
      %3526 = vmatmul.f32.gmra.mxu0 %v2801
      %v3527 = vpop.f32.mrf.mxu0
      %v3528 = vadd.f32 0.0, %v3527
      %3529 = vmatmul.f32.gmra.mxu0 %v2802
      %v3530 = vpop.f32.mrf.mxu0
      %v3531 = vadd.f32 0.0, %v3530
      %3532 = vmatmul.f32.gmra.mxu0 %v2803
      %v3533 = vpop.f32.mrf.mxu0
      %v3534 = vadd.f32 0.0, %v3533
      %3535 = vmatmul.f32.gmra.mxu0 %v2804
      %v3536 = vpop.f32.mrf.mxu0
      %v3537 = vadd.f32 0.0, %v3536
      %3538 = vmatmul.f32.gmra.mxu0 %v2805
      %v3539 = vpop.f32.mrf.mxu0
      %v3540 = vadd.f32 0.0, %v3539
      %3541 = vmatmul.f32.gmra.mxu0 %v2806
      %v3542 = vpop.f32.mrf.mxu0
      %v3543 = vadd.f32 0.0, %v3542
      %3544 = vmatmul.f32.gmra.mxu0 %v2807
      %v3545 = vpop.f32.mrf.mxu0
      %v3546 = vadd.f32 0.0, %v3545
      %3547 = vmatmul.f32.gmra.mxu0 %v2808
      %v3548 = vpop.f32.mrf.mxu0
      %v3549 = vadd.f32 0.0, %v3548
      %3550 = vmatmul.f32.gmra.mxu0 %v2809
      %v3551 = vpop.f32.mrf.mxu0
      %v3552 = vadd.f32 0.0, %v3551
      %3553 = vmatmul.f32.gmra.mxu0 %v2810
      %v3554 = vpop.f32.mrf.mxu0
      %v3555 = vadd.f32 0.0, %v3554
      %3556 = vmatmul.f32.gmra.mxu0 %v2811
      %v3557 = vpop.f32.mrf.mxu0
      %v3558 = vadd.f32 0.0, %v3557
      %3559 = vmatmul.f32.gmra.mxu0 %v2812
      %v3560 = vpop.f32.mrf.mxu0
      %v3561 = vadd.f32 0.0, %v3560
      %3562 = vmatmul.f32.gmra.mxu0 %v2813
      %v3563 = vpop.f32.mrf.mxu0
      %v3564 = vadd.f32 0.0, %v3563
      %3565 = vmatmul.f32.gmra.mxu0 %v2814
      %v3566 = vpop.f32.mrf.mxu0
      %v3567 = vadd.f32 0.0, %v3566
      %3568 = vmatmul.f32.gmra.mxu0 %v2815
      %v3569 = vpop.f32.mrf.mxu0
      %v3570 = vadd.f32 0.0, %v3569
      %3571 = vmatmul.f32.gmra.mxu0 %v2816
      %v3572 = vpop.f32.mrf.mxu0
      %v3573 = vadd.f32 0.0, %v3572
      %3574 = vmatmul.f32.gmra.mxu0 %v2817
      %v3575 = vpop.f32.mrf.mxu0
      %v3576 = vadd.f32 0.0, %v3575
      %3577 = vmatmul.f32.gmra.mxu0 %v2818
      %v3578 = vpop.f32.mrf.mxu0
      %v3579 = vadd.f32 0.0, %v3578
      %3580 = vmatmul.f32.gmra.mxu0 %v2819
      %v3581 = vpop.f32.mrf.mxu0
      %v3582 = vadd.f32 0.0, %v3581
      %3583 = vmatmul.f32.gmra.mxu0 %v2820
      %v3584 = vpop.f32.mrf.mxu0
      %v3585 = vadd.f32 0.0, %v3584
      %3586 = vmatmul.f32.gmra.mxu0 %v2821
      %v3587 = vpop.f32.mrf.mxu0
      %v3588 = vadd.f32 0.0, %v3587
      %3589 = vmatmul.f32.gmra.mxu0 %v2822
      %v3590 = vpop.f32.mrf.mxu0
      %v3591 = vadd.f32 0.0, %v3590
      %3592 = vmatmul.f32.gmra.mxu0 %v2823
      %v3593 = vpop.f32.mrf.mxu0
      %v3594 = vadd.f32 0.0, %v3593
      %3595 = vmatmul.f32.gmra.mxu0 %v2824
      %v3596 = vpop.f32.mrf.mxu0
      %v3597 = vadd.f32 0.0, %v3596
      %3598 = vmatmul.f32.gmra.mxu0 %v2825
      %v3599 = vpop.f32.mrf.mxu0
      %v3600 = vadd.f32 0.0, %v3599
      %3601 = vmatmul.f32.gmra.mxu0 %v2826
      %v3602 = vpop.f32.mrf.mxu0
      %v3603 = vadd.f32 0.0, %v3602
      %3604 = vmatmul.f32.gmra.mxu0 %v2827
      %v3605 = vpop.f32.mrf.mxu0
      %v3606 = vadd.f32 0.0, %v3605
      %3607 = vmatmul.f32.gmra.mxu0 %v2828
      %v3608 = vpop.f32.mrf.mxu0
      %v3609 = vadd.f32 0.0, %v3608
      %3610 = vmatmul.f32.gmra.mxu0 %v2829
      %v3611 = vpop.f32.mrf.mxu0
      %v3612 = vadd.f32 0.0, %v3611
      %3613 = vmatmul.f32.gmra.mxu0 %v2830
      %v3614 = vpop.f32.mrf.mxu0
      %v3615 = vadd.f32 0.0, %v3614
      %3616 = vmatmul.f32.gmra.mxu0 %v2831
      %v3617 = vpop.f32.mrf.mxu0
      %v3618 = vadd.f32 0.0, %v3617
      %3619 = vmatmul.f32.gmra.mxu0 %v2832
      %v3620 = vpop.f32.mrf.mxu0
      %v3621 = vadd.f32 0.0, %v3620
      %3622 = vdwg.mxu0
      %3623 = vmatpush.msra.mxu0 %v3445
      %3624 = vmatpush.msra.mxu0 %v3444
      %3625 = vmatpush.msra.mxu0 %v3443
      %3626 = vmatpush.msra.mxu0 %v3442
      %3627 = vmatpush.msra.mxu0 %v3441
      %3628 = vmatpush.msra.mxu0 %v3440
      %3629 = vmatpush.msra.mxu0 %v3439
      %3630 = vmatpush.msra.mxu0 %v3438
      %3631 = vmatpush.msra.mxu0 %v3437
      %3632 = vmatpush.msra.mxu0 %v3436
      %3633 = vmatpush.msra.mxu0 %v3435
      %3634 = vmatpush.msra.mxu0 %v3434
      %3635 = vmatpush.msra.mxu0 %v3433
      %3636 = vmatpush.msra.mxu0 %v3432
      %3637 = vmatpush.msra.mxu0 %v3431
      %3638 = vmatpush.msra.mxu0 %v3430
      %3639 = vmatmul.f32.gmra.mxu0 %v2833
      %v3640 = vpop.f32.mrf.mxu0
      %v3641 = vadd.f32 %v3480, %v3640
      %3642 = vmatmul.f32.gmra.mxu0 %v2834
      %v3643 = vpop.f32.mrf.mxu0
      %v3644 = vadd.f32 %v3483, %v3643
      %3645 = vmatmul.f32.gmra.mxu0 %v2835
      %v3646 = vpop.f32.mrf.mxu0
      %v3647 = vadd.f32 %v3486, %v3646
      %3648 = vmatmul.f32.gmra.mxu0 %v2836
      %v3649 = vpop.f32.mrf.mxu0
      %v3650 = vadd.f32 %v3489, %v3649
      %3651 = vmatmul.f32.gmra.mxu0 %v2837
      %v3652 = vpop.f32.mrf.mxu0
      %v3653 = vadd.f32 %v3492, %v3652
      %3654 = vmatmul.f32.gmra.mxu0 %v2838
      %v3655 = vpop.f32.mrf.mxu0
      %v3656 = vadd.f32 %v3495, %v3655
      %3657 = vmatmul.f32.gmra.mxu0 %v2839
      %v3658 = vpop.f32.mrf.mxu0
      %v3659 = vadd.f32 %v3498, %v3658
      %3660 = vmatmul.f32.gmra.mxu0 %v2840
      %v3661 = vpop.f32.mrf.mxu0
      %v3662 = vadd.f32 %v3501, %v3661
      %3663 = vmatmul.f32.gmra.mxu0 %v2841
      %v3664 = vpop.f32.mrf.mxu0
      %v3665 = vadd.f32 %v3504, %v3664
      %3666 = vmatmul.f32.gmra.mxu0 %v2842
      %v3667 = vpop.f32.mrf.mxu0
      %v3668 = vadd.f32 %v3507, %v3667
      %3669 = vmatmul.f32.gmra.mxu0 %v2843
      %v3670 = vpop.f32.mrf.mxu0
      %v3671 = vadd.f32 %v3510, %v3670
      %3672 = vmatmul.f32.gmra.mxu0 %v2844
      %v3673 = vpop.f32.mrf.mxu0
      %v3674 = vadd.f32 %v3513, %v3673
      %3675 = vmatmul.f32.gmra.mxu0 %v2845
      %v3676 = vpop.f32.mrf.mxu0
      %v3677 = vadd.f32 %v3516, %v3676
      %3678 = vmatmul.f32.gmra.mxu0 %v2846
      %v3679 = vpop.f32.mrf.mxu0
      %v3680 = vadd.f32 %v3519, %v3679
      %3681 = vmatmul.f32.gmra.mxu0 %v2847
      %v3682 = vpop.f32.mrf.mxu0
      %v3683 = vadd.f32 %v3522, %v3682
      %3684 = vmatmul.f32.gmra.mxu0 %v2848
      %v3685 = vpop.f32.mrf.mxu0
      %v3686 = vadd.f32 %v3525, %v3685
      %3687 = vmatmul.f32.gmra.mxu0 %v2849
      %v3688 = vpop.f32.mrf.mxu0
      %v3689 = vadd.f32 %v3528, %v3688
      %3690 = vmatmul.f32.gmra.mxu0 %v2850
      %v3691 = vpop.f32.mrf.mxu0
      %v3692 = vadd.f32 %v3531, %v3691
      %3693 = vmatmul.f32.gmra.mxu0 %v2851
      %v3694 = vpop.f32.mrf.mxu0
      %v3695 = vadd.f32 %v3534, %v3694
      %3696 = vmatmul.f32.gmra.mxu0 %v2852
      %v3697 = vpop.f32.mrf.mxu0
      %v3698 = vadd.f32 %v3537, %v3697
      %3699 = vmatmul.f32.gmra.mxu0 %v2853
      %v3700 = vpop.f32.mrf.mxu0
      %v3701 = vadd.f32 %v3540, %v3700
      %3702 = vmatmul.f32.gmra.mxu0 %v2854
      %v3703 = vpop.f32.mrf.mxu0
      %v3704 = vadd.f32 %v3543, %v3703
      %3705 = vmatmul.f32.gmra.mxu0 %v2855
      %v3706 = vpop.f32.mrf.mxu0
      %v3707 = vadd.f32 %v3546, %v3706
      %3708 = vmatmul.f32.gmra.mxu0 %v2856
      %v3709 = vpop.f32.mrf.mxu0
      %v3710 = vadd.f32 %v3549, %v3709
      %3711 = vmatmul.f32.gmra.mxu0 %v2857
      %v3712 = vpop.f32.mrf.mxu0
      %v3713 = vadd.f32 %v3552, %v3712
      %3714 = vmatmul.f32.gmra.mxu0 %v2858
      %v3715 = vpop.f32.mrf.mxu0
      %v3716 = vadd.f32 %v3555, %v3715
      %3717 = vmatmul.f32.gmra.mxu0 %v2859
      %v3718 = vpop.f32.mrf.mxu0
      %v3719 = vadd.f32 %v3558, %v3718
      %3720 = vmatmul.f32.gmra.mxu0 %v2860
      %v3721 = vpop.f32.mrf.mxu0
      %v3722 = vadd.f32 %v3561, %v3721
      %3723 = vmatmul.f32.gmra.mxu0 %v2861
      %v3724 = vpop.f32.mrf.mxu0
      %v3725 = vadd.f32 %v3564, %v3724
      %3726 = vmatmul.f32.gmra.mxu0 %v2862
      %v3727 = vpop.f32.mrf.mxu0
      %v3728 = vadd.f32 %v3567, %v3727
      %3729 = vmatmul.f32.gmra.mxu0 %v2863
      %v3730 = vpop.f32.mrf.mxu0
      %v3731 = vadd.f32 %v3570, %v3730
      %3732 = vmatmul.f32.gmra.mxu0 %v2864
      %v3733 = vpop.f32.mrf.mxu0
      %v3734 = vadd.f32 %v3573, %v3733
      %3735 = vmatmul.f32.gmra.mxu0 %v2865
      %v3736 = vpop.f32.mrf.mxu0
      %v3737 = vadd.f32 %v3576, %v3736
      %3738 = vmatmul.f32.gmra.mxu0 %v2866
      %v3739 = vpop.f32.mrf.mxu0
      %v3740 = vadd.f32 %v3579, %v3739
      %3741 = vmatmul.f32.gmra.mxu0 %v2867
      %v3742 = vpop.f32.mrf.mxu0
      %v3743 = vadd.f32 %v3582, %v3742
      %3744 = vmatmul.f32.gmra.mxu0 %v2868
      %v3745 = vpop.f32.mrf.mxu0
      %v3746 = vadd.f32 %v3585, %v3745
      %3747 = vmatmul.f32.gmra.mxu0 %v2869
      %v3748 = vpop.f32.mrf.mxu0
      %v3749 = vadd.f32 %v3588, %v3748
      %3750 = vmatmul.f32.gmra.mxu0 %v2870
      %v3751 = vpop.f32.mrf.mxu0
      %v3752 = vadd.f32 %v3591, %v3751
      %3753 = vmatmul.f32.gmra.mxu0 %v2871
      %v3754 = vpop.f32.mrf.mxu0
      %v3755 = vadd.f32 %v3594, %v3754
      %3756 = vmatmul.f32.gmra.mxu0 %v2872
      %v3757 = vpop.f32.mrf.mxu0
      %v3758 = vadd.f32 %v3597, %v3757
      %3759 = vmatmul.f32.gmra.mxu0 %v2873
      %v3760 = vpop.f32.mrf.mxu0
      %v3761 = vadd.f32 %v3600, %v3760
      %3762 = vmatmul.f32.gmra.mxu0 %v2874
      %v3763 = vpop.f32.mrf.mxu0
      %v3764 = vadd.f32 %v3603, %v3763
      %3765 = vmatmul.f32.gmra.mxu0 %v2875
      %v3766 = vpop.f32.mrf.mxu0
      %v3767 = vadd.f32 %v3606, %v3766
      %3768 = vmatmul.f32.gmra.mxu0 %v2876
      %v3769 = vpop.f32.mrf.mxu0
      %v3770 = vadd.f32 %v3609, %v3769
      %3771 = vmatmul.f32.gmra.mxu0 %v2877
      %v3772 = vpop.f32.mrf.mxu0
      %v3773 = vadd.f32 %v3612, %v3772
      %3774 = vmatmul.f32.gmra.mxu0 %v2878
      %v3775 = vpop.f32.mrf.mxu0
      %v3776 = vadd.f32 %v3615, %v3775
      %3777 = vmatmul.f32.gmra.mxu0 %v2879
      %v3778 = vpop.f32.mrf.mxu0
      %v3779 = vadd.f32 %v3618, %v3778
      %3780 = vmatmul.f32.gmra.mxu0 %v2880
      %v3781 = vpop.f32.mrf.mxu0
      %v3782 = vadd.f32 %v3621, %v3781
      %3783 = vdwg.mxu0
      %3784 = vmatpush.msra.mxu0 %v3461
      %3785 = vmatpush.msra.mxu0 %v3460
      %3786 = vmatpush.msra.mxu0 %v3459
      %3787 = vmatpush.msra.mxu0 %v3458
      %3788 = vmatpush.msra.mxu0 %v3457
      %3789 = vmatpush.msra.mxu0 %v3456
      %3790 = vmatpush.msra.mxu0 %v3455
      %3791 = vmatpush.msra.mxu0 %v3454
      %3792 = vmatpush.msra.mxu0 %v3453
      %3793 = vmatpush.msra.mxu0 %v3452
      %3794 = vmatpush.msra.mxu0 %v3451
      %3795 = vmatpush.msra.mxu0 %v3450
      %3796 = vmatpush.msra.mxu0 %v3449
      %3797 = vmatpush.msra.mxu0 %v3448
      %3798 = vmatpush.msra.mxu0 %v3447
      %3799 = vmatpush.msra.mxu0 %v3446
      %3800 = vmatmul.f32.gmra.mxu0 %v2882
      %v3801 = vpop.f32.mrf.mxu0
      %v3802 = vadd.f32 %v3641, %v3801
      %3803 = vmatmul.f32.gmra.mxu0 %v2883
      %v3804 = vpop.f32.mrf.mxu0
      %v3805 = vadd.f32 %v3644, %v3804
      %3806 = vmatmul.f32.gmra.mxu0 %v2884
      %v3807 = vpop.f32.mrf.mxu0
      %v3808 = vadd.f32 %v3647, %v3807
      %3809 = vmatmul.f32.gmra.mxu0 %v2885
      %v3810 = vpop.f32.mrf.mxu0
      %v3811 = vadd.f32 %v3650, %v3810
      %3812 = vmatmul.f32.gmra.mxu0 %v2886
      %v3813 = vpop.f32.mrf.mxu0
      %v3814 = vadd.f32 %v3653, %v3813
      %3815 = vmatmul.f32.gmra.mxu0 %v2887
      %v3816 = vpop.f32.mrf.mxu0
      %v3817 = vadd.f32 %v3656, %v3816
      %3818 = vmatmul.f32.gmra.mxu0 %v2888
      %v3819 = vpop.f32.mrf.mxu0
      %v3820 = vadd.f32 %v3659, %v3819
      %3821 = vmatmul.f32.gmra.mxu0 %v2889
      %v3822 = vpop.f32.mrf.mxu0
      %v3823 = vadd.f32 %v3662, %v3822
      %3824 = vmatmul.f32.gmra.mxu0 %v2890
      %v3825 = vpop.f32.mrf.mxu0
      %v3826 = vadd.f32 %v3665, %v3825
      %3827 = vmatmul.f32.gmra.mxu0 %v2891
      %v3828 = vpop.f32.mrf.mxu0
      %v3829 = vadd.f32 %v3668, %v3828
      %3830 = vmatmul.f32.gmra.mxu0 %v2892
      %v3831 = vpop.f32.mrf.mxu0
      %v3832 = vadd.f32 %v3671, %v3831
      %3833 = vmatmul.f32.gmra.mxu0 %v2893
      %v3834 = vpop.f32.mrf.mxu0
      %v3835 = vadd.f32 %v3674, %v3834
      %3836 = vmatmul.f32.gmra.mxu0 %v2894
      %v3837 = vpop.f32.mrf.mxu0
      %v3838 = vadd.f32 %v3677, %v3837
      %3839 = vmatmul.f32.gmra.mxu0 %v2895
      %v3840 = vpop.f32.mrf.mxu0
      %v3841 = vadd.f32 %v3680, %v3840
      %3842 = vmatmul.f32.gmra.mxu0 %v2896
      %v3843 = vpop.f32.mrf.mxu0
      %v3844 = vadd.f32 %v3683, %v3843
      %3845 = vmatmul.f32.gmra.mxu0 %v2897
      %v3846 = vpop.f32.mrf.mxu0
      %v3847 = vadd.f32 %v3686, %v3846
      %3848 = vmatmul.f32.gmra.mxu0 %v2898
      %v3849 = vpop.f32.mrf.mxu0
      %v3850 = vadd.f32 %v3689, %v3849
      %3851 = vmatmul.f32.gmra.mxu0 %v2899
      %v3852 = vpop.f32.mrf.mxu0
      %v3853 = vadd.f32 %v3692, %v3852
      %3854 = vmatmul.f32.gmra.mxu0 %v2900
      %v3855 = vpop.f32.mrf.mxu0
      %v3856 = vadd.f32 %v3695, %v3855
      %3857 = vmatmul.f32.gmra.mxu0 %v2901
      %v3858 = vpop.f32.mrf.mxu0
      %v3859 = vadd.f32 %v3698, %v3858
      %3860 = vmatmul.f32.gmra.mxu0 %v2902
      %v3861 = vpop.f32.mrf.mxu0
      %v3862 = vadd.f32 %v3701, %v3861
      %3863 = vmatmul.f32.gmra.mxu0 %v2903
      %v3864 = vpop.f32.mrf.mxu0
      %v3865 = vadd.f32 %v3704, %v3864
      %3866 = vmatmul.f32.gmra.mxu0 %v2904
      %v3867 = vpop.f32.mrf.mxu0
      %v3868 = vadd.f32 %v3707, %v3867
      %3869 = vmatmul.f32.gmra.mxu0 %v2905
      %v3870 = vpop.f32.mrf.mxu0
      %v3871 = vadd.f32 %v3710, %v3870
      %3872 = vmatmul.f32.gmra.mxu0 %v2906
      %v3873 = vpop.f32.mrf.mxu0
      %v3874 = vadd.f32 %v3713, %v3873
      %3875 = vmatmul.f32.gmra.mxu0 %v2907
      %v3876 = vpop.f32.mrf.mxu0
      %v3877 = vadd.f32 %v3716, %v3876
      %3878 = vmatmul.f32.gmra.mxu0 %v2908
      %v3879 = vpop.f32.mrf.mxu0
      %v3880 = vadd.f32 %v3719, %v3879
      %3881 = vmatmul.f32.gmra.mxu0 %v2909
      %v3882 = vpop.f32.mrf.mxu0
      %v3883 = vadd.f32 %v3722, %v3882
      %3884 = vmatmul.f32.gmra.mxu0 %v2910
      %v3885 = vpop.f32.mrf.mxu0
      %v3886 = vadd.f32 %v3725, %v3885
      %3887 = vmatmul.f32.gmra.mxu0 %v2911
      %v3888 = vpop.f32.mrf.mxu0
      %v3889 = vadd.f32 %v3728, %v3888
      %3890 = vmatmul.f32.gmra.mxu0 %v2912
      %v3891 = vpop.f32.mrf.mxu0
      %v3892 = vadd.f32 %v3731, %v3891
      %3893 = vmatmul.f32.gmra.mxu0 %v2913
      %v3894 = vpop.f32.mrf.mxu0
      %v3895 = vadd.f32 %v3734, %v3894
      %3896 = vmatmul.f32.gmra.mxu0 %v2914
      %v3897 = vpop.f32.mrf.mxu0
      %v3898 = vadd.f32 %v3737, %v3897
      %3899 = vmatmul.f32.gmra.mxu0 %v2915
      %v3900 = vpop.f32.mrf.mxu0
      %v3901 = vadd.f32 %v3740, %v3900
      %3902 = vmatmul.f32.gmra.mxu0 %v2916
      %v3903 = vpop.f32.mrf.mxu0
      %v3904 = vadd.f32 %v3743, %v3903
      %3905 = vmatmul.f32.gmra.mxu0 %v2917
      %v3906 = vpop.f32.mrf.mxu0
      %v3907 = vadd.f32 %v3746, %v3906
      %3908 = vmatmul.f32.gmra.mxu0 %v2918
      %v3909 = vpop.f32.mrf.mxu0
      %v3910 = vadd.f32 %v3749, %v3909
      %3911 = vmatmul.f32.gmra.mxu0 %v2919
      %v3912 = vpop.f32.mrf.mxu0
      %v3913 = vadd.f32 %v3752, %v3912
      %3914 = vmatmul.f32.gmra.mxu0 %v2920
      %v3915 = vpop.f32.mrf.mxu0
      %v3916 = vadd.f32 %v3755, %v3915
      %3917 = vmatmul.f32.gmra.mxu0 %v2921
      %v3918 = vpop.f32.mrf.mxu0
      %v3919 = vadd.f32 %v3758, %v3918
      %3920 = vmatmul.f32.gmra.mxu0 %v2922
      %v3921 = vpop.f32.mrf.mxu0
      %v3922 = vadd.f32 %v3761, %v3921
      %3923 = vmatmul.f32.gmra.mxu0 %v2923
      %v3924 = vpop.f32.mrf.mxu0
      %v3925 = vadd.f32 %v3764, %v3924
      %3926 = vmatmul.f32.gmra.mxu0 %v2924
      %v3927 = vpop.f32.mrf.mxu0
      %v3928 = vadd.f32 %v3767, %v3927
      %3929 = vmatmul.f32.gmra.mxu0 %v2925
      %v3930 = vpop.f32.mrf.mxu0
      %v3931 = vadd.f32 %v3770, %v3930
      %3932 = vmatmul.f32.gmra.mxu0 %v2926
      %v3933 = vpop.f32.mrf.mxu0
      %v3934 = vadd.f32 %v3773, %v3933
      %3935 = vmatmul.f32.gmra.mxu0 %v2927
      %v3936 = vpop.f32.mrf.mxu0
      %v3937 = vadd.f32 %v3776, %v3936
      %3938 = vmatmul.f32.gmra.mxu0 %v2928
      %v3939 = vpop.f32.mrf.mxu0
      %v3940 = vadd.f32 %v3779, %v3939
      %3941 = vmatmul.f32.gmra.mxu0 %v2929
      %v3942 = vpop.f32.mrf.mxu0
      %v3943 = vadd.f32 %v3782, %v3942
      %3944 = vdwg.mxu0
      %s3945 = scalar_lea.vmem %s2, 768
      %v3946 = vld [vmem:[%s3945] sm:$0xff]
      %v3947 = vld [vmem:[%s3945 + $0x8] sm:$0xff]
      %v3948 = vld [vmem:[%s3945 + $0x10] sm:$0xff]
      %v3949 = vld [vmem:[%s3945 + $0x18] sm:$0xff]
      %v3950 = vld [vmem:[%s3945 + $0x20] sm:$0xff]
      %v3951 = vld [vmem:[%s3945 + $0x28] sm:$0xff]
      %v3952 = vld [vmem:[%s3945 + $0x30] sm:$0xff]
      %v3953 = vld [vmem:[%s3945 + $0x38] sm:$0xff]
      %v3954 = vld [vmem:[%s3945 + $0x40] sm:$0xff]
      %v3955 = vld [vmem:[%s3945 + $0x48] sm:$0xff]
      %v3956 = vld [vmem:[%s3945 + $0x50] sm:$0xff]
      %v3957 = vld [vmem:[%s3945 + $0x58] sm:$0xff]
      %v3958 = vld [vmem:[%s3945 + $0x60] sm:$0xff]
      %v3959 = vld [vmem:[%s3945 + $0x68] sm:$0xff]
      %v3960 = vld [vmem:[%s3945 + $0x70] sm:$0xff]
      %v3961 = vld [vmem:[%s3945 + $0x78] sm:$0xff]
      %v3962 = vld [vmem:[%s3945 + $0x80] sm:$0xff]
      %v3963 = vld [vmem:[%s3945 + $0x88] sm:$0xff]
      %v3964 = vld [vmem:[%s3945 + $0x90] sm:$0xff]
      %v3965 = vld [vmem:[%s3945 + $0x98] sm:$0xff]
      %v3966 = vld [vmem:[%s3945 + $0xa0] sm:$0xff]
      %v3967 = vld [vmem:[%s3945 + $0xa8] sm:$0xff]
      %v3968 = vld [vmem:[%s3945 + $0xb0] sm:$0xff]
      %v3969 = vld [vmem:[%s3945 + $0xb8] sm:$0xff]
      %v3970 = vld [vmem:[%s3945 + $0xc0] sm:$0xff]
      %v3971 = vld [vmem:[%s3945 + $0xc8] sm:$0xff]
      %v3972 = vld [vmem:[%s3945 + $0xd0] sm:$0xff]
      %v3973 = vld [vmem:[%s3945 + $0xd8] sm:$0xff]
      %v3974 = vld [vmem:[%s3945 + $0xe0] sm:$0xff]
      %v3975 = vld [vmem:[%s3945 + $0xe8] sm:$0xff]
      %v3976 = vld [vmem:[%s3945 + $0xf0] sm:$0xff]
      %v3977 = vld [vmem:[%s3945 + $0xf8] sm:$0xff]
      %v3978 = vld [vmem:[%s3945 + $0x100] sm:$0xff]
      %v3979 = vld [vmem:[%s3945 + $0x108] sm:$0xff]
      %v3980 = vld [vmem:[%s3945 + $0x110] sm:$0xff]
      %v3981 = vld [vmem:[%s3945 + $0x118] sm:$0xff]
      %v3982 = vld [vmem:[%s3945 + $0x120] sm:$0xff]
      %v3983 = vld [vmem:[%s3945 + $0x128] sm:$0xff]
      %v3984 = vld [vmem:[%s3945 + $0x130] sm:$0xff]
      %v3985 = vld [vmem:[%s3945 + $0x138] sm:$0xff]
      %v3986 = vld [vmem:[%s3945 + $0x140] sm:$0xff]
      %v3987 = vld [vmem:[%s3945 + $0x148] sm:$0xff]
      %v3988 = vld [vmem:[%s3945 + $0x150] sm:$0xff]
      %v3989 = vld [vmem:[%s3945 + $0x158] sm:$0xff]
      %v3990 = vld [vmem:[%s3945 + $0x160] sm:$0xff]
      %v3991 = vld [vmem:[%s3945 + $0x168] sm:$0xff]
      %v3992 = vld [vmem:[%s3945 + $0x170] sm:$0xff]
      %v3993 = vld [vmem:[%s3945 + $0x178] sm:$0xff]
      %3994 = vmatpush.msra.mxu0 %v3961
      %3995 = vmatpush.msra.mxu0 %v3960
      %3996 = vmatpush.msra.mxu0 %v3959
      %3997 = vmatpush.msra.mxu0 %v3958
      %3998 = vmatpush.msra.mxu0 %v3957
      %3999 = vmatpush.msra.mxu0 %v3956
      %4000 = vmatpush.msra.mxu0 %v3955
      %4001 = vmatpush.msra.mxu0 %v3954
      %4002 = vmatpush.msra.mxu0 %v3953
      %4003 = vmatpush.msra.mxu0 %v3952
      %4004 = vmatpush.msra.mxu0 %v3951
      %4005 = vmatpush.msra.mxu0 %v3950
      %4006 = vmatpush.msra.mxu0 %v3949
      %4007 = vmatpush.msra.mxu0 %v3948
      %4008 = vmatpush.msra.mxu0 %v3947
      %4009 = vmatpush.msra.mxu0 %v3946
      %4010 = vmatmul.f32.gmra.mxu0 %v2785
      %v4011 = vpop.f32.mrf.mxu0
      %v4012 = vadd.f32 0.0, %v4011
      %4013 = vmatmul.f32.gmra.mxu0 %v2786
      %v4014 = vpop.f32.mrf.mxu0
      %v4015 = vadd.f32 0.0, %v4014
      %4016 = vmatmul.f32.gmra.mxu0 %v2787
      %v4017 = vpop.f32.mrf.mxu0
      %v4018 = vadd.f32 0.0, %v4017
      %4019 = vmatmul.f32.gmra.mxu0 %v2788
      %v4020 = vpop.f32.mrf.mxu0
      %v4021 = vadd.f32 0.0, %v4020
      %4022 = vmatmul.f32.gmra.mxu0 %v2789
      %v4023 = vpop.f32.mrf.mxu0
      %v4024 = vadd.f32 0.0, %v4023
      %4025 = vmatmul.f32.gmra.mxu0 %v2790
      %v4026 = vpop.f32.mrf.mxu0
      %v4027 = vadd.f32 0.0, %v4026
      %4028 = vmatmul.f32.gmra.mxu0 %v2791
      %v4029 = vpop.f32.mrf.mxu0
      %v4030 = vadd.f32 0.0, %v4029
      %4031 = vmatmul.f32.gmra.mxu0 %v2792
      %v4032 = vpop.f32.mrf.mxu0
      %v4033 = vadd.f32 0.0, %v4032
      %4034 = vmatmul.f32.gmra.mxu0 %v2793
      %v4035 = vpop.f32.mrf.mxu0
      %v4036 = vadd.f32 0.0, %v4035
      %4037 = vmatmul.f32.gmra.mxu0 %v2794
      %v4038 = vpop.f32.mrf.mxu0
      %v4039 = vadd.f32 0.0, %v4038
      %4040 = vmatmul.f32.gmra.mxu0 %v2795
      %v4041 = vpop.f32.mrf.mxu0
      %v4042 = vadd.f32 0.0, %v4041
      %4043 = vmatmul.f32.gmra.mxu0 %v2796
      %v4044 = vpop.f32.mrf.mxu0
      %v4045 = vadd.f32 0.0, %v4044
      %4046 = vmatmul.f32.gmra.mxu0 %v2797
      %v4047 = vpop.f32.mrf.mxu0
      %v4048 = vadd.f32 0.0, %v4047
      %4049 = vmatmul.f32.gmra.mxu0 %v2798
      %v4050 = vpop.f32.mrf.mxu0
      %v4051 = vadd.f32 0.0, %v4050
      %4052 = vmatmul.f32.gmra.mxu0 %v2799
      %v4053 = vpop.f32.mrf.mxu0
      %v4054 = vadd.f32 0.0, %v4053
      %4055 = vmatmul.f32.gmra.mxu0 %v2800
      %v4056 = vpop.f32.mrf.mxu0
      %v4057 = vadd.f32 0.0, %v4056
      %4058 = vmatmul.f32.gmra.mxu0 %v2801
      %v4059 = vpop.f32.mrf.mxu0
      %v4060 = vadd.f32 0.0, %v4059
      %4061 = vmatmul.f32.gmra.mxu0 %v2802
      %v4062 = vpop.f32.mrf.mxu0
      %v4063 = vadd.f32 0.0, %v4062
      %4064 = vmatmul.f32.gmra.mxu0 %v2803
      %v4065 = vpop.f32.mrf.mxu0
      %v4066 = vadd.f32 0.0, %v4065
      %4067 = vmatmul.f32.gmra.mxu0 %v2804
      %v4068 = vpop.f32.mrf.mxu0
      %v4069 = vadd.f32 0.0, %v4068
      %4070 = vmatmul.f32.gmra.mxu0 %v2805
      %v4071 = vpop.f32.mrf.mxu0
      %v4072 = vadd.f32 0.0, %v4071
      %4073 = vmatmul.f32.gmra.mxu0 %v2806
      %v4074 = vpop.f32.mrf.mxu0
      %v4075 = vadd.f32 0.0, %v4074
      %4076 = vmatmul.f32.gmra.mxu0 %v2807
      %v4077 = vpop.f32.mrf.mxu0
      %v4078 = vadd.f32 0.0, %v4077
      %4079 = vmatmul.f32.gmra.mxu0 %v2808
      %v4080 = vpop.f32.mrf.mxu0
      %v4081 = vadd.f32 0.0, %v4080
      %4082 = vmatmul.f32.gmra.mxu0 %v2809
      %v4083 = vpop.f32.mrf.mxu0
      %v4084 = vadd.f32 0.0, %v4083
      %4085 = vmatmul.f32.gmra.mxu0 %v2810
      %v4086 = vpop.f32.mrf.mxu0
      %v4087 = vadd.f32 0.0, %v4086
      %4088 = vmatmul.f32.gmra.mxu0 %v2811
      %v4089 = vpop.f32.mrf.mxu0
      %v4090 = vadd.f32 0.0, %v4089
      %4091 = vmatmul.f32.gmra.mxu0 %v2812
      %v4092 = vpop.f32.mrf.mxu0
      %v4093 = vadd.f32 0.0, %v4092
      %4094 = vmatmul.f32.gmra.mxu0 %v2813
      %v4095 = vpop.f32.mrf.mxu0
      %v4096 = vadd.f32 0.0, %v4095
      %4097 = vmatmul.f32.gmra.mxu0 %v2814
      %v4098 = vpop.f32.mrf.mxu0
      %v4099 = vadd.f32 0.0, %v4098
      %4100 = vmatmul.f32.gmra.mxu0 %v2815
      %v4101 = vpop.f32.mrf.mxu0
      %v4102 = vadd.f32 0.0, %v4101
      %4103 = vmatmul.f32.gmra.mxu0 %v2816
      %v4104 = vpop.f32.mrf.mxu0
      %v4105 = vadd.f32 0.0, %v4104
      %4106 = vmatmul.f32.gmra.mxu0 %v2817
      %v4107 = vpop.f32.mrf.mxu0
      %v4108 = vadd.f32 0.0, %v4107
      %4109 = vmatmul.f32.gmra.mxu0 %v2818
      %v4110 = vpop.f32.mrf.mxu0
      %v4111 = vadd.f32 0.0, %v4110
      %4112 = vmatmul.f32.gmra.mxu0 %v2819
      %v4113 = vpop.f32.mrf.mxu0
      %v4114 = vadd.f32 0.0, %v4113
      %4115 = vmatmul.f32.gmra.mxu0 %v2820
      %v4116 = vpop.f32.mrf.mxu0
      %v4117 = vadd.f32 0.0, %v4116
      %4118 = vmatmul.f32.gmra.mxu0 %v2821
      %v4119 = vpop.f32.mrf.mxu0
      %v4120 = vadd.f32 0.0, %v4119
      %4121 = vmatmul.f32.gmra.mxu0 %v2822
      %v4122 = vpop.f32.mrf.mxu0
      %v4123 = vadd.f32 0.0, %v4122
      %4124 = vmatmul.f32.gmra.mxu0 %v2823
      %v4125 = vpop.f32.mrf.mxu0
      %v4126 = vadd.f32 0.0, %v4125
      %4127 = vmatmul.f32.gmra.mxu0 %v2824
      %v4128 = vpop.f32.mrf.mxu0
      %v4129 = vadd.f32 0.0, %v4128
      %4130 = vmatmul.f32.gmra.mxu0 %v2825
      %v4131 = vpop.f32.mrf.mxu0
      %v4132 = vadd.f32 0.0, %v4131
      %4133 = vmatmul.f32.gmra.mxu0 %v2826
      %v4134 = vpop.f32.mrf.mxu0
      %v4135 = vadd.f32 0.0, %v4134
      %4136 = vmatmul.f32.gmra.mxu0 %v2827
      %v4137 = vpop.f32.mrf.mxu0
      %v4138 = vadd.f32 0.0, %v4137
      %4139 = vmatmul.f32.gmra.mxu0 %v2828
      %v4140 = vpop.f32.mrf.mxu0
      %v4141 = vadd.f32 0.0, %v4140
      %4142 = vmatmul.f32.gmra.mxu0 %v2829
      %v4143 = vpop.f32.mrf.mxu0
      %v4144 = vadd.f32 0.0, %v4143
      %4145 = vmatmul.f32.gmra.mxu0 %v2830
      %v4146 = vpop.f32.mrf.mxu0
      %v4147 = vadd.f32 0.0, %v4146
      %4148 = vmatmul.f32.gmra.mxu0 %v2831
      %v4149 = vpop.f32.mrf.mxu0
      %v4150 = vadd.f32 0.0, %v4149
      %4151 = vmatmul.f32.gmra.mxu0 %v2832
      %v4152 = vpop.f32.mrf.mxu0
      %v4153 = vadd.f32 0.0, %v4152
      %4154 = vdwg.mxu0
      %4155 = vmatpush.msra.mxu0 %v3977
      %4156 = vmatpush.msra.mxu0 %v3976
      %4157 = vmatpush.msra.mxu0 %v3975
      %4158 = vmatpush.msra.mxu0 %v3974
      %4159 = vmatpush.msra.mxu0 %v3973
      %4160 = vmatpush.msra.mxu0 %v3972
      %4161 = vmatpush.msra.mxu0 %v3971
      %4162 = vmatpush.msra.mxu0 %v3970
      %4163 = vmatpush.msra.mxu0 %v3969
      %4164 = vmatpush.msra.mxu0 %v3968
      %4165 = vmatpush.msra.mxu0 %v3967
      %4166 = vmatpush.msra.mxu0 %v3966
      %4167 = vmatpush.msra.mxu0 %v3965
      %4168 = vmatpush.msra.mxu0 %v3964
      %4169 = vmatpush.msra.mxu0 %v3963
      %4170 = vmatpush.msra.mxu0 %v3962
      %4171 = vmatmul.f32.gmra.mxu0 %v2833
      %v4172 = vpop.f32.mrf.mxu0
      %v4173 = vadd.f32 %v4012, %v4172
      %4174 = vmatmul.f32.gmra.mxu0 %v2834
      %v4175 = vpop.f32.mrf.mxu0
      %v4176 = vadd.f32 %v4015, %v4175
      %4177 = vmatmul.f32.gmra.mxu0 %v2835
      %v4178 = vpop.f32.mrf.mxu0
      %v4179 = vadd.f32 %v4018, %v4178
      %4180 = vmatmul.f32.gmra.mxu0 %v2836
      %v4181 = vpop.f32.mrf.mxu0
      %v4182 = vadd.f32 %v4021, %v4181
      %4183 = vmatmul.f32.gmra.mxu0 %v2837
      %v4184 = vpop.f32.mrf.mxu0
      %v4185 = vadd.f32 %v4024, %v4184
      %4186 = vmatmul.f32.gmra.mxu0 %v2838
      %v4187 = vpop.f32.mrf.mxu0
      %v4188 = vadd.f32 %v4027, %v4187
      %4189 = vmatmul.f32.gmra.mxu0 %v2839
      %v4190 = vpop.f32.mrf.mxu0
      %v4191 = vadd.f32 %v4030, %v4190
      %4192 = vmatmul.f32.gmra.mxu0 %v2840
      %v4193 = vpop.f32.mrf.mxu0
      %v4194 = vadd.f32 %v4033, %v4193
      %4195 = vmatmul.f32.gmra.mxu0 %v2841
      %v4196 = vpop.f32.mrf.mxu0
      %v4197 = vadd.f32 %v4036, %v4196
      %4198 = vmatmul.f32.gmra.mxu0 %v2842
      %v4199 = vpop.f32.mrf.mxu0
      %v4200 = vadd.f32 %v4039, %v4199
      %4201 = vmatmul.f32.gmra.mxu0 %v2843
      %v4202 = vpop.f32.mrf.mxu0
      %v4203 = vadd.f32 %v4042, %v4202
      %4204 = vmatmul.f32.gmra.mxu0 %v2844
      %v4205 = vpop.f32.mrf.mxu0
      %v4206 = vadd.f32 %v4045, %v4205
      %4207 = vmatmul.f32.gmra.mxu0 %v2845
      %v4208 = vpop.f32.mrf.mxu0
      %v4209 = vadd.f32 %v4048, %v4208
      %4210 = vmatmul.f32.gmra.mxu0 %v2846
      %v4211 = vpop.f32.mrf.mxu0
      %v4212 = vadd.f32 %v4051, %v4211
      %4213 = vmatmul.f32.gmra.mxu0 %v2847
      %v4214 = vpop.f32.mrf.mxu0
      %v4215 = vadd.f32 %v4054, %v4214
      %4216 = vmatmul.f32.gmra.mxu0 %v2848
      %v4217 = vpop.f32.mrf.mxu0
      %v4218 = vadd.f32 %v4057, %v4217
      %4219 = vmatmul.f32.gmra.mxu0 %v2849
      %v4220 = vpop.f32.mrf.mxu0
      %v4221 = vadd.f32 %v4060, %v4220
      %4222 = vmatmul.f32.gmra.mxu0 %v2850
      %v4223 = vpop.f32.mrf.mxu0
      %v4224 = vadd.f32 %v4063, %v4223
      %4225 = vmatmul.f32.gmra.mxu0 %v2851
      %v4226 = vpop.f32.mrf.mxu0
      %v4227 = vadd.f32 %v4066, %v4226
      %4228 = vmatmul.f32.gmra.mxu0 %v2852
      %v4229 = vpop.f32.mrf.mxu0
      %v4230 = vadd.f32 %v4069, %v4229
      %4231 = vmatmul.f32.gmra.mxu0 %v2853
      %v4232 = vpop.f32.mrf.mxu0
      %v4233 = vadd.f32 %v4072, %v4232
      %4234 = vmatmul.f32.gmra.mxu0 %v2854
      %v4235 = vpop.f32.mrf.mxu0
      %v4236 = vadd.f32 %v4075, %v4235
      %4237 = vmatmul.f32.gmra.mxu0 %v2855
      %v4238 = vpop.f32.mrf.mxu0
      %v4239 = vadd.f32 %v4078, %v4238
      %4240 = vmatmul.f32.gmra.mxu0 %v2856
      %v4241 = vpop.f32.mrf.mxu0
      %v4242 = vadd.f32 %v4081, %v4241
      %4243 = vmatmul.f32.gmra.mxu0 %v2857
      %v4244 = vpop.f32.mrf.mxu0
      %v4245 = vadd.f32 %v4084, %v4244
      %4246 = vmatmul.f32.gmra.mxu0 %v2858
      %v4247 = vpop.f32.mrf.mxu0
      %v4248 = vadd.f32 %v4087, %v4247
      %4249 = vmatmul.f32.gmra.mxu0 %v2859
      %v4250 = vpop.f32.mrf.mxu0
      %v4251 = vadd.f32 %v4090, %v4250
      %4252 = vmatmul.f32.gmra.mxu0 %v2860
      %v4253 = vpop.f32.mrf.mxu0
      %v4254 = vadd.f32 %v4093, %v4253
      %4255 = vmatmul.f32.gmra.mxu0 %v2861
      %v4256 = vpop.f32.mrf.mxu0
      %v4257 = vadd.f32 %v4096, %v4256
      %4258 = vmatmul.f32.gmra.mxu0 %v2862
      %v4259 = vpop.f32.mrf.mxu0
      %v4260 = vadd.f32 %v4099, %v4259
      %4261 = vmatmul.f32.gmra.mxu0 %v2863
      %v4262 = vpop.f32.mrf.mxu0
      %v4263 = vadd.f32 %v4102, %v4262
      %4264 = vmatmul.f32.gmra.mxu0 %v2864
      %v4265 = vpop.f32.mrf.mxu0
      %v4266 = vadd.f32 %v4105, %v4265
      %4267 = vmatmul.f32.gmra.mxu0 %v2865
      %v4268 = vpop.f32.mrf.mxu0
      %v4269 = vadd.f32 %v4108, %v4268
      %4270 = vmatmul.f32.gmra.mxu0 %v2866
      %v4271 = vpop.f32.mrf.mxu0
      %v4272 = vadd.f32 %v4111, %v4271
      %4273 = vmatmul.f32.gmra.mxu0 %v2867
      %v4274 = vpop.f32.mrf.mxu0
      %v4275 = vadd.f32 %v4114, %v4274
      %4276 = vmatmul.f32.gmra.mxu0 %v2868
      %v4277 = vpop.f32.mrf.mxu0
      %v4278 = vadd.f32 %v4117, %v4277
      %4279 = vmatmul.f32.gmra.mxu0 %v2869
      %v4280 = vpop.f32.mrf.mxu0
      %v4281 = vadd.f32 %v4120, %v4280
      %4282 = vmatmul.f32.gmra.mxu0 %v2870
      %v4283 = vpop.f32.mrf.mxu0
      %v4284 = vadd.f32 %v4123, %v4283
      %4285 = vmatmul.f32.gmra.mxu0 %v2871
      %v4286 = vpop.f32.mrf.mxu0
      %v4287 = vadd.f32 %v4126, %v4286
      %4288 = vmatmul.f32.gmra.mxu0 %v2872
      %v4289 = vpop.f32.mrf.mxu0
      %v4290 = vadd.f32 %v4129, %v4289
      %4291 = vmatmul.f32.gmra.mxu0 %v2873
      %v4292 = vpop.f32.mrf.mxu0
      %v4293 = vadd.f32 %v4132, %v4292
      %4294 = vmatmul.f32.gmra.mxu0 %v2874
      %v4295 = vpop.f32.mrf.mxu0
      %v4296 = vadd.f32 %v4135, %v4295
      %4297 = vmatmul.f32.gmra.mxu0 %v2875
      %v4298 = vpop.f32.mrf.mxu0
      %v4299 = vadd.f32 %v4138, %v4298
      %4300 = vmatmul.f32.gmra.mxu0 %v2876
      %v4301 = vpop.f32.mrf.mxu0
      %v4302 = vadd.f32 %v4141, %v4301
      %4303 = vmatmul.f32.gmra.mxu0 %v2877
      %v4304 = vpop.f32.mrf.mxu0
      %v4305 = vadd.f32 %v4144, %v4304
      %4306 = vmatmul.f32.gmra.mxu0 %v2878
      %v4307 = vpop.f32.mrf.mxu0
      %v4308 = vadd.f32 %v4147, %v4307
      %4309 = vmatmul.f32.gmra.mxu0 %v2879
      %v4310 = vpop.f32.mrf.mxu0
      %v4311 = vadd.f32 %v4150, %v4310
      %4312 = vmatmul.f32.gmra.mxu0 %v2880
      %v4313 = vpop.f32.mrf.mxu0
      %v4314 = vadd.f32 %v4153, %v4313
      %4315 = vdwg.mxu0
      %4316 = vmatpush.msra.mxu0 %v3993
      %4317 = vmatpush.msra.mxu0 %v3992
      %4318 = vmatpush.msra.mxu0 %v3991
      %4319 = vmatpush.msra.mxu0 %v3990
      %4320 = vmatpush.msra.mxu0 %v3989
      %4321 = vmatpush.msra.mxu0 %v3988
      %4322 = vmatpush.msra.mxu0 %v3987
      %4323 = vmatpush.msra.mxu0 %v3986
      %4324 = vmatpush.msra.mxu0 %v3985
      %4325 = vmatpush.msra.mxu0 %v3984
      %4326 = vmatpush.msra.mxu0 %v3983
      %4327 = vmatpush.msra.mxu0 %v3982
      %4328 = vmatpush.msra.mxu0 %v3981
      %4329 = vmatpush.msra.mxu0 %v3980
      %4330 = vmatpush.msra.mxu0 %v3979
      %4331 = vmatpush.msra.mxu0 %v3978
      %4332 = vmatmul.f32.gmra.mxu0 %v2882
      %v4333 = vpop.f32.mrf.mxu0
      %v4334 = vadd.f32 %v4173, %v4333
      %4335 = vmatmul.f32.gmra.mxu0 %v2883
      %v4336 = vpop.f32.mrf.mxu0
      %v4337 = vadd.f32 %v4176, %v4336
      %4338 = vmatmul.f32.gmra.mxu0 %v2884
      %v4339 = vpop.f32.mrf.mxu0
      %v4340 = vadd.f32 %v4179, %v4339
      %4341 = vmatmul.f32.gmra.mxu0 %v2885
      %v4342 = vpop.f32.mrf.mxu0
      %v4343 = vadd.f32 %v4182, %v4342
      %4344 = vmatmul.f32.gmra.mxu0 %v2886
      %v4345 = vpop.f32.mrf.mxu0
      %v4346 = vadd.f32 %v4185, %v4345
      %4347 = vmatmul.f32.gmra.mxu0 %v2887
      %v4348 = vpop.f32.mrf.mxu0
      %v4349 = vadd.f32 %v4188, %v4348
      %4350 = vmatmul.f32.gmra.mxu0 %v2888
      %v4351 = vpop.f32.mrf.mxu0
      %v4352 = vadd.f32 %v4191, %v4351
      %4353 = vmatmul.f32.gmra.mxu0 %v2889
      %v4354 = vpop.f32.mrf.mxu0
      %v4355 = vadd.f32 %v4194, %v4354
      %4356 = vmatmul.f32.gmra.mxu0 %v2890
      %v4357 = vpop.f32.mrf.mxu0
      %v4358 = vadd.f32 %v4197, %v4357
      %4359 = vmatmul.f32.gmra.mxu0 %v2891
      %v4360 = vpop.f32.mrf.mxu0
      %v4361 = vadd.f32 %v4200, %v4360
      %4362 = vmatmul.f32.gmra.mxu0 %v2892
      %v4363 = vpop.f32.mrf.mxu0
      %v4364 = vadd.f32 %v4203, %v4363
      %4365 = vmatmul.f32.gmra.mxu0 %v2893
      %v4366 = vpop.f32.mrf.mxu0
      %v4367 = vadd.f32 %v4206, %v4366
      %4368 = vmatmul.f32.gmra.mxu0 %v2894
      %v4369 = vpop.f32.mrf.mxu0
      %v4370 = vadd.f32 %v4209, %v4369
      %4371 = vmatmul.f32.gmra.mxu0 %v2895
      %v4372 = vpop.f32.mrf.mxu0
      %v4373 = vadd.f32 %v4212, %v4372
      %4374 = vmatmul.f32.gmra.mxu0 %v2896
      %v4375 = vpop.f32.mrf.mxu0
      %v4376 = vadd.f32 %v4215, %v4375
      %4377 = vmatmul.f32.gmra.mxu0 %v2897
      %v4378 = vpop.f32.mrf.mxu0
      %v4379 = vadd.f32 %v4218, %v4378
      %4380 = vmatmul.f32.gmra.mxu0 %v2898
      %v4381 = vpop.f32.mrf.mxu0
      %v4382 = vadd.f32 %v4221, %v4381
      %4383 = vmatmul.f32.gmra.mxu0 %v2899
      %v4384 = vpop.f32.mrf.mxu0
      %v4385 = vadd.f32 %v4224, %v4384
      %4386 = vmatmul.f32.gmra.mxu0 %v2900
      %v4387 = vpop.f32.mrf.mxu0
      %v4388 = vadd.f32 %v4227, %v4387
      %4389 = vmatmul.f32.gmra.mxu0 %v2901
      %v4390 = vpop.f32.mrf.mxu0
      %v4391 = vadd.f32 %v4230, %v4390
      %4392 = vmatmul.f32.gmra.mxu0 %v2902
      %v4393 = vpop.f32.mrf.mxu0
      %v4394 = vadd.f32 %v4233, %v4393
      %4395 = vmatmul.f32.gmra.mxu0 %v2903
      %v4396 = vpop.f32.mrf.mxu0
      %v4397 = vadd.f32 %v4236, %v4396
      %4398 = vmatmul.f32.gmra.mxu0 %v2904
      %v4399 = vpop.f32.mrf.mxu0
      %v4400 = vadd.f32 %v4239, %v4399
      %4401 = vmatmul.f32.gmra.mxu0 %v2905
      %v4402 = vpop.f32.mrf.mxu0
      %v4403 = vadd.f32 %v4242, %v4402
      %4404 = vmatmul.f32.gmra.mxu0 %v2906
      %v4405 = vpop.f32.mrf.mxu0
      %v4406 = vadd.f32 %v4245, %v4405
      %4407 = vmatmul.f32.gmra.mxu0 %v2907
      %v4408 = vpop.f32.mrf.mxu0
      %v4409 = vadd.f32 %v4248, %v4408
      %4410 = vmatmul.f32.gmra.mxu0 %v2908
      %v4411 = vpop.f32.mrf.mxu0
      %v4412 = vadd.f32 %v4251, %v4411
      %4413 = vmatmul.f32.gmra.mxu0 %v2909
      %v4414 = vpop.f32.mrf.mxu0
      %v4415 = vadd.f32 %v4254, %v4414
      %4416 = vmatmul.f32.gmra.mxu0 %v2910
      %v4417 = vpop.f32.mrf.mxu0
      %v4418 = vadd.f32 %v4257, %v4417
      %4419 = vmatmul.f32.gmra.mxu0 %v2911
      %v4420 = vpop.f32.mrf.mxu0
      %v4421 = vadd.f32 %v4260, %v4420
      %4422 = vmatmul.f32.gmra.mxu0 %v2912
      %v4423 = vpop.f32.mrf.mxu0
      %v4424 = vadd.f32 %v4263, %v4423
      %4425 = vmatmul.f32.gmra.mxu0 %v2913
      %v4426 = vpop.f32.mrf.mxu0
      %v4427 = vadd.f32 %v4266, %v4426
      %4428 = vmatmul.f32.gmra.mxu0 %v2914
      %v4429 = vpop.f32.mrf.mxu0
      %v4430 = vadd.f32 %v4269, %v4429
      %4431 = vmatmul.f32.gmra.mxu0 %v2915
      %v4432 = vpop.f32.mrf.mxu0
      %v4433 = vadd.f32 %v4272, %v4432
      %4434 = vmatmul.f32.gmra.mxu0 %v2916
      %v4435 = vpop.f32.mrf.mxu0
      %v4436 = vadd.f32 %v4275, %v4435
      %4437 = vmatmul.f32.gmra.mxu0 %v2917
      %v4438 = vpop.f32.mrf.mxu0
      %v4439 = vadd.f32 %v4278, %v4438
      %4440 = vmatmul.f32.gmra.mxu0 %v2918
      %v4441 = vpop.f32.mrf.mxu0
      %v4442 = vadd.f32 %v4281, %v4441
      %4443 = vmatmul.f32.gmra.mxu0 %v2919
      %v4444 = vpop.f32.mrf.mxu0
      %v4445 = vadd.f32 %v4284, %v4444
      %4446 = vmatmul.f32.gmra.mxu0 %v2920
      %v4447 = vpop.f32.mrf.mxu0
      %v4448 = vadd.f32 %v4287, %v4447
      %4449 = vmatmul.f32.gmra.mxu0 %v2921
      %v4450 = vpop.f32.mrf.mxu0
      %v4451 = vadd.f32 %v4290, %v4450
      %4452 = vmatmul.f32.gmra.mxu0 %v2922
      %v4453 = vpop.f32.mrf.mxu0
      %v4454 = vadd.f32 %v4293, %v4453
      %4455 = vmatmul.f32.gmra.mxu0 %v2923
      %v4456 = vpop.f32.mrf.mxu0
      %v4457 = vadd.f32 %v4296, %v4456
      %4458 = vmatmul.f32.gmra.mxu0 %v2924
      %v4459 = vpop.f32.mrf.mxu0
      %v4460 = vadd.f32 %v4299, %v4459
      %4461 = vmatmul.f32.gmra.mxu0 %v2925
      %v4462 = vpop.f32.mrf.mxu0
      %v4463 = vadd.f32 %v4302, %v4462
      %4464 = vmatmul.f32.gmra.mxu0 %v2926
      %v4465 = vpop.f32.mrf.mxu0
      %v4466 = vadd.f32 %v4305, %v4465
      %4467 = vmatmul.f32.gmra.mxu0 %v2927
      %v4468 = vpop.f32.mrf.mxu0
      %v4469 = vadd.f32 %v4308, %v4468
      %4470 = vmatmul.f32.gmra.mxu0 %v2928
      %v4471 = vpop.f32.mrf.mxu0
      %v4472 = vadd.f32 %v4311, %v4471
      %4473 = vmatmul.f32.gmra.mxu0 %v2929
      %v4474 = vpop.f32.mrf.mxu0
      %v4475 = vadd.f32 %v4314, %v4474
      %4476 = vdwg.mxu0
      %v4525 = vrot.slane %v3802, 1
      %v4526 = vrot.slane %v3805, 1
      %v4527 = vsel %vm2104, %v4525, %v4526
      %v4528 = vrot.slane %v3808, 1
      %v4529 = vsel %vm2104, %v4526, %v4528
      %v4530 = vrot.slane %v3811, 1
      %v4531 = vrot.slane %v3814, 1
      %v4532 = vsel %vm2104, %v4530, %v4531
      %v4533 = vrot.slane %v3817, 1
      %v4534 = vsel %vm2104, %v4531, %v4533
      %v4535 = vrot.slane %v3820, 1
      %v4536 = vrot.slane %v3823, 1
      %v4537 = vsel %vm2104, %v4535, %v4536
      %v4538 = vrot.slane %v3826, 1
      %v4539 = vsel %vm2104, %v4536, %v4538
      %v4540 = vrot.slane %v3829, 1
      %v4541 = vrot.slane %v3832, 1
      %v4542 = vsel %vm2104, %v4540, %v4541
      %v4543 = vrot.slane %v3835, 1
      %v4544 = vsel %vm2104, %v4541, %v4543
      %v4545 = vrot.slane %v3838, 1
      %v4546 = vrot.slane %v3841, 1
      %v4547 = vsel %vm2104, %v4545, %v4546
      %v4548 = vrot.slane %v3844, 1
      %v4549 = vsel %vm2104, %v4546, %v4548
      %v4550 = vrot.slane %v3847, 1
      %v4551 = vrot.slane %v3850, 1
      %v4552 = vsel %vm2104, %v4550, %v4551
      %v4553 = vrot.slane %v3853, 1
      %v4554 = vsel %vm2104, %v4551, %v4553
      %v4555 = vrot.slane %v3856, 1
      %v4556 = vrot.slane %v3859, 1
      %v4557 = vsel %vm2104, %v4555, %v4556
      %v4558 = vrot.slane %v3862, 1
      %v4559 = vsel %vm2104, %v4556, %v4558
      %v4560 = vrot.slane %v3865, 1
      %v4561 = vrot.slane %v3868, 1
      %v4562 = vsel %vm2104, %v4560, %v4561
      %v4563 = vrot.slane %v3871, 1
      %v4564 = vsel %vm2104, %v4561, %v4563
      %v4565 = vrot.slane %v3874, 1
      %v4566 = vrot.slane %v3877, 1
      %v4567 = vsel %vm2104, %v4565, %v4566
      %v4568 = vrot.slane %v3880, 1
      %v4569 = vsel %vm2104, %v4566, %v4568
      %v4570 = vrot.slane %v3883, 1
      %v4571 = vrot.slane %v3886, 1
      %v4572 = vsel %vm2104, %v4570, %v4571
      %v4573 = vrot.slane %v3889, 1
      %v4574 = vsel %vm2104, %v4571, %v4573
      %v4575 = vrot.slane %v3892, 1
      %v4576 = vrot.slane %v3895, 1
      %v4577 = vsel %vm2104, %v4575, %v4576
      %v4578 = vrot.slane %v3898, 1
      %v4579 = vsel %vm2104, %v4576, %v4578
      %v4580 = vrot.slane %v3901, 1
      %v4581 = vrot.slane %v3904, 1
      %v4582 = vsel %vm2104, %v4580, %v4581
      %v4583 = vrot.slane %v3907, 1
      %v4584 = vsel %vm2104, %v4581, %v4583
      %v4585 = vrot.slane %v3910, 1
      %v4586 = vrot.slane %v3913, 1
      %v4587 = vsel %vm2104, %v4585, %v4586
      %v4588 = vrot.slane %v3916, 1
      %v4589 = vsel %vm2104, %v4586, %v4588
      %v4590 = vrot.slane %v3919, 1
      %v4591 = vrot.slane %v3922, 1
      %v4592 = vsel %vm2104, %v4590, %v4591
      %v4593 = vrot.slane %v3925, 1
      %v4594 = vsel %vm2104, %v4591, %v4593
      %v4595 = vrot.slane %v3928, 1
      %v4596 = vrot.slane %v3931, 1
      %v4597 = vsel %vm2104, %v4595, %v4596
      %v4598 = vrot.slane %v3934, 1
      %v4599 = vsel %vm2104, %v4596, %v4598
      %v4600 = vrot.slane %v3937, 1
      %v4601 = vrot.slane %v3940, 1
      %v4602 = vsel %vm2104, %v4600, %v4601
      %v4603 = vrot.slane %v3943, 1
      %v4604 = vsel %vm2104, %v4601, %v4603
      %v4637 = vadd.f32 %v3286, %v4527
      %v4638 = vadd.f32 %v3289, %v4529
      %v4639 = vadd.f32 %v3294, %v4532
      %v4640 = vadd.f32 %v3297, %v4534
      %v4641 = vadd.f32 %v3302, %v4537
      %v4642 = vadd.f32 %v3305, %v4539
      %v4643 = vadd.f32 %v3310, %v4542
      %v4644 = vadd.f32 %v3313, %v4544
      %v4645 = vadd.f32 %v3318, %v4547
      %v4646 = vadd.f32 %v3321, %v4549
      %v4647 = vadd.f32 %v3326, %v4552
      %v4648 = vadd.f32 %v3329, %v4554
      %v4649 = vadd.f32 %v3334, %v4557
      %v4650 = vadd.f32 %v3337, %v4559
      %v4651 = vadd.f32 %v3342, %v4562
      %v4652 = vadd.f32 %v3345, %v4564
      %v4653 = vadd.f32 %v3350, %v4567
      %v4654 = vadd.f32 %v3353, %v4569
      %v4655 = vadd.f32 %v3358, %v4572
      %v4656 = vadd.f32 %v3361, %v4574
      %v4657 = vadd.f32 %v3366, %v4577
      %v4658 = vadd.f32 %v3369, %v4579
      %v4659 = vadd.f32 %v3374, %v4582
      %v4660 = vadd.f32 %v3377, %v4584
      %v4661 = vadd.f32 %v3382, %v4587
      %v4662 = vadd.f32 %v3385, %v4589
      %v4663 = vadd.f32 %v3390, %v4592
      %v4664 = vadd.f32 %v3393, %v4594
      %v4665 = vadd.f32 %v3398, %v4597
      %v4666 = vadd.f32 %v3401, %v4599
      %v4667 = vadd.f32 %v3406, %v4602
      %v4668 = vadd.f32 %v3409, %v4604
      %v4717 = vrot.slane %v4334, 2
      %v4718 = vrot.slane %v4337, 2
      %v4719 = vsel %vm2297, %v4717, %v4718
      %v4720 = vrot.slane %v4340, 2
      %v4721 = vsel %vm2297, %v4718, %v4720
      %v4722 = vrot.slane %v4343, 2
      %v4723 = vrot.slane %v4346, 2
      %v4724 = vsel %vm2297, %v4722, %v4723
      %v4725 = vrot.slane %v4349, 2
      %v4726 = vsel %vm2297, %v4723, %v4725
      %v4727 = vrot.slane %v4352, 2
      %v4728 = vrot.slane %v4355, 2
      %v4729 = vsel %vm2297, %v4727, %v4728
      %v4730 = vrot.slane %v4358, 2
      %v4731 = vsel %vm2297, %v4728, %v4730
      %v4732 = vrot.slane %v4361, 2
      %v4733 = vrot.slane %v4364, 2
      %v4734 = vsel %vm2297, %v4732, %v4733
      %v4735 = vrot.slane %v4367, 2
      %v4736 = vsel %vm2297, %v4733, %v4735
      %v4737 = vrot.slane %v4370, 2
      %v4738 = vrot.slane %v4373, 2
      %v4739 = vsel %vm2297, %v4737, %v4738
      %v4740 = vrot.slane %v4376, 2
      %v4741 = vsel %vm2297, %v4738, %v4740
      %v4742 = vrot.slane %v4379, 2
      %v4743 = vrot.slane %v4382, 2
      %v4744 = vsel %vm2297, %v4742, %v4743
      %v4745 = vrot.slane %v4385, 2
      %v4746 = vsel %vm2297, %v4743, %v4745
      %v4747 = vrot.slane %v4388, 2
      %v4748 = vrot.slane %v4391, 2
      %v4749 = vsel %vm2297, %v4747, %v4748
      %v4750 = vrot.slane %v4394, 2
      %v4751 = vsel %vm2297, %v4748, %v4750
      %v4752 = vrot.slane %v4397, 2
      %v4753 = vrot.slane %v4400, 2
      %v4754 = vsel %vm2297, %v4752, %v4753
      %v4755 = vrot.slane %v4403, 2
      %v4756 = vsel %vm2297, %v4753, %v4755
      %v4757 = vrot.slane %v4406, 2
      %v4758 = vrot.slane %v4409, 2
      %v4759 = vsel %vm2297, %v4757, %v4758
      %v4760 = vrot.slane %v4412, 2
      %v4761 = vsel %vm2297, %v4758, %v4760
      %v4762 = vrot.slane %v4415, 2
      %v4763 = vrot.slane %v4418, 2
      %v4764 = vsel %vm2297, %v4762, %v4763
      %v4765 = vrot.slane %v4421, 2
      %v4766 = vsel %vm2297, %v4763, %v4765
      %v4767 = vrot.slane %v4424, 2
      %v4768 = vrot.slane %v4427, 2
      %v4769 = vsel %vm2297, %v4767, %v4768
      %v4770 = vrot.slane %v4430, 2
      %v4771 = vsel %vm2297, %v4768, %v4770
      %v4772 = vrot.slane %v4433, 2
      %v4773 = vrot.slane %v4436, 2
      %v4774 = vsel %vm2297, %v4772, %v4773
      %v4775 = vrot.slane %v4439, 2
      %v4776 = vsel %vm2297, %v4773, %v4775
      %v4777 = vrot.slane %v4442, 2
      %v4778 = vrot.slane %v4445, 2
      %v4779 = vsel %vm2297, %v4777, %v4778
      %v4780 = vrot.slane %v4448, 2
      %v4781 = vsel %vm2297, %v4778, %v4780
      %v4782 = vrot.slane %v4451, 2
      %v4783 = vrot.slane %v4454, 2
      %v4784 = vsel %vm2297, %v4782, %v4783
      %v4785 = vrot.slane %v4457, 2
      %v4786 = vsel %vm2297, %v4783, %v4785
      %v4787 = vrot.slane %v4460, 2
      %v4788 = vrot.slane %v4463, 2
      %v4789 = vsel %vm2297, %v4787, %v4788
      %v4790 = vrot.slane %v4466, 2
      %v4791 = vsel %vm2297, %v4788, %v4790
      %v4792 = vrot.slane %v4469, 2
      %v4793 = vrot.slane %v4472, 2
      %v4794 = vsel %vm2297, %v4792, %v4793
      %v4795 = vrot.slane %v4475, 2
      %v4796 = vsel %vm2297, %v4793, %v4795
      %v4829 = vadd.f32 %v4637, %v4719
      %v4830 = vadd.f32 %v4638, %v4721
      %v4831 = vadd.f32 %v4639, %v4724
      %v4832 = vadd.f32 %v4640, %v4726
      %v4833 = vadd.f32 %v4641, %v4729
      %v4834 = vadd.f32 %v4642, %v4731
      %v4835 = vadd.f32 %v4643, %v4734
      %v4836 = vadd.f32 %v4644, %v4736
      %v4837 = vadd.f32 %v4645, %v4739
      %v4838 = vadd.f32 %v4646, %v4741
      %v4839 = vadd.f32 %v4647, %v4744
      %v4840 = vadd.f32 %v4648, %v4746
      %v4841 = vadd.f32 %v4649, %v4749
      %v4842 = vadd.f32 %v4650, %v4751
      %v4843 = vadd.f32 %v4651, %v4754
      %v4844 = vadd.f32 %v4652, %v4756
      %v4845 = vadd.f32 %v4653, %v4759
      %v4846 = vadd.f32 %v4654, %v4761
      %v4847 = vadd.f32 %v4655, %v4764
      %v4848 = vadd.f32 %v4656, %v4766
      %v4849 = vadd.f32 %v4657, %v4769
      %v4850 = vadd.f32 %v4658, %v4771
      %v4851 = vadd.f32 %v4659, %v4774
      %v4852 = vadd.f32 %v4660, %v4776
      %v4853 = vadd.f32 %v4661, %v4779
      %v4854 = vadd.f32 %v4662, %v4781
      %v4855 = vadd.f32 %v4663, %v4784
      %v4856 = vadd.f32 %v4664, %v4786
      %v4857 = vadd.f32 %v4665, %v4789
      %v4858 = vadd.f32 %v4666, %v4791
      %v4859 = vadd.f32 %v4667, %v4794
      %v4860 = vadd.f32 %v4668, %v4796
      %v4861 = vadd.f32 %v4829, %v4831
      %v4862 = vadd.f32 %v4861, %v4833
      %v4863 = vadd.f32 %v4862, %v4835
      %v4864 = vadd.f32 %v4863, %v4837
      %v4865 = vadd.f32 %v4864, %v4839
      %v4866 = vadd.f32 %v4865, %v4841
      %v4867 = vadd.f32 %v4866, %v4843
      %v4868 = vadd.f32 %v4867, %v4845
      %v4869 = vadd.f32 %v4868, %v4847
      %v4870 = vadd.f32 %v4869, %v4849
      %v4871 = vadd.f32 %v4870, %v4851
      %v4872 = vadd.f32 %v4871, %v4853
      %v4873 = vadd.f32 %v4872, %v4855
      %v4874 = vadd.f32 %v4873, %v4857
      %v4875 = vadd.f32 %v4874, %v4859
      %v4876 = vadd.f32 %v4830, %v4832
      %v4877 = vadd.f32 %v4876, %v4834
      %v4878 = vadd.f32 %v4877, %v4836
      %v4879 = vadd.f32 %v4878, %v4838
      %v4880 = vadd.f32 %v4879, %v4840
      %v4881 = vadd.f32 %v4880, %v4842
      %v4882 = vadd.f32 %v4881, %v4844
      %v4883 = vadd.f32 %v4882, %v4846
      %v4884 = vadd.f32 %v4883, %v4848
      %v4885 = vadd.f32 %v4884, %v4850
      %v4886 = vadd.f32 %v4885, %v4852
      %v4887 = vadd.f32 %v4886, %v4854
      %v4888 = vadd.f32 %v4887, %v4856
      %v4889 = vadd.f32 %v4888, %v4858
      %v4890 = vadd.f32 %v4889, %v4860
      %v4891 = vadd.f32 %v4875, %v4890
      %v4892 = vrot.slane %v4891, 4
      %v4893 = vadd.f32 %v4891, %v4892
      %v4894 = vrot.slane %v4893, 2
      %v4895 = vadd.f32 %v4893, %v4894
      %v4896 = vrot.slane %v4895, 1
      %v4897 = vadd.f32 %v4895, %v4896
      %v4898 = vmul.f32 %v4897, 0.00390625
      %v4899 = vsub.f32 %v4829, %v4898
      %v4900 = vsub.f32 %v4830, %v4898
      %v4901 = vsub.f32 %v4831, %v4898
      %v4902 = vsub.f32 %v4832, %v4898
      %v4903 = vsub.f32 %v4833, %v4898
      %v4904 = vsub.f32 %v4834, %v4898
      %v4905 = vsub.f32 %v4835, %v4898
      %v4906 = vsub.f32 %v4836, %v4898
      %v4907 = vsub.f32 %v4837, %v4898
      %v4908 = vsub.f32 %v4838, %v4898
      %v4909 = vsub.f32 %v4839, %v4898
      %v4910 = vsub.f32 %v4840, %v4898
      %v4911 = vsub.f32 %v4841, %v4898
      %v4912 = vsub.f32 %v4842, %v4898
      %v4913 = vsub.f32 %v4843, %v4898
      %v4914 = vsub.f32 %v4844, %v4898
      %v4915 = vsub.f32 %v4845, %v4898
      %v4916 = vsub.f32 %v4846, %v4898
      %v4917 = vsub.f32 %v4847, %v4898
      %v4918 = vsub.f32 %v4848, %v4898
      %v4919 = vsub.f32 %v4849, %v4898
      %v4920 = vsub.f32 %v4850, %v4898
      %v4921 = vsub.f32 %v4851, %v4898
      %v4922 = vsub.f32 %v4852, %v4898
      %v4923 = vsub.f32 %v4853, %v4898
      %v4924 = vsub.f32 %v4854, %v4898
      %v4925 = vsub.f32 %v4855, %v4898
      %v4926 = vsub.f32 %v4856, %v4898
      %v4927 = vsub.f32 %v4857, %v4898
      %v4928 = vsub.f32 %v4858, %v4898
      %v4929 = vsub.f32 %v4859, %v4898
      %v4930 = vsub.f32 %v4860, %v4898
      %v4931 = vmul.f32 %v4899, %v4899
      %v4932 = vmul.f32 %v4900, %v4900
      %v4933 = vmul.f32 %v4901, %v4901
      %v4934 = vmul.f32 %v4902, %v4902
      %v4935 = vmul.f32 %v4903, %v4903
      %v4936 = vmul.f32 %v4904, %v4904
      %v4937 = vmul.f32 %v4905, %v4905
      %v4938 = vmul.f32 %v4906, %v4906
      %v4939 = vmul.f32 %v4907, %v4907
      %v4940 = vmul.f32 %v4908, %v4908
      %v4941 = vmul.f32 %v4909, %v4909
      %v4942 = vmul.f32 %v4910, %v4910
      %v4943 = vmul.f32 %v4911, %v4911
      %v4944 = vmul.f32 %v4912, %v4912
      %v4945 = vmul.f32 %v4913, %v4913
      %v4946 = vmul.f32 %v4914, %v4914
      %v4947 = vmul.f32 %v4915, %v4915
      %v4948 = vmul.f32 %v4916, %v4916
      %v4949 = vmul.f32 %v4917, %v4917
      %v4950 = vmul.f32 %v4918, %v4918
      %v4951 = vmul.f32 %v4919, %v4919
      %v4952 = vmul.f32 %v4920, %v4920
      %v4953 = vmul.f32 %v4921, %v4921
      %v4954 = vmul.f32 %v4922, %v4922
      %v4955 = vmul.f32 %v4923, %v4923
      %v4956 = vmul.f32 %v4924, %v4924
      %v4957 = vmul.f32 %v4925, %v4925
      %v4958 = vmul.f32 %v4926, %v4926
      %v4959 = vmul.f32 %v4927, %v4927
      %v4960 = vmul.f32 %v4928, %v4928
      %v4961 = vmul.f32 %v4929, %v4929
      %v4962 = vmul.f32 %v4930, %v4930
      %v4963 = vadd.f32 %v4931, %v4933
      %v4964 = vadd.f32 %v4963, %v4935
      %v4965 = vadd.f32 %v4964, %v4937
      %v4966 = vadd.f32 %v4965, %v4939
      %v4967 = vadd.f32 %v4966, %v4941
      %v4968 = vadd.f32 %v4967, %v4943
      %v4969 = vadd.f32 %v4968, %v4945
      %v4970 = vadd.f32 %v4969, %v4947
      %v4971 = vadd.f32 %v4970, %v4949
      %v4972 = vadd.f32 %v4971, %v4951
      %v4973 = vadd.f32 %v4972, %v4953
      %v4974 = vadd.f32 %v4973, %v4955
      %v4975 = vadd.f32 %v4974, %v4957
      %v4976 = vadd.f32 %v4975, %v4959
      %v4977 = vadd.f32 %v4976, %v4961
      %v4978 = vadd.f32 %v4932, %v4934
      %v4979 = vadd.f32 %v4978, %v4936
      %v4980 = vadd.f32 %v4979, %v4938
      %v4981 = vadd.f32 %v4980, %v4940
      %v4982 = vadd.f32 %v4981, %v4942
      %v4983 = vadd.f32 %v4982, %v4944
      %v4984 = vadd.f32 %v4983, %v4946
      %v4985 = vadd.f32 %v4984, %v4948
      %v4986 = vadd.f32 %v4985, %v4950
      %v4987 = vadd.f32 %v4986, %v4952
      %v4988 = vadd.f32 %v4987, %v4954
      %v4989 = vadd.f32 %v4988, %v4956
      %v4990 = vadd.f32 %v4989, %v4958
      %v4991 = vadd.f32 %v4990, %v4960
      %v4992 = vadd.f32 %v4991, %v4962
      %v4993 = vadd.f32 %v4977, %v4992
      %v4994 = vrot.slane %v4993, 4
      %v4995 = vadd.f32 %v4993, %v4994
      %v4996 = vrot.slane %v4995, 2
      %v4997 = vadd.f32 %v4995, %v4996
      %v4998 = vrot.slane %v4997, 1
      %v4999 = vadd.f32 %v4997, %v4998
      %v5000 = vmul.f32 %v4999, 0.00390625
      %v5001 = vadd.f32 %v5000, 1e-05
      %v5002 = vrsqrt.pop %v5001
      %v5003 = vmul.f32 %v5002, %v5001
      %v5004 = vmul.f32 %v5003, %v5002
      %v5005 = vmul.f32 0.5, %v5004
      %v5006 = vsub.f32 1.5, %v5005
      %v5007 = vmul.f32 %v5002, %v5006
      %vm5008 = vweird.f32 %v5001
      %vm5009 = vweird.f32 %v5002
      %vm5010 = vmor %vm5008, %vm5009
      %v5011 = vsel %vm5010, %v5002, %v5007
      %v5012 = vmul.f32 %v4899, %v5011
      %v5013 = vmul.f32 %v4900, %v5011
      %v5014 = vmul.f32 %v4901, %v5011
      %v5015 = vmul.f32 %v4902, %v5011
      %v5016 = vmul.f32 %v4903, %v5011
      %v5017 = vmul.f32 %v4904, %v5011
      %v5018 = vmul.f32 %v4905, %v5011
      %v5019 = vmul.f32 %v4906, %v5011
      %v5020 = vmul.f32 %v4907, %v5011
      %v5021 = vmul.f32 %v4908, %v5011
      %v5022 = vmul.f32 %v4909, %v5011
      %v5023 = vmul.f32 %v4910, %v5011
      %v5024 = vmul.f32 %v4911, %v5011
      %v5025 = vmul.f32 %v4912, %v5011
      %v5026 = vmul.f32 %v4913, %v5011
      %v5027 = vmul.f32 %v4914, %v5011
      %v5028 = vmul.f32 %v4915, %v5011
      %v5029 = vmul.f32 %v4916, %v5011
      %v5030 = vmul.f32 %v4917, %v5011
      %v5031 = vmul.f32 %v4918, %v5011
      %v5032 = vmul.f32 %v4919, %v5011
      %v5033 = vmul.f32 %v4920, %v5011
      %v5034 = vmul.f32 %v4921, %v5011
      %v5035 = vmul.f32 %v4922, %v5011
      %v5036 = vmul.f32 %v4923, %v5011
      %v5037 = vmul.f32 %v4924, %v5011
      %v5038 = vmul.f32 %v4925, %v5011
      %v5039 = vmul.f32 %v4926, %v5011
      %v5040 = vmul.f32 %v4927, %v5011
      %v5041 = vmul.f32 %v4928, %v5011
      %v5042 = vmul.f32 %v4929, %v5011
      %v5043 = vmul.f32 %v4930, %v5011
      %v5044 = vld [vmem:[%s165] sm:$0xff]
      %v5045 = vld [vmem:[%s165 + $0x8] sm:$0xff]
      %v5046 = vld [vmem:[%s165 + $0x10] sm:$0xff]
      %v5047 = vld [vmem:[%s165 + $0x18] sm:$0xff]
      %v5048 = vld [vmem:[%s165 + $0x20] sm:$0xff]
      %v5049 = vld [vmem:[%s165 + $0x28] sm:$0xff]
      %v5050 = vld [vmem:[%s165 + $0x30] sm:$0xff]
      %v5051 = vld [vmem:[%s165 + $0x38] sm:$0xff]
      %v5052 = vld [vmem:[%s165 + $0x40] sm:$0xff]
      %v5053 = vld [vmem:[%s165 + $0x48] sm:$0xff]
      %v5054 = vld [vmem:[%s165 + $0x50] sm:$0xff]
      %v5055 = vld [vmem:[%s165 + $0x58] sm:$0xff]
      %v5056 = vld [vmem:[%s165 + $0x60] sm:$0xff]
      %v5057 = vld [vmem:[%s165 + $0x68] sm:$0xff]
      %v5058 = vld [vmem:[%s165 + $0x70] sm:$0xff]
      %v5059 = vld [vmem:[%s165 + $0x78] sm:$0xff]
      %v5060 = vld [vmem:[%s165 + $0x80] sm:$0xff]
      %v5061 = vld [vmem:[%s165 + $0x88] sm:$0xff]
      %v5062 = vld [vmem:[%s165 + $0x90] sm:$0xff]
      %v5063 = vld [vmem:[%s165 + $0x98] sm:$0xff]
      %v5064 = vld [vmem:[%s165 + $0xa0] sm:$0xff]
      %v5065 = vld [vmem:[%s165 + $0xa8] sm:$0xff]
      %v5066 = vld [vmem:[%s165 + $0xb0] sm:$0xff]
      %v5067 = vld [vmem:[%s165 + $0xb8] sm:$0xff]
      %v5068 = vld [vmem:[%s165 + $0xc0] sm:$0xff]
      %v5069 = vld [vmem:[%s165 + $0xc8] sm:$0xff]
      %v5070 = vld [vmem:[%s165 + $0xd0] sm:$0xff]
      %v5071 = vld [vmem:[%s165 + $0xd8] sm:$0xff]
      %v5072 = vld [vmem:[%s165 + $0xe0] sm:$0xff]
      %v5073 = vld [vmem:[%s165 + $0xe8] sm:$0xff]
      %v5074 = vld [vmem:[%s165 + $0xf0] sm:$0xff]
      %v5075 = vld [vmem:[%s165 + $0xf8] sm:$0xff]
      %v5076 = vadd.f32 %v5044, %v5012
      %v5077 = vadd.f32 %v5045, %v5013
      %v5078 = vadd.f32 %v5046, %v5014
      %v5079 = vadd.f32 %v5047, %v5015
      %v5080 = vadd.f32 %v5048, %v5016
      %v5081 = vadd.f32 %v5049, %v5017
      %v5082 = vadd.f32 %v5050, %v5018
      %v5083 = vadd.f32 %v5051, %v5019
      %v5084 = vadd.f32 %v5052, %v5020
      %v5085 = vadd.f32 %v5053, %v5021
      %v5086 = vadd.f32 %v5054, %v5022
      %v5087 = vadd.f32 %v5055, %v5023
      %v5088 = vadd.f32 %v5056, %v5024
      %v5089 = vadd.f32 %v5057, %v5025
      %v5090 = vadd.f32 %v5058, %v5026
      %v5091 = vadd.f32 %v5059, %v5027
      %v5092 = vadd.f32 %v5060, %v5028
      %v5093 = vadd.f32 %v5061, %v5029
      %v5094 = vadd.f32 %v5062, %v5030
      %v5095 = vadd.f32 %v5063, %v5031
      %v5096 = vadd.f32 %v5064, %v5032
      %v5097 = vadd.f32 %v5065, %v5033
      %v5098 = vadd.f32 %v5066, %v5034
      %v5099 = vadd.f32 %v5067, %v5035
      %v5100 = vadd.f32 %v5068, %v5036
      %v5101 = vadd.f32 %v5069, %v5037
      %v5102 = vadd.f32 %v5070, %v5038
      %v5103 = vadd.f32 %v5071, %v5039
      %v5104 = vadd.f32 %v5072, %v5040
      %v5105 = vadd.f32 %v5073, %v5041
      %v5106 = vadd.f32 %v5074, %v5042
      %v5107 = vadd.f32 %v5075, %v5043
      %5108 = vst.msk [vmem:[%s170] sm:$0xff] %vm203, %v5076
      %5109 = vst.msk [vmem:[%s170 + $0x8] sm:$0xff] %vm203, %v5077
      %5110 = vst.msk [vmem:[%s170 + $0x10] sm:$0xff] %vm203, %v5078
      %5111 = vst.msk [vmem:[%s170 + $0x18] sm:$0xff] %vm203, %v5079
      %5112 = vst.msk [vmem:[%s170 + $0x20] sm:$0xff] %vm203, %v5080
      %5113 = vst.msk [vmem:[%s170 + $0x28] sm:$0xff] %vm203, %v5081
      %5114 = vst.msk [vmem:[%s170 + $0x30] sm:$0xff] %vm203, %v5082
      %5115 = vst.msk [vmem:[%s170 + $0x38] sm:$0xff] %vm203, %v5083
      %5116 = vst.msk [vmem:[%s170 + $0x40] sm:$0xff] %vm203, %v5084
      %5117 = vst.msk [vmem:[%s170 + $0x48] sm:$0xff] %vm203, %v5085
      %5118 = vst.msk [vmem:[%s170 + $0x50] sm:$0xff] %vm203, %v5086
      %5119 = vst.msk [vmem:[%s170 + $0x58] sm:$0xff] %vm203, %v5087
      %5120 = vst.msk [vmem:[%s170 + $0x60] sm:$0xff] %vm203, %v5088
      %5121 = vst.msk [vmem:[%s170 + $0x68] sm:$0xff] %vm203, %v5089
      %5122 = vst.msk [vmem:[%s170 + $0x70] sm:$0xff] %vm203, %v5090
      %5123 = vst.msk [vmem:[%s170 + $0x78] sm:$0xff] %vm203, %v5091
      %5124 = vst.msk [vmem:[%s170 + $0x80] sm:$0xff] %vm203, %v5092
      %5125 = vst.msk [vmem:[%s170 + $0x88] sm:$0xff] %vm203, %v5093
      %5126 = vst.msk [vmem:[%s170 + $0x90] sm:$0xff] %vm203, %v5094
      %5127 = vst.msk [vmem:[%s170 + $0x98] sm:$0xff] %vm203, %v5095
      %5128 = vst.msk [vmem:[%s170 + $0xa0] sm:$0xff] %vm203, %v5096
      %5129 = vst.msk [vmem:[%s170 + $0xa8] sm:$0xff] %vm203, %v5097
      %5130 = vst.msk [vmem:[%s170 + $0xb0] sm:$0xff] %vm203, %v5098
      %5131 = vst.msk [vmem:[%s170 + $0xb8] sm:$0xff] %vm203, %v5099
      %5132 = vst.msk [vmem:[%s170 + $0xc0] sm:$0xff] %vm203, %v5100
      %5133 = vst.msk [vmem:[%s170 + $0xc8] sm:$0xff] %vm203, %v5101
      %5134 = vst.msk [vmem:[%s170 + $0xd0] sm:$0xff] %vm203, %v5102
      %5135 = vst.msk [vmem:[%s170 + $0xd8] sm:$0xff] %vm203, %v5103
      %5136 = vst.msk [vmem:[%s170 + $0xe0] sm:$0xff] %vm203, %v5104
      %5137 = vst.msk [vmem:[%s170 + $0xe8] sm:$0xff] %vm203, %v5105
      %5138 = vst.msk [vmem:[%s170 + $0xf0] sm:$0xff] %vm203, %v5106
      %5139 = vst.msk [vmem:[%s170 + $0xf8] sm:$0xff] %vm203, %v5107
      %p5140 = scmp.lt.s32.totalorder %s14, 1
      %s5141 = scalar_select %p5140, %s14, 1
      %s5142 = smul.addr %s5141, 32
      %s5143 = smul.addr %s5142, 8
      %s5144 = scalar_lea.vmem %s3, %s5143
      // Predicated region
      $region33: #{residual_block.1} parent=31 // pred_check
        %p5145 = pneg %p100
      $region34: #{residual_block.1} parent=31 // pred_check_branch
        %5147 = sbr.rel (%p5145) target = $region36
      $region35: #{residual_block.1} parent=31 // pred_region
        _
      $region36: #{residual_block.1} parent=31 // pred_fallthru
        _
    $region32: #{residual_block.1} parent=5 // pred_fallthru
      _
    %p5148 = scmp.le.s32.totalorder 2, %s9
    // Predicated region
    $region37: #{residual_block.1} parent=5 // pred_check
      %p5149 = pneg %p5148
    $region38: #{residual_block.1} parent=5 // pred_check_branch
      %5151 = sbr.rel (%p5149) target = $region40
    $region39: #{residual_block.1} parent=5 // pred_region
      %s5152 = ssub.s32 %s9, 2
      // Predicated region
      $region41: #{residual_block.1} parent=39 // pred_check
        %p5153 = pneg %p106
      $region42: #{residual_block.1} parent=39 // pred_check_branch
        %5155 = sbr.rel (%p5153) target = $region44
      $region43: #{residual_block.1} parent=39 // pred_region
        %p5156 = scmp.lt.s32.totalorder %s15, 1
        %s5157 = scalar_select %p5156, %s15, 1
        %s5158 = smul.addr %s5157, 32
        %s5159 = smul.addr %s5158, 8
        %s5160 = scalar_lea.vmem %s3, %s5159
      $region44: #{residual_block.1} parent=39 // pred_fallthru
        _
    $region40: #{residual_block.1} parent=5 // pred_fallthru
      _
  $region6: #{residual_block.1} parent=0 // loop_footer
    %s13 = sadd.s32 1, %s9
  $region7: #{residual_block.1} parent=0 // loop_footer_branch
    %8 = sbr.rel target = $region3
  $region8: #{residual_block.1} parent=0 // loop_exit
    _

</llo_original>
